<compile_context>
chip_gen: v7x
topology: tpu7x:2x2x1
jax: 0.10.0
libtpu: 0.0.40
codegen_flags: <defaults>
</compile_context>

<pallas_src>
import functools

import jax
import jax.numpy as jnp
from jax import lax
from jax.experimental import pallas as pl
from jax.experimental.pallas import tpu as pltpu

HEADS = 4
REDUCE = 4
FFN_MUL = 2
LN_EPS = 1e-5
LANE = 128


def _layernorm(x, gamma, beta):
    mean = jnp.mean(x, axis=-1, keepdims=True)
    var = jnp.mean((x - mean) ** 2, axis=-1, keepdims=True)
    return (x - mean) * lax.rsqrt(var + LN_EPS) * gamma + beta


def _bdot(a_f32, w_bf16):
    """bf16 MXU matmul with f32 accumulation."""
    return jnp.dot(a_f32.astype(jnp.bfloat16), w_bf16,
                   preferred_element_type=jnp.float32)


# --------------------------- Pallas kernel ---------------------------
def _index_mlp_kernel(hidden_dim, b_tile, L, L2,
                      x_ref, pf_ref,
                      w_in, b_in, w_inp, b_inp,
                      wq, bq, w_vk, b_vk,
                      ln1g, ln1b, wf1, bf1, wf2, bf2, ln2g, ln2b,
                      w_out, b_out,
                      o_ref):
    """One grid step == B_TILE batch elements. Everything fits in VMEM."""
    dim_head = hidden_dim // HEADS
    dhr = dim_head // REDUCE
    red = hidden_dim // REDUCE

    in_dim = x_ref.shape[-1]
    part_dim = pf_ref.shape[-1]
    out_pad = o_ref.shape[-1]
    M = b_tile * L
    M2 = b_tile * L2

    # Flatten batch into the matmul M dimension (leading-dim merge, lane dim
    # unchanged -> cheap) so all dense projections see a tall operand.
    x = x_ref[...].reshape(M, in_dim)
    pf = pf_ref[...].reshape(M2, part_dim)

    # in_layer / in_layer_part  (bf16 matmul, f32 accumulation)
    h = _bdot(x, w_in[...]) + b_in[...]
    p = _bdot(pf, w_inp[...]) + b_inp[...]

    # ---------------- CrossAttLayer ----------------
    # q projection (attention scale already folded into wq/bq at pack time)
    # and the fused V|K projection from part features.
    q = _bdot(h, wq[...]) + bq[...]          # (M,  heads*dhr)
    vk = _bdot(p, w_vk[...]) + b_vk[...]     # (M2, hidden + heads*dhr)
    v = vk[:, :hidden_dim]                   # lane-aligned slice
    k = vk[:, hidden_dim:]                   # lane-aligned slice

    q3 = q.reshape(b_tile, L, red)
    k3 = k.reshape(b_tile, L2, red)
    v3 = v.reshape(b_tile, L2, hidden_dim)

    # Per-head attention, batched over the batch tile (static 4-way unroll).
    head_outs = []
    for hd in range(HEADS):
        qh = q3[:, :, hd * dhr:(hd + 1) * dhr]                # (b, L,  dhr)
        kh = k3[:, :, hd * dhr:(hd + 1) * dhr]                # (b, L2, dhr)
        vh = v3[:, :, hd * dim_head:(hd + 1) * dim_head]      # (b, L2, dim_head)
        att = jnp.einsum('bld,bmd->blm', qh, kh,
                         preferred_element_type=jnp.float32)  # (b, L, L2)
        att = jnp.exp(att - jnp.max(att, axis=-1, keepdims=True))
        att = att * pl.reciprocal(jnp.sum(att, axis=-1, keepdims=True),
                                  approx=True)
        head_outs.append(jnp.einsum('blm,bmd->bld', att, vh,
                                    preferred_element_type=jnp.float32))
    attn = jnp.concatenate(head_outs, axis=-1).reshape(M, hidden_dim)

    xh = h + attn
    xh = _layernorm(xh, ln1g[...], ln1b[...])
    ff = jnp.maximum(_bdot(xh, wf1[...]) + bf1[...], 0.0)
    ff = _bdot(ff, wf2[...]) + bf2[...]
    xh = xh + ff                          # dropout(p=0.0) is identity
    xh = _layernorm(xh, ln2g[...], ln2b[...])

    # out_layer(ReLU(x)) -> lane-dense padded output (sliced in wrapper)
    out = _bdot(jnp.maximum(xh, 0.0), w_out[...]) + b_out[...]
    o_ref[...] = out.reshape(b_tile, L, out_pad).astype(o_ref.dtype)


# --------------------------- wrapper ---------------------------
_WEIGHT_ORDER = ["w_in", "b_in", "w_inp", "b_inp", "wq", "bq", "w_vk", "b_vk",
                 "ln1g", "ln1b", "wf1", "bf1", "wf2", "bf2", "ln2g", "ln2b",
                 "w_out", "b_out"]


def pack_params(P, hidden_dim):
    """One-time parameter transform for the kernel (NOT per-call work)."""
    dim_head = hidden_dim // HEADS
    scale = dim_head ** (-0.5)     # torch scales by dim_head, not dhr
    out_dim = P["w_out"].shape[1]
    out_pad = ((out_dim + LANE - 1) // LANE) * LANE
    bf16 = jnp.bfloat16
    packed = {
        "w_in": P["w_in"].astype(bf16), "b_in": P["b_in"],
        "w_inp": P["w_inp"].astype(bf16), "b_inp": P["b_inp"],
        # fold the attention scale into the q projection
        "wq": (P["wq"] * scale).astype(bf16), "bq": P["bq"] * scale,
        # fuse V|K (V first so both slices in the kernel are lane-tile aligned)
        "w_vk": jnp.concatenate([P["wv"], P["wk"]], axis=1).astype(bf16),
        "b_vk": jnp.concatenate([P["bv"], P["bk"]], axis=1),
        "ln1g": P["ln1g"], "ln1b": P["ln1b"],
        "wf1": P["wf1"].astype(bf16), "bf1": P["bf1"],
        "wf2": P["wf2"].astype(bf16), "bf2": P["bf2"],
        "ln2g": P["ln2g"], "ln2b": P["ln2b"],
        # lane-dense output: pad out features to a multiple of 128 lanes
        "w_out": jnp.pad(P["w_out"],
                         ((0, 0), (0, out_pad - out_dim))).astype(bf16),
        "b_out": jnp.pad(P["b_out"], ((0, 0), (0, out_pad - out_dim))),
    }
    return packed, out_pad


def _vmem_bytes_estimate(b_tile, L, L2, in_dim, part_dim, hidden_dim, out_pad,
                         weight_bytes):
    """Rough VMEM budget: double-buffered blocks + live activations + weights."""
    f32 = 4
    red = hidden_dim // REDUCE
    ffn = FFN_MUL * hidden_dim
    io = 2 * (b_tile * L * in_dim + b_tile * L2 * part_dim
              + b_tile * L * out_pad) * f32
    act = (b_tile * L * (4 * hidden_dim + red + ffn + out_pad)
           + b_tile * L2 * (2 * hidden_dim + red)) * f32
    return io + act + 2 * weight_bytes


def _choose_b_tile(B, L, L2, in_dim, part_dim, hidden_dim, out_pad,
                   weight_bytes, max_tile=8, budget=16 * 1024 * 1024):
    """Largest divisor of B (<= max_tile) whose estimate fits the VMEM budget
    (budget sized conservatively for v7x's 64 MiB physical VMEM)."""
    best = 1
    for t in range(1, min(B, max_tile) + 1):
        if B % t:
            continue
        if _vmem_bytes_estimate(t, L, L2, in_dim, part_dim, hidden_dim,
                                out_pad, weight_bytes) <= budget:
            best = t
    return best


def index_mlp_pallas(x, part_fea, packed, hidden_dim, out_dim, out_pad):
    B, L, in_dim = x.shape
    _, L2, part_dim = part_fea.shape
    weights = [packed[n] for n in _WEIGHT_ORDER]
    weight_bytes = int(sum(w.size * w.dtype.itemsize for w in weights))

    b_tile = _choose_b_tile(B, L, L2, in_dim, part_dim, hidden_dim, out_pad,
                            weight_bytes)

    def full_spec(a):
        return pl.BlockSpec(a.shape, lambda b: (0,) * a.ndim)

    in_specs = ([pl.BlockSpec((b_tile, L, in_dim), lambda b: (b, 0, 0)),
                 pl.BlockSpec((b_tile, L2, part_dim), lambda b: (b, 0, 0))]
                + [full_spec(w) for w in weights])
    out_specs = pl.BlockSpec((b_tile, L, out_pad), lambda b: (b, 0, 0))

    red = hidden_dim // REDUCE
    ffn = FFN_MUL * hidden_dim
    dim_head = hidden_dim // HEADS
    flops = 2 * B * (L * in_dim * hidden_dim
                     + L2 * part_dim * hidden_dim
                     + L * hidden_dim * red
                     + L2 * hidden_dim * (hidden_dim + red)
                     + HEADS * L * L2 * (red // HEADS + dim_head)
                     + 2 * L * hidden_dim * ffn
                     + L * hidden_dim * out_pad)
    cost = pl.CostEstimate(
        flops=int(flops),
        transcendentals=int(B * HEADS * L * L2),
        bytes_accessed=int(x.size * 4 + part_fea.size * 4
                           + B * L * out_pad * 4 + weight_bytes))

    out = pl.pallas_call(
        functools.partial(_index_mlp_kernel, hidden_dim, b_tile, L, L2),
        out_shape=jax.ShapeDtypeStruct((B, L, out_pad), jnp.float32),
        grid_spec=pltpu.PrefetchScalarGridSpec(
            num_scalar_prefetch=0,
            grid=(B // b_tile,),
            in_specs=in_specs,
            out_specs=out_specs),
        compiler_params=pltpu.CompilerParams(
            dimension_semantics=("parallel",),
            vmem_limit_bytes=32 * 1024 * 1024),
        cost_estimate=cost,
    )(x, part_fea, *weights)
    return out[..., :out_dim]


# ----------------------- pure-JAX references -----------------------
def index_mlp_ref_f32(x, part_fea, P, hidden_dim):
    """Full-f32 reference matching the PyTorch module (raw params)."""
    def ln(z, g, b):
        m = jnp.mean(z, axis=-1, keepdims=True)
        v = jnp.mean((z - m) ** 2, axis=-1, keepdims=True)
        return (z - m) / jnp.sqrt(v + LN_EPS) * g + b

    h = x @ P["w_in"] + P["b_in"][0]
    p = part_fea @ P["w_inp"] + P["b_inp"][0]

    b, l, c = h.shape
    l2 = p.shape[1]
    dim_head = hidden_dim // HEADS
    dhr = dim_head // REDUCE
    q = (h @ P["wq"] + P["bq"][0]).reshape(b, l, HEADS, dhr).transpose(0, 2, 1, 3)
    k = (p @ P["wk"] + P["bk"][0]).reshape(b, l2, HEADS, dhr).transpose(0, 2, 1, 3)
    v = (p @ P["wv"] + P["bv"][0]).reshape(b, l2, HEADS, dim_head).transpose(0, 2, 1, 3)
    q = q * dim_head ** (-0.5)
    att = jax.nn.softmax(q @ jnp.swapaxes(k, 2, 3), axis=-1)
    o = (att @ v).transpose(0, 2, 1, 3).reshape(b, l, c)

    xh = ln(h + o, P["ln1g"][0], P["ln1b"][0])
    ff = jax.nn.relu(xh @ P["wf1"] + P["bf1"][0]) @ P["wf2"] + P["bf2"][0]
    xh = ln(xh + ff, P["ln2g"][0], P["ln2b"][0])
    return jax.nn.relu(xh) @ P["w_out"] + P["b_out"][0]


def index_mlp_ref_packed(x, part_fea, P, hidden_dim, out_dim):
    """Mirror of the kernel math (bf16 matmuls, fused/packed params)."""
    def ln(z, g, b):
        m = jnp.mean(z, axis=-1, keepdims=True)
        v = jnp.mean((z - m) ** 2, axis=-1, keepdims=True)
        return (z - m) / jnp.sqrt(v + LN_EPS) * g + b

    h = _bdot(x, P["w_in"]) + P["b_in"][0]
    p = _bdot(part_fea, P["w_inp"]) + P["b_inp"][0]
    b, l, c = h.shape
    l2 = p.shape[1]
    dim_head = hidden_dim // HEADS
    dhr = dim_head // REDUCE

    q = _bdot(h, P["wq"]) + P["bq"][0]          # scale already folded in
    vk = _bdot(p, P["w_vk"]) + P["b_vk"][0]
    v = vk[..., :hidden_dim]
    k = vk[..., hidden_dim:]

    q = q.reshape(b, l, HEADS, dhr).transpose(0, 2, 1, 3)
    k = k.reshape(b, l2, HEADS, dhr).transpose(0, 2, 1, 3)
    v = v.reshape(b, l2, HEADS, dim_head).transpose(0, 2, 1, 3)
    att = jax.nn.softmax(jnp.einsum("bhld,bhmd->bhlm", q, k), axis=-1)
    o = jnp.einsum("bhlm,bhmd->bhld", att, v)
    o = o.transpose(0, 2, 1, 3).reshape(b, l, c)

    xh = ln(h + o, P["ln1g"][0], P["ln1b"][0])
    ff = jax.nn.relu(_bdot(xh, P["wf1"]) + P["bf1"][0])
    ff = _bdot(ff, P["wf2"]) + P["bf2"][0]
    xh = ln(xh + ff, P["ln2g"][0], P["ln2b"][0])
    out = _bdot(jax.nn.relu(xh), P["w_out"]) + P["b_out"][0]
    return out[..., :out_dim]


def make_params(key, in_dim, part_dim, hidden_dim, out_dim):
    ffn_dim = FFN_MUL * hidden_dim
    red = hidden_dim // REDUCE
    shapes = {
        "w_in": (in_dim, hidden_dim), "b_in": (1, hidden_dim),
        "w_inp": (part_dim, hidden_dim), "b_inp": (1, hidden_dim),
        "wq": (hidden_dim, red), "bq": (1, red),
        "wk": (hidden_dim, red), "bk": (1, red),
        "wv": (hidden_dim, hidden_dim), "bv": (1, hidden_dim),
        "wf1": (hidden_dim, ffn_dim), "bf1": (1, ffn_dim),
        "wf2": (ffn_dim, hidden_dim), "bf2": (1, hidden_dim),
        "w_out": (hidden_dim, out_dim), "b_out": (1, out_dim),
    }
    params = {}
    keys = jax.random.split(key, len(shapes))
    for kk, (name, shp) in zip(keys, shapes.items()):
        params[name] = jax.random.normal(kk, shp, jnp.float32) * 0.05
    # LayerNorm affine params: PyTorch default init (ones / zeros)
    params["ln1g"] = jnp.ones((1, hidden_dim), jnp.float32)
    params["ln1b"] = jnp.zeros((1, hidden_dim), jnp.float32)
    params["ln2g"] = jnp.ones((1, hidden_dim), jnp.float32)
    params["ln2b"] = jnp.zeros((1, hidden_dim), jnp.float32)
    return params


if __name__ == "__main__":
    # small shapes consistent with the module: n_layers=3 -> one CrossAttLayer
    B, L, L2 = 2, 16, 8
    IN_DIM, PART_DIM, HIDDEN_DIM, OUT_DIM = 16, 32, 128, 8

    key = jax.random.PRNGKey(0)
    kx, kp, kw = jax.random.split(key, 3)
    x = jax.random.normal(kx, (B, L, IN_DIM), jnp.float32)
    part_fea = jax.random.normal(kp, (B, L2, PART_DIM), jnp.float32)

    raw = make_params(kw, IN_DIM, PART_DIM, HIDDEN_DIM, OUT_DIM)
    packed, out_pad = pack_params(raw, HIDDEN_DIM)

    out = index_mlp_pallas(x, part_fea, packed, HIDDEN_DIM, OUT_DIM, out_pad)
    out = jax.block_until_ready(out)
    assert out.shape == (B, L, OUT_DIM), out.shape

    # tight check vs. a pure-JAX mirror of the kernel math (bf16 matmuls)
    ref_mixed = index_mlp_ref_packed(x, part_fea, packed, HIDDEN_DIM, OUT_DIM)
    err_mixed = float(jnp.max(jnp.abs(out - ref_mixed)))
    assert jnp.allclose(out, ref_mixed, rtol=1e-2, atol=1e-2), err_mixed

    # loose check vs. the full-f32 torch-equivalent reference
    ref_f32 = index_mlp_ref_f32(x, part_fea, raw, HIDDEN_DIM)
    err_f32 = float(jnp.max(jnp.abs(out - ref_f32)))
    assert jnp.allclose(out, ref_f32, rtol=4e-2, atol=4e-2), err_f32

    print("KERNEL_OK")
</pallas_src>

<mosaic_0001>
module attributes {stable_mosaic.version = 11 : i64} {
  func.func @_index_mlp_kernel(%arg0: i32, %arg1: memref<2x16x16xf32, #tpu.memory_space<vmem>>, %arg2: memref<2x8x32xf32, #tpu.memory_space<vmem>>, %arg3: memref<16x128xbf16, #tpu.memory_space<vmem>>, %arg4: memref<1x128xf32, #tpu.memory_space<vmem>>, %arg5: memref<32x128xbf16, #tpu.memory_space<vmem>>, %arg6: memref<1x128xf32, #tpu.memory_space<vmem>>, %arg7: memref<128x32xbf16, #tpu.memory_space<vmem>>, %arg8: memref<1x32xf32, #tpu.memory_space<vmem>>, %arg9: memref<128x160xbf16, #tpu.memory_space<vmem>>, %arg10: memref<1x160xf32, #tpu.memory_space<vmem>>, %arg11: memref<1x128xf32, #tpu.memory_space<vmem>>, %arg12: memref<1x128xf32, #tpu.memory_space<vmem>>, %arg13: memref<128x256xbf16, #tpu.memory_space<vmem>>, %arg14: memref<1x256xf32, #tpu.memory_space<vmem>>, %arg15: memref<256x128xbf16, #tpu.memory_space<vmem>>, %arg16: memref<1x128xf32, #tpu.memory_space<vmem>>, %arg17: memref<1x128xf32, #tpu.memory_space<vmem>>, %arg18: memref<1x128xf32, #tpu.memory_space<vmem>>, %arg19: memref<128x128xbf16, #tpu.memory_space<vmem>>, %arg20: memref<1x128xf32, #tpu.memory_space<vmem>>, %arg21: memref<2x16x128xf32, #tpu.memory_space<vmem>>) attributes {dimension_semantics = [#tpu.dimension_semantics<parallel>], iteration_bounds = array<i64: 1>, scalar_prefetch = 0 : i64, scratch_operands = 0 : i64, tpu.core_type = #tpu.core_type<tc>, window_params = [{transform_indices = @transform_0, window_bounds = array<i64: 2, 16, 16>}, {transform_indices = @transform_1, window_bounds = array<i64: 2, 8, 32>}, {pipeline_mode = #tpu.pipeline_mode<synchronous>, transform_indices = @transform_2, window_bounds = array<i64: 16, 128>}, {pipeline_mode = #tpu.pipeline_mode<synchronous>, transform_indices = @transform_3, window_bounds = array<i64: 1, 128>}, {pipeline_mode = #tpu.pipeline_mode<synchronous>, transform_indices = @transform_4, window_bounds = array<i64: 32, 128>}, {pipeline_mode = #tpu.pipeline_mode<synchronous>, transform_indices = @transform_5, window_bounds = array<i64: 1, 128>}, {pipeline_mode = #tpu.pipeline_mode<synchronous>, transform_indices = @transform_6, window_bounds = array<i64: 128, 32>}, {pipeline_mode = #tpu.pipeline_mode<synchronous>, transform_indices = @transform_7, window_bounds = array<i64: 1, 32>}, {pipeline_mode = #tpu.pipeline_mode<synchronous>, transform_indices = @transform_8, window_bounds = array<i64: 128, 160>}, {pipeline_mode = #tpu.pipeline_mode<synchronous>, transform_indices = @transform_9, window_bounds = array<i64: 1, 160>}, {pipeline_mode = #tpu.pipeline_mode<synchronous>, transform_indices = @transform_10, window_bounds = array<i64: 1, 128>}, {pipeline_mode = #tpu.pipeline_mode<synchronous>, transform_indices = @transform_11, window_bounds = array<i64: 1, 128>}, {pipeline_mode = #tpu.pipeline_mode<synchronous>, transform_indices = @transform_12, window_bounds = array<i64: 128, 256>}, {pipeline_mode = #tpu.pipeline_mode<synchronous>, transform_indices = @transform_13, window_bounds = array<i64: 1, 256>}, {pipeline_mode = #tpu.pipeline_mode<synchronous>, transform_indices = @transform_14, window_bounds = array<i64: 256, 128>}, {pipeline_mode = #tpu.pipeline_mode<synchronous>, transform_indices = @transform_15, window_bounds = array<i64: 1, 128>}, {pipeline_mode = #tpu.pipeline_mode<synchronous>, transform_indices = @transform_16, window_bounds = array<i64: 1, 128>}, {pipeline_mode = #tpu.pipeline_mode<synchronous>, transform_indices = @transform_17, window_bounds = array<i64: 1, 128>}, {pipeline_mode = #tpu.pipeline_mode<synchronous>, transform_indices = @transform_18, window_bounds = array<i64: 128, 128>}, {pipeline_mode = #tpu.pipeline_mode<synchronous>, transform_indices = @transform_19, window_bounds = array<i64: 1, 128>}, {transform_indices = @transform_20, window_bounds = array<i64: 2, 16, 128>}]} {
    %c0 = arith.constant 0 : index
    %c0_0 = arith.constant 0 : index
    %c0_1 = arith.constant 0 : index
    %0 = vector.load %arg1[%c0, %c0_0, %c0_1] : memref<2x16x16xf32, #tpu.memory_space<vmem>>, vector<2x16x16xf32>
    %1 = vector.shape_cast %0 : vector<2x16x16xf32> to vector<32x16xf32>
    %c0_2 = arith.constant 0 : index
    %c0_3 = arith.constant 0 : index
    %c0_4 = arith.constant 0 : index
    %2 = vector.load %arg2[%c0_2, %c0_3, %c0_4] : memref<2x8x32xf32, #tpu.memory_space<vmem>>, vector<2x8x32xf32>
    %3 = vector.shape_cast %2 : vector<2x8x32xf32> to vector<16x32xf32>
    %c0_5 = arith.constant 0 : index
    %c0_6 = arith.constant 0 : index
    %4 = vector.load %arg3[%c0_5, %c0_6] : memref<16x128xbf16, #tpu.memory_space<vmem>>, vector<16x128xbf16>
    %5 = arith.truncf %1 : vector<32x16xf32> to vector<32x16xbf16>
    %cst = arith.constant dense<0.000000e+00> : vector<32x128xf32>
    %6 = tpu.matmul %5, %4, %cst {dimension_numbers = #tpu.dot_dimension_numbers<[1], [0], [0], [1], [0, 0, 1, 1], [], []>} : vector<32x16xbf16>, vector<16x128xbf16>, vector<32x128xf32> -> vector<32x128xf32>
    %c0_7 = arith.constant 0 : index
    %c0_8 = arith.constant 0 : index
    %7 = vector.load %arg4[%c0_7, %c0_8] : memref<1x128xf32, #tpu.memory_space<vmem>>, vector<1x128xf32>
    %8 = vector.broadcast %7 : vector<1x128xf32> to vector<32x128xf32>
    %9 = arith.addf %6, %8 : vector<32x128xf32>
    %c0_9 = arith.constant 0 : index
    %c0_10 = arith.constant 0 : index
    %10 = vector.load %arg5[%c0_9, %c0_10] : memref<32x128xbf16, #tpu.memory_space<vmem>>, vector<32x128xbf16>
    %11 = arith.truncf %3 : vector<16x32xf32> to vector<16x32xbf16>
    %cst_11 = arith.constant dense<0.000000e+00> : vector<16x128xf32>
    %12 = tpu.matmul %11, %10, %cst_11 {dimension_numbers = #tpu.dot_dimension_numbers<[1], [0], [0], [1], [0, 0, 1, 1], [], []>} : vector<16x32xbf16>, vector<32x128xbf16>, vector<16x128xf32> -> vector<16x128xf32>
    %c0_12 = arith.constant 0 : index
    %c0_13 = arith.constant 0 : index
    %13 = vector.load %arg6[%c0_12, %c0_13] : memref<1x128xf32, #tpu.memory_space<vmem>>, vector<1x128xf32>
    %14 = vector.broadcast %13 : vector<1x128xf32> to vector<16x128xf32>
    %15 = arith.addf %12, %14 : vector<16x128xf32>
    %c0_14 = arith.constant 0 : index
    %c0_15 = arith.constant 0 : index
    %16 = vector.load %arg7[%c0_14, %c0_15] : memref<128x32xbf16, #tpu.memory_space<vmem>>, vector<128x32xbf16>
    %17 = arith.truncf %9 : vector<32x128xf32> to vector<32x128xbf16>
    %cst_16 = arith.constant dense<0.000000e+00> : vector<32x32xf32>
    %18 = tpu.matmul %17, %16, %cst_16 {dimension_numbers = #tpu.dot_dimension_numbers<[1], [0], [0], [1], [0, 0, 1, 1], [], []>} : vector<32x128xbf16>, vector<128x32xbf16>, vector<32x32xf32> -> vector<32x32xf32>
    %c0_17 = arith.constant 0 : index
    %c0_18 = arith.constant 0 : index
    %19 = vector.load %arg8[%c0_17, %c0_18] : memref<1x32xf32, #tpu.memory_space<vmem>>, vector<1x32xf32>
    %20 = vector.broadcast %19 : vector<1x32xf32> to vector<32x32xf32>
    %21 = arith.addf %18, %20 : vector<32x32xf32>
    %c0_19 = arith.constant 0 : index
    %c0_20 = arith.constant 0 : index
    %22 = vector.load %arg9[%c0_19, %c0_20] : memref<128x160xbf16, #tpu.memory_space<vmem>>, vector<128x160xbf16>
    %23 = arith.truncf %15 : vector<16x128xf32> to vector<16x128xbf16>
    %cst_21 = arith.constant dense<0.000000e+00> : vector<16x160xf32>
    %24 = tpu.matmul %23, %22, %cst_21 {dimension_numbers = #tpu.dot_dimension_numbers<[1], [0], [0], [1], [0, 0, 1, 1], [], []>} : vector<16x128xbf16>, vector<128x160xbf16>, vector<16x160xf32> -> vector<16x160xf32>
    %c0_22 = arith.constant 0 : index
    %c0_23 = arith.constant 0 : index
    %25 = vector.load %arg10[%c0_22, %c0_23] : memref<1x160xf32, #tpu.memory_space<vmem>>, vector<1x160xf32>
    %26 = vector.broadcast %25 : vector<1x160xf32> to vector<16x160xf32>
    %27 = arith.addf %24, %26 : vector<16x160xf32>
    %28 = vector.extract_strided_slice %27 {offsets = [0, 0], sizes = [16, 128], strides = [1, 1]} : vector<16x160xf32> to vector<16x128xf32>
    %29 = vector.extract_strided_slice %27 {offsets = [0, 128], sizes = [16, 32], strides = [1, 1]} : vector<16x160xf32> to vector<16x32xf32>
    %30 = vector.shape_cast %21 : vector<32x32xf32> to vector<2x16x32xf32>
    %31 = vector.shape_cast %29 : vector<16x32xf32> to vector<2x8x32xf32>
    %32 = vector.shape_cast %28 : vector<16x128xf32> to vector<2x8x128xf32>
    %33 = vector.extract_strided_slice %30 {offsets = [0, 0, 0], sizes = [2, 16, 8], strides = [1, 1, 1]} : vector<2x16x32xf32> to vector<2x16x8xf32>
    %34 = vector.extract_strided_slice %31 {offsets = [0, 0, 0], sizes = [2, 8, 8], strides = [1, 1, 1]} : vector<2x8x32xf32> to vector<2x8x8xf32>
    %35 = vector.extract_strided_slice %32 {offsets = [0, 0, 0], sizes = [2, 8, 32], strides = [1, 1, 1]} : vector<2x8x128xf32> to vector<2x8x32xf32>
    "tpu.trace_start"() <{level = 10 : i32, message = "bld,bmd->blm"}> : () -> ()
    %cst_24 = arith.constant dense<0.000000e+00> : vector<2x16x8xf32>
    %36 = tpu.matmul %33, %34, %cst_24 {dimension_numbers = #tpu.dot_dimension_numbers<[2], [2], [1], [1], [0, 0, 0, 1, 1, 1], [0], [0]>} : vector<2x16x8xf32>, vector<2x8x8xf32>, vector<2x16x8xf32> -> vector<2x16x8xf32>
    "tpu.trace_stop"() : () -> ()
    %cst_25 = arith.constant dense<0xFF800000> : vector<2x16xf32>
    %37 = vector.multi_reduction <maximumf>, %36, %cst_25 [2] : vector<2x16x8xf32> to vector<2x16xf32>
    %38 = vector.shape_cast %37 : vector<2x16xf32> to vector<2x16x1xf32>
    %39 = vector.broadcast %38 : vector<2x16x1xf32> to vector<2x16x8xf32>
    %40 = arith.subf %36, %39 : vector<2x16x8xf32>
    %41 = math.exp %40 : vector<2x16x8xf32>
    %cst_26 = arith.constant dense<0.000000e+00> : vector<2x16xf32>
    %42 = vector.multi_reduction <add>, %41, %cst_26 [2] : vector<2x16x8xf32> to vector<2x16xf32>
    %43 = vector.shape_cast %42 : vector<2x16xf32> to vector<2x16x1xf32>
    %44 = tpu.reciprocal %43 {approx = true} : vector<2x16x1xf32> -> vector<2x16x1xf32>
    %45 = vector.broadcast %44 : vector<2x16x1xf32> to vector<2x16x8xf32>
    %46 = arith.mulf %41, %45 : vector<2x16x8xf32>
    "tpu.trace_start"() <{level = 10 : i32, message = "blm,bmd->bld"}> : () -> ()
    %cst_27 = arith.constant dense<0.000000e+00> : vector<2x16x32xf32>
    %47 = tpu.matmul %46, %35, %cst_27 {dimension_numbers = #tpu.dot_dimension_numbers<[2], [1], [1], [2], [0, 0, 0, 1, 1, 2], [0], [0]>} : vector<2x16x8xf32>, vector<2x8x32xf32>, vector<2x16x32xf32> -> vector<2x16x32xf32>
    "tpu.trace_stop"() : () -> ()
    %48 = vector.extract_strided_slice %30 {offsets = [0, 0, 8], sizes = [2, 16, 8], strides = [1, 1, 1]} : vector<2x16x32xf32> to vector<2x16x8xf32>
    %49 = vector.extract_strided_slice %31 {offsets = [0, 0, 8], sizes = [2, 8, 8], strides = [1, 1, 1]} : vector<2x8x32xf32> to vector<2x8x8xf32>
    %50 = vector.extract_strided_slice %32 {offsets = [0, 0, 32], sizes = [2, 8, 32], strides = [1, 1, 1]} : vector<2x8x128xf32> to vector<2x8x32xf32>
    "tpu.trace_start"() <{level = 10 : i32, message = "bld,bmd->blm"}> : () -> ()
    %cst_28 = arith.constant dense<0.000000e+00> : vector<2x16x8xf32>
    %51 = tpu.matmul %48, %49, %cst_28 {dimension_numbers = #tpu.dot_dimension_numbers<[2], [2], [1], [1], [0, 0, 0, 1, 1, 1], [0], [0]>} : vector<2x16x8xf32>, vector<2x8x8xf32>, vector<2x16x8xf32> -> vector<2x16x8xf32>
    "tpu.trace_stop"() : () -> ()
    %cst_29 = arith.constant dense<0xFF800000> : vector<2x16xf32>
    %52 = vector.multi_reduction <maximumf>, %51, %cst_29 [2] : vector<2x16x8xf32> to vector<2x16xf32>
    %53 = vector.shape_cast %52 : vector<2x16xf32> to vector<2x16x1xf32>
    %54 = vector.broadcast %53 : vector<2x16x1xf32> to vector<2x16x8xf32>
    %55 = arith.subf %51, %54 : vector<2x16x8xf32>
    %56 = math.exp %55 : vector<2x16x8xf32>
    %cst_30 = arith.constant dense<0.000000e+00> : vector<2x16xf32>
    %57 = vector.multi_reduction <add>, %56, %cst_30 [2] : vector<2x16x8xf32> to vector<2x16xf32>
    %58 = vector.shape_cast %57 : vector<2x16xf32> to vector<2x16x1xf32>
    %59 = tpu.reciprocal %58 {approx = true} : vector<2x16x1xf32> -> vector<2x16x1xf32>
    %60 = vector.broadcast %59 : vector<2x16x1xf32> to vector<2x16x8xf32>
    %61 = arith.mulf %56, %60 : vector<2x16x8xf32>
    "tpu.trace_start"() <{level = 10 : i32, message = "blm,bmd->bld"}> : () -> ()
    %cst_31 = arith.constant dense<0.000000e+00> : vector<2x16x32xf32>
    %62 = tpu.matmul %61, %50, %cst_31 {dimension_numbers = #tpu.dot_dimension_numbers<[2], [1], [1], [2], [0, 0, 0, 1, 1, 2], [0], [0]>} : vector<2x16x8xf32>, vector<2x8x32xf32>, vector<2x16x32xf32> -> vector<2x16x32xf32>
    "tpu.trace_stop"() : () -> ()
    %63 = vector.extract_strided_slice %30 {offsets = [0, 0, 16], sizes = [2, 16, 8], strides = [1, 1, 1]} : vector<2x16x32xf32> to vector<2x16x8xf32>
    %64 = vector.extract_strided_slice %31 {offsets = [0, 0, 16], sizes = [2, 8, 8], strides = [1, 1, 1]} : vector<2x8x32xf32> to vector<2x8x8xf32>
    %65 = vector.extract_strided_slice %32 {offsets = [0, 0, 64], sizes = [2, 8, 32], strides = [1, 1, 1]} : vector<2x8x128xf32> to vector<2x8x32xf32>
    "tpu.trace_start"() <{level = 10 : i32, message = "bld,bmd->blm"}> : () -> ()
    %cst_32 = arith.constant dense<0.000000e+00> : vector<2x16x8xf32>
    %66 = tpu.matmul %63, %64, %cst_32 {dimension_numbers = #tpu.dot_dimension_numbers<[2], [2], [1], [1], [0, 0, 0, 1, 1, 1], [0], [0]>} : vector<2x16x8xf32>, vector<2x8x8xf32>, vector<2x16x8xf32> -> vector<2x16x8xf32>
    "tpu.trace_stop"() : () -> ()
    %cst_33 = arith.constant dense<0xFF800000> : vector<2x16xf32>
    %67 = vector.multi_reduction <maximumf>, %66, %cst_33 [2] : vector<2x16x8xf32> to vector<2x16xf32>
    %68 = vector.shape_cast %67 : vector<2x16xf32> to vector<2x16x1xf32>
    %69 = vector.broadcast %68 : vector<2x16x1xf32> to vector<2x16x8xf32>
    %70 = arith.subf %66, %69 : vector<2x16x8xf32>
    %71 = math.exp %70 : vector<2x16x8xf32>
    %cst_34 = arith.constant dense<0.000000e+00> : vector<2x16xf32>
    %72 = vector.multi_reduction <add>, %71, %cst_34 [2] : vector<2x16x8xf32> to vector<2x16xf32>
    %73 = vector.shape_cast %72 : vector<2x16xf32> to vector<2x16x1xf32>
    %74 = tpu.reciprocal %73 {approx = true} : vector<2x16x1xf32> -> vector<2x16x1xf32>
    %75 = vector.broadcast %74 : vector<2x16x1xf32> to vector<2x16x8xf32>
    %76 = arith.mulf %71, %75 : vector<2x16x8xf32>
    "tpu.trace_start"() <{level = 10 : i32, message = "blm,bmd->bld"}> : () -> ()
    %cst_35 = arith.constant dense<0.000000e+00> : vector<2x16x32xf32>
    %77 = tpu.matmul %76, %65, %cst_35 {dimension_numbers = #tpu.dot_dimension_numbers<[2], [1], [1], [2], [0, 0, 0, 1, 1, 2], [0], [0]>} : vector<2x16x8xf32>, vector<2x8x32xf32>, vector<2x16x32xf32> -> vector<2x16x32xf32>
    "tpu.trace_stop"() : () -> ()
    %78 = vector.extract_strided_slice %30 {offsets = [0, 0, 24], sizes = [2, 16, 8], strides = [1, 1, 1]} : vector<2x16x32xf32> to vector<2x16x8xf32>
    %79 = vector.extract_strided_slice %31 {offsets = [0, 0, 24], sizes = [2, 8, 8], strides = [1, 1, 1]} : vector<2x8x32xf32> to vector<2x8x8xf32>
    %80 = vector.extract_strided_slice %32 {offsets = [0, 0, 96], sizes = [2, 8, 32], strides = [1, 1, 1]} : vector<2x8x128xf32> to vector<2x8x32xf32>
    "tpu.trace_start"() <{level = 10 : i32, message = "bld,bmd->blm"}> : () -> ()
    %cst_36 = arith.constant dense<0.000000e+00> : vector<2x16x8xf32>
    %81 = tpu.matmul %78, %79, %cst_36 {dimension_numbers = #tpu.dot_dimension_numbers<[2], [2], [1], [1], [0, 0, 0, 1, 1, 1], [0], [0]>} : vector<2x16x8xf32>, vector<2x8x8xf32>, vector<2x16x8xf32> -> vector<2x16x8xf32>
    "tpu.trace_stop"() : () -> ()
    %cst_37 = arith.constant dense<0xFF800000> : vector<2x16xf32>
    %82 = vector.multi_reduction <maximumf>, %81, %cst_37 [2] : vector<2x16x8xf32> to vector<2x16xf32>
    %83 = vector.shape_cast %82 : vector<2x16xf32> to vector<2x16x1xf32>
    %84 = vector.broadcast %83 : vector<2x16x1xf32> to vector<2x16x8xf32>
    %85 = arith.subf %81, %84 : vector<2x16x8xf32>
    %86 = math.exp %85 : vector<2x16x8xf32>
    %cst_38 = arith.constant dense<0.000000e+00> : vector<2x16xf32>
    %87 = vector.multi_reduction <add>, %86, %cst_38 [2] : vector<2x16x8xf32> to vector<2x16xf32>
    %88 = vector.shape_cast %87 : vector<2x16xf32> to vector<2x16x1xf32>
    %89 = tpu.reciprocal %88 {approx = true} : vector<2x16x1xf32> -> vector<2x16x1xf32>
    %90 = vector.broadcast %89 : vector<2x16x1xf32> to vector<2x16x8xf32>
    %91 = arith.mulf %86, %90 : vector<2x16x8xf32>
    "tpu.trace_start"() <{level = 10 : i32, message = "blm,bmd->bld"}> : () -> ()
    %cst_39 = arith.constant dense<0.000000e+00> : vector<2x16x32xf32>
    %92 = tpu.matmul %91, %80, %cst_39 {dimension_numbers = #tpu.dot_dimension_numbers<[2], [1], [1], [2], [0, 0, 0, 1, 1, 2], [0], [0]>} : vector<2x16x8xf32>, vector<2x8x32xf32>, vector<2x16x32xf32> -> vector<2x16x32xf32>
    "tpu.trace_stop"() : () -> ()
    %93 = tpu.concatenate %47, %62, %77, %92 in 2 : vector<2x16x32xf32>, vector<2x16x32xf32>, vector<2x16x32xf32>, vector<2x16x32xf32> -> vector<2x16x128xf32>
    %94 = vector.shape_cast %93 : vector<2x16x128xf32> to vector<32x128xf32>
    %95 = arith.addf %9, %94 : vector<32x128xf32>
    %c0_40 = arith.constant 0 : index
    %c0_41 = arith.constant 0 : index
    %96 = vector.load %arg11[%c0_40, %c0_41] : memref<1x128xf32, #tpu.memory_space<vmem>>, vector<1x128xf32>
    %c0_42 = arith.constant 0 : index
    %c0_43 = arith.constant 0 : index
    %97 = vector.load %arg12[%c0_42, %c0_43] : memref<1x128xf32, #tpu.memory_space<vmem>>, vector<1x128xf32>
    %cst_44 = arith.constant dense<0.000000e+00> : vector<32xf32>
    %98 = vector.multi_reduction <add>, %95, %cst_44 [1] : vector<32x128xf32> to vector<32xf32>
    %99 = vector.shape_cast %98 : vector<32xf32> to vector<32x1xf32>
    %cst_45 = arith.constant 1.280000e+02 : f32
    %100 = vector.broadcast %cst_45 : f32 to vector<32x1xf32>
    %101 = arith.divf %99, %100 : vector<32x1xf32>
    %102 = vector.broadcast %101 : vector<32x1xf32> to vector<32x128xf32>
    %103 = arith.subf %95, %102 : vector<32x128xf32>
    %104 = arith.mulf %103, %103 : vector<32x128xf32>
    %cst_46 = arith.constant dense<0.000000e+00> : vector<32xf32>
    %105 = vector.multi_reduction <add>, %104, %cst_46 [1] : vector<32x128xf32> to vector<32xf32>
    %106 = vector.shape_cast %105 : vector<32xf32> to vector<32x1xf32>
    %cst_47 = arith.constant 1.280000e+02 : f32
    %107 = vector.broadcast %cst_47 : f32 to vector<32x1xf32>
    %108 = arith.divf %106, %107 : vector<32x1xf32>
    %109 = vector.broadcast %101 : vector<32x1xf32> to vector<32x128xf32>
    %110 = arith.subf %95, %109 : vector<32x128xf32>
    %cst_48 = arith.constant 9.99999974E-6 : f32
    %111 = vector.broadcast %cst_48 : f32 to vector<32x1xf32>
    %112 = arith.addf %108, %111 : vector<32x1xf32>
    %113 = math.rsqrt %112 : vector<32x1xf32>
    %114 = vector.broadcast %113 : vector<32x1xf32> to vector<32x128xf32>
    %115 = arith.mulf %110, %114 : vector<32x128xf32>
    %116 = vector.broadcast %96 : vector<1x128xf32> to vector<32x128xf32>
    %117 = arith.mulf %115, %116 : vector<32x128xf32>
    %118 = vector.broadcast %97 : vector<1x128xf32> to vector<32x128xf32>
    %119 = arith.addf %117, %118 : vector<32x128xf32>
    %c0_49 = arith.constant 0 : index
    %c0_50 = arith.constant 0 : index
    %120 = vector.load %arg13[%c0_49, %c0_50] : memref<128x256xbf16, #tpu.memory_space<vmem>>, vector<128x256xbf16>
    %121 = arith.truncf %119 : vector<32x128xf32> to vector<32x128xbf16>
    %cst_51 = arith.constant dense<0.000000e+00> : vector<32x256xf32>
    %122 = tpu.matmul %121, %120, %cst_51 {dimension_numbers = #tpu.dot_dimension_numbers<[1], [0], [0], [1], [0, 0, 1, 1], [], []>} : vector<32x128xbf16>, vector<128x256xbf16>, vector<32x256xf32> -> vector<32x256xf32>
    %c0_52 = arith.constant 0 : index
    %c0_53 = arith.constant 0 : index
    %123 = vector.load %arg14[%c0_52, %c0_53] : memref<1x256xf32, #tpu.memory_space<vmem>>, vector<1x256xf32>
    %124 = vector.broadcast %123 : vector<1x256xf32> to vector<32x256xf32>
    %125 = arith.addf %122, %124 : vector<32x256xf32>
    %cst_54 = arith.constant 0.000000e+00 : f32
    %126 = vector.broadcast %cst_54 : f32 to vector<32x256xf32>
    %127 = arith.maximumf %125, %126 : vector<32x256xf32>
    %c0_55 = arith.constant 0 : index
    %c0_56 = arith.constant 0 : index
    %128 = vector.load %arg15[%c0_55, %c0_56] : memref<256x128xbf16, #tpu.memory_space<vmem>>, vector<256x128xbf16>
    %129 = arith.truncf %127 : vector<32x256xf32> to vector<32x256xbf16>
    %cst_57 = arith.constant dense<0.000000e+00> : vector<32x128xf32>
    %130 = tpu.matmul %129, %128, %cst_57 {dimension_numbers = #tpu.dot_dimension_numbers<[1], [0], [0], [1], [0, 0, 1, 1], [], []>} : vector<32x256xbf16>, vector<256x128xbf16>, vector<32x128xf32> -> vector<32x128xf32>
    %c0_58 = arith.constant 0 : index
    %c0_59 = arith.constant 0 : index
    %131 = vector.load %arg16[%c0_58, %c0_59] : memref<1x128xf32, #tpu.memory_space<vmem>>, vector<1x128xf32>
    %132 = vector.broadcast %131 : vector<1x128xf32> to vector<32x128xf32>
    %133 = arith.addf %130, %132 : vector<32x128xf32>
    %134 = arith.addf %119, %133 : vector<32x128xf32>
    %c0_60 = arith.constant 0 : index
    %c0_61 = arith.constant 0 : index
    %135 = vector.load %arg17[%c0_60, %c0_61] : memref<1x128xf32, #tpu.memory_space<vmem>>, vector<1x128xf32>
    %c0_62 = arith.constant 0 : index
    %c0_63 = arith.constant 0 : index
    %136 = vector.load %arg18[%c0_62, %c0_63] : memref<1x128xf32, #tpu.memory_space<vmem>>, vector<1x128xf32>
    %cst_64 = arith.constant dense<0.000000e+00> : vector<32xf32>
    %137 = vector.multi_reduction <add>, %134, %cst_64 [1] : vector<32x128xf32> to vector<32xf32>
    %138 = vector.shape_cast %137 : vector<32xf32> to vector<32x1xf32>
    %cst_65 = arith.constant 1.280000e+02 : f32
    %139 = vector.broadcast %cst_65 : f32 to vector<32x1xf32>
    %140 = arith.divf %138, %139 : vector<32x1xf32>
    %141 = vector.broadcast %140 : vector<32x1xf32> to vector<32x128xf32>
    %142 = arith.subf %134, %141 : vector<32x128xf32>
    %143 = arith.mulf %142, %142 : vector<32x128xf32>
    %cst_66 = arith.constant dense<0.000000e+00> : vector<32xf32>
    %144 = vector.multi_reduction <add>, %143, %cst_66 [1] : vector<32x128xf32> to vector<32xf32>
    %145 = vector.shape_cast %144 : vector<32xf32> to vector<32x1xf32>
    %cst_67 = arith.constant 1.280000e+02 : f32
    %146 = vector.broadcast %cst_67 : f32 to vector<32x1xf32>
    %147 = arith.divf %145, %146 : vector<32x1xf32>
    %148 = vector.broadcast %140 : vector<32x1xf32> to vector<32x128xf32>
    %149 = arith.subf %134, %148 : vector<32x128xf32>
    %cst_68 = arith.constant 9.99999974E-6 : f32
    %150 = vector.broadcast %cst_68 : f32 to vector<32x1xf32>
    %151 = arith.addf %147, %150 : vector<32x1xf32>
    %152 = math.rsqrt %151 : vector<32x1xf32>
    %153 = vector.broadcast %152 : vector<32x1xf32> to vector<32x128xf32>
    %154 = arith.mulf %149, %153 : vector<32x128xf32>
    %155 = vector.broadcast %135 : vector<1x128xf32> to vector<32x128xf32>
    %156 = arith.mulf %154, %155 : vector<32x128xf32>
    %157 = vector.broadcast %136 : vector<1x128xf32> to vector<32x128xf32>
    %158 = arith.addf %156, %157 : vector<32x128xf32>
    %cst_69 = arith.constant 0.000000e+00 : f32
    %159 = vector.broadcast %cst_69 : f32 to vector<32x128xf32>
    %160 = arith.maximumf %158, %159 : vector<32x128xf32>
    %c0_70 = arith.constant 0 : index
    %c0_71 = arith.constant 0 : index
    %161 = vector.load %arg19[%c0_70, %c0_71] : memref<128x128xbf16, #tpu.memory_space<vmem>>, vector<128x128xbf16>
    %162 = arith.truncf %160 : vector<32x128xf32> to vector<32x128xbf16>
    %cst_72 = arith.constant dense<0.000000e+00> : vector<32x128xf32>
    %163 = tpu.matmul %162, %161, %cst_72 {dimension_numbers = #tpu.dot_dimension_numbers<[1], [0], [0], [1], [0, 0, 1, 1], [], []>} : vector<32x128xbf16>, vector<128x128xbf16>, vector<32x128xf32> -> vector<32x128xf32>
    %c0_73 = arith.constant 0 : index
    %c0_74 = arith.constant 0 : index
    %164 = vector.load %arg20[%c0_73, %c0_74] : memref<1x128xf32, #tpu.memory_space<vmem>>, vector<1x128xf32>
    %165 = vector.broadcast %164 : vector<1x128xf32> to vector<32x128xf32>
    %166 = arith.addf %163, %165 : vector<32x128xf32>
    %167 = vector.shape_cast %166 : vector<32x128xf32> to vector<2x16x128xf32>
    %c0_75 = arith.constant 0 : index
    %c0_76 = arith.constant 0 : index
    %c0_77 = arith.constant 0 : index
    %168 = vector.load %arg21[%c0_75, %c0_76, %c0_77] : memref<2x16x128xf32, #tpu.memory_space<vmem>>, vector<2x16x128xf32>
    tpu.vector_store %arg21[%c0_75, %c0_76, %c0_77], %167 {strides = array<i32>} : memref<2x16x128xf32, #tpu.memory_space<vmem>>, vector<2x16x128xf32>,
    return
  }
  func.func @transform_0(%arg0: i32) -> (i32, i32, i32) {
    %c0_i32 = arith.constant 0 : i32
    %c0_i32_0 = arith.constant 0 : i32
    %c0_i32_1 = arith.constant 0 : i32
    return %arg0, %c0_i32, %c0_i32_0 : i32, i32, i32
  }
  func.func @transform_1(%arg0: i32) -> (i32, i32, i32) {
    %c0_i32 = arith.constant 0 : i32
    %c0_i32_0 = arith.constant 0 : i32
    %c0_i32_1 = arith.constant 0 : i32
    return %arg0, %c0_i32, %c0_i32_0 : i32, i32, i32
  }
  func.func @transform_2(%arg0: i32) -> (i32, i32) {
    %c0_i32 = arith.constant 0 : i32
    %c0_i32_0 = arith.constant 0 : i32
    %c0_i32_1 = arith.constant 0 : i32
    return %c0_i32, %c0_i32_0 : i32, i32
  }
  func.func @transform_3(%arg0: i32) -> (i32, i32) {
    %c0_i32 = arith.constant 0 : i32
    %c0_i32_0 = arith.constant 0 : i32
    %c0_i32_1 = arith.constant 0 : i32
    return %c0_i32, %c0_i32_0 : i32, i32
  }
  func.func @transform_4(%arg0: i32) -> (i32, i32) {
    %c0_i32 = arith.constant 0 : i32
    %c0_i32_0 = arith.constant 0 : i32
    %c0_i32_1 = arith.constant 0 : i32
    return %c0_i32, %c0_i32_0 : i32, i32
  }
  func.func @transform_5(%arg0: i32) -> (i32, i32) {
    %c0_i32 = arith.constant 0 : i32
    %c0_i32_0 = arith.constant 0 : i32
    %c0_i32_1 = arith.constant 0 : i32
    return %c0_i32, %c0_i32_0 : i32, i32
  }
  func.func @transform_6(%arg0: i32) -> (i32, i32) {
    %c0_i32 = arith.constant 0 : i32
    %c0_i32_0 = arith.constant 0 : i32
    %c0_i32_1 = arith.constant 0 : i32
    return %c0_i32, %c0_i32_0 : i32, i32
  }
  func.func @transform_7(%arg0: i32) -> (i32, i32) {
    %c0_i32 = arith.constant 0 : i32
    %c0_i32_0 = arith.constant 0 : i32
    %c0_i32_1 = arith.constant 0 : i32
    return %c0_i32, %c0_i32_0 : i32, i32
  }
  func.func @transform_8(%arg0: i32) -> (i32, i32) {
    %c0_i32 = arith.constant 0 : i32
    %c0_i32_0 = arith.constant 0 : i32
    %c0_i32_1 = arith.constant 0 : i32
    return %c0_i32, %c0_i32_0 : i32, i32
  }
  func.func @transform_9(%arg0: i32) -> (i32, i32) {
    %c0_i32 = arith.constant 0 : i32
    %c0_i32_0 = arith.constant 0 : i32
    %c0_i32_1 = arith.constant 0 : i32
    return %c0_i32, %c0_i32_0 : i32, i32
  }
  func.func @transform_10(%arg0: i32) -> (i32, i32) {
    %c0_i32 = arith.constant 0 : i32
    %c0_i32_0 = arith.constant 0 : i32
    %c0_i32_1 = arith.constant 0 : i32
    return %c0_i32, %c0_i32_0 : i32, i32
  }
  func.func @transform_11(%arg0: i32) -> (i32, i32) {
    %c0_i32 = arith.constant 0 : i32
    %c0_i32_0 = arith.constant 0 : i32
    %c0_i32_1 = arith.constant 0 : i32
    return %c0_i32, %c0_i32_0 : i32, i32
  }
  func.func @transform_12(%arg0: i32) -> (i32, i32) {
    %c0_i32 = arith.constant 0 : i32
    %c0_i32_0 = arith.constant 0 : i32
    %c0_i32_1 = arith.constant 0 : i32
    return %c0_i32, %c0_i32_0 : i32, i32
  }
  func.func @transform_13(%arg0: i32) -> (i32, i32) {
    %c0_i32 = arith.constant 0 : i32
    %c0_i32_0 = arith.constant 0 : i32
    %c0_i32_1 = arith.constant 0 : i32
    return %c0_i32, %c0_i32_0 : i32, i32
  }
  func.func @transform_14(%arg0: i32) -> (i32, i32) {
    %c0_i32 = arith.constant 0 : i32
    %c0_i32_0 = arith.constant 0 : i32
    %c0_i32_1 = arith.constant 0 : i32
    return %c0_i32, %c0_i32_0 : i32, i32
  }
  func.func @transform_15(%arg0: i32) -> (i32, i32) {
    %c0_i32 = arith.constant 0 : i32
    %c0_i32_0 = arith.constant 0 : i32
    %c0_i32_1 = arith.constant 0 : i32
    return %c0_i32, %c0_i32_0 : i32, i32
  }
  func.func @transform_16(%arg0: i32) -> (i32, i32) {
    %c0_i32 = arith.constant 0 : i32
    %c0_i32_0 = arith.constant 0 : i32
    %c0_i32_1 = arith.constant 0 : i32
    return %c0_i32, %c0_i32_0 : i32, i32
  }
  func.func @transform_17(%arg0: i32) -> (i32, i32) {
    %c0_i32 = arith.constant 0 : i32
    %c0_i32_0 = arith.constant 0 : i32
    %c0_i32_1 = arith.constant 0 : i32
    return %c0_i32, %c0_i32_0 : i32, i32
  }
  func.func @transform_18(%arg0: i32) -> (i32, i32) {
    %c0_i32 = arith.constant 0 : i32
    %c0_i32_0 = arith.constant 0 : i32
    %c0_i32_1 = arith.constant 0 : i32
    return %c0_i32, %c0_i32_0 : i32, i32
  }
  func.func @transform_19(%arg0: i32) -> (i32, i32) {
    %c0_i32 = arith.constant 0 : i32
    %c0_i32_0 = arith.constant 0 : i32
    %c0_i32_1 = arith.constant 0 : i32
    return %c0_i32, %c0_i32_0 : i32, i32
  }
  func.func @transform_20(%arg0: i32) -> (i32, i32, i32) {
    %c0_i32 = arith.constant 0 : i32
    %c0_i32_0 = arith.constant 0 : i32
    %c0_i32_1 = arith.constant 0 : i32
    return %arg0, %c0_i32, %c0_i32_0 : i32, i32, i32
  }
}

</mosaic_0001>

<llo_original>
// kernel: tpu_custom_call.1
$region0: #{tpu_custom_call.1}
  #allocation0 [shape = 'u32[]', space=smem, size = 0x4, offset = 0x4, fixed_abs, tag = 'smem constant byte address 0x4 - core index']
  #allocation1 [shape = 'u32[144,128]{1,0:T(1,128)}', space=vmem, size = 0x12000, scoped, tag = 'internal scratch']
  %s0 = inlined_call_operand.hbm [shape: f32[2,16,16], index: 0, kind: input, shape index: {}]
  %s1 = inlined_call_operand.hbm [shape: f32[2,8,32], index: 1, kind: input, shape index: {}]
  %s2 = inlined_call_operand.hbm [shape: bf16[16,128], index: 2, kind: input, shape index: {}]
  %s3 = inlined_call_operand.hbm [shape: f32[1,128], index: 3, kind: input, shape index: {}]
  %s4 = inlined_call_operand.hbm [shape: bf16[32,128], index: 4, kind: input, shape index: {}]
  %s5 = inlined_call_operand.hbm [shape: f32[1,128], index: 5, kind: input, shape index: {}]
  %s6 = inlined_call_operand.vmem [shape: bf16[128,32], index: 6, kind: input, shape index: {}]
  %s7 = inlined_call_operand.hbm [shape: f32[1,32], index: 7, kind: input, shape index: {}]
  %s8 = inlined_call_operand.vmem [shape: bf16[128,160], index: 8, kind: input, shape index: {}]
  %s9 = inlined_call_operand.vmem [shape: f32[1,160], index: 9, kind: input, shape index: {}]
  %s10 = inlined_call_operand.vmem [shape: f32[1,128], index: 10, kind: input, shape index: {}]
  %s11 = inlined_call_operand.vmem [shape: f32[1,128], index: 11, kind: input, shape index: {}]
  %s12 = inlined_call_operand.vmem [shape: bf16[128,256], index: 12, kind: input, shape index: {}]
  %s13 = inlined_call_operand.vmem [shape: f32[1,256], index: 13, kind: input, shape index: {}]
  %s14 = inlined_call_operand.vmem [shape: bf16[256,128], index: 14, kind: input, shape index: {}]
  %s15 = inlined_call_operand.vmem [shape: f32[1,128], index: 15, kind: input, shape index: {}]
  %s16 = inlined_call_operand.vmem [shape: f32[1,128], index: 16, kind: input, shape index: {}]
  %s17 = inlined_call_operand.vmem [shape: f32[1,128], index: 17, kind: input, shape index: {}]
  %s18 = inlined_call_operand.vmem [shape: bf16[128,128], index: 18, kind: input, shape index: {}]
  %s19 = inlined_call_operand.vmem [shape: f32[1,128], index: 19, kind: input, shape index: {}]
  %s20 = inlined_call_operand.hbm [shape: f32[2,16,128], index: 20, kind: output, shape index: {}]
  %s21 = sld [smem:[#allocation0]]
  $region118: #{tpu_custom_call.1} parent=0
    _
  %s23 = ssub.s32 1, %s21
  %s24 = scalar_select 0, %s23, %s21
  $region1: #{tpu_custom_call.1} parent=0
    #allocation2 [shape = 'u8[16384]{0}', space=vmem, size = 0x4000, scoped, tag = 'input window, operand 0, single buffered']
    #allocation3 [shape = 's32[1]{0}', space=sflag, size = 0x4, scoped, tag = 'scoped memory for tpu_custom_call.1']
    #allocation4 [shape = 's32[1]{0}', space=sflag, size = 0x4, scoped, tag = 'scoped memory for tpu_custom_call.1']
    #allocation5 [shape = 'u8[8192]{0}', space=vmem, size = 0x2000, scoped, tag = 'input window, operand 1, single buffered']
    #allocation6 [shape = 's32[1]{0}', space=sflag, size = 0x4, scoped, tag = 'scoped memory for tpu_custom_call.1']
    #allocation7 [shape = 'u8[4096]{0}', space=vmem, size = 0x1000, scoped, tag = 'input window, operand 2, single buffered']
    #allocation8 [shape = 'u8[512]{0}', space=vmem, size = 0x400, scoped, tag = 'input window, operand 3, single buffered']
    #allocation9 [shape = 's32[1]{0}', space=sflag, size = 0x4, scoped, tag = 'scoped memory for tpu_custom_call.1']
    #allocation10 [shape = 'u8[8192]{0}', space=vmem, size = 0x2000, scoped, tag = 'input window, operand 4, single buffered']
    #allocation11 [shape = 'u8[512]{0}', space=vmem, size = 0x400, scoped, tag = 'input window, operand 5, single buffered']
    #allocation12 [shape = 's32[1]{0}', space=sflag, size = 0x4, scoped, tag = 'scoped memory for tpu_custom_call.1']
    #allocation13 [shape = 'u8[512]{0}', space=vmem, size = 0x400, scoped, tag = 'input window, operand 7, single buffered']
    #allocation14 [shape = 'u8[16384]{0}', space=vmem, size = 0x4000, scoped, tag = 'output window, operand 0, single buffered']
    %25 = vsyncpa [#allocation3], 0
    %26 = vsyncpa [#allocation6], 0
    %27 = vsyncpa [#allocation9], 0
    %28 = vsyncpa [#allocation12], 0
    %29 = vsyncpa [#allocation4], 0
    // Predicated region
    $region2: #{tpu_custom_call.1} parent=1 // pred_check
      _
    $region3: #{tpu_custom_call.1} parent=1 // pred_check_branch
      %31 = sbr.rel (0) target = $region5
    $region4: #{tpu_custom_call.1} parent=1 // pred_region
      %s33 = ssub.s32 512, 512
      %34 = vsyncadd [#allocation3], %s33
      %s35 = sshll.u32 [#allocation2], 4
      %s36 = int_to_ptr.vmem [resolvable:$true] %s35
      %41 = dma.hbm_to_vmem [thread:$0]  %s0, 512, %s36, [#allocation3], 128, 128, 8
    $region5: #{tpu_custom_call.1} parent=1 // pred_fallthru
      _
    // Predicated region
    $region6: #{tpu_custom_call.1} parent=1 // pred_check
      _
    $region7: #{tpu_custom_call.1} parent=1 // pred_check_branch
      %43 = sbr.rel (0) target = $region9
    $region8: #{tpu_custom_call.1} parent=1 // pred_region
      %s45 = ssub.s32 256, 256
      %46 = vsyncadd [#allocation6], %s45
      %s47 = sshll.u32 [#allocation5], 4
      %s48 = int_to_ptr.vmem [resolvable:$true] %s47
      %53 = dma.hbm_to_vmem [thread:$0]  %s1, 256, %s48, [#allocation6], 128, 128, 8
    $region9: #{tpu_custom_call.1} parent=1 // pred_fallthru
      _
    // Predicated region
    $region10: #{tpu_custom_call.1} parent=1 // pred_check
      _
    $region11: #{tpu_custom_call.1} parent=1 // pred_check_branch
      %55 = sbr.rel (0) target = $region13
    $region12: #{tpu_custom_call.1} parent=1 // pred_region
      %s57 = ssub.s32 128, 128
      %58 = vsyncadd [#allocation6], %s57
      %s59 = sshll.u32 [#allocation7], 4
      %s60 = int_to_ptr.vmem [resolvable:$true] %s59
      %65 = dma.hbm_to_vmem [thread:$0]  %s2, 128, %s60, [#allocation6], 64, 64, 4
    $region13: #{tpu_custom_call.1} parent=1 // pred_fallthru
      _
    // Predicated region
    $region14: #{tpu_custom_call.1} parent=1 // pred_check
      _
    $region15: #{tpu_custom_call.1} parent=1 // pred_check_branch
      %67 = sbr.rel (0) target = $region17
    $region16: #{tpu_custom_call.1} parent=1 // pred_region
      %s69 = ssub.s32 16, 16
      %70 = vsyncadd [#allocation9], %s69
      %s72 = sshll.u32 [#allocation8], 4
      %s73 = int_to_ptr.vmem [resolvable:$true] %s72
      %75 = dma.hbm_to_vmem [thread:$0]  %s3, 16, %s73, [#allocation9]
    $region17: #{tpu_custom_call.1} parent=1 // pred_fallthru
      _
    // Predicated region
    $region18: #{tpu_custom_call.1} parent=1 // pred_check
      _
    $region19: #{tpu_custom_call.1} parent=1 // pred_check_branch
      %77 = sbr.rel (0) target = $region21
    $region20: #{tpu_custom_call.1} parent=1 // pred_region
      %s79 = ssub.s32 256, 256
      %80 = vsyncadd [#allocation9], %s79
      %s81 = sshll.u32 [#allocation10], 4
      %s82 = int_to_ptr.vmem [resolvable:$true] %s81
      %87 = dma.hbm_to_vmem [thread:$0]  %s4, 256, %s82, [#allocation9], 64, 64, 4
    $region21: #{tpu_custom_call.1} parent=1 // pred_fallthru
      _
    // Predicated region
    $region22: #{tpu_custom_call.1} parent=1 // pred_check
      _
    $region23: #{tpu_custom_call.1} parent=1 // pred_check_branch
      %89 = sbr.rel (0) target = $region25
    $region24: #{tpu_custom_call.1} parent=1 // pred_region
      %s91 = ssub.s32 16, 16
      %92 = vsyncadd [#allocation12], %s91
      %s94 = sshll.u32 [#allocation11], 4
      %s95 = int_to_ptr.vmem [resolvable:$true] %s94
      %97 = dma.hbm_to_vmem [thread:$0]  %s5, 16, %s95, [#allocation12]
    $region25: #{tpu_custom_call.1} parent=1 // pred_fallthru
      _
    // Predicated region
    $region26: #{tpu_custom_call.1} parent=1 // pred_check
      _
    $region27: #{tpu_custom_call.1} parent=1 // pred_check_branch
      %99 = sbr.rel (0) target = $region29
    $region28: #{tpu_custom_call.1} parent=1 // pred_region
      _
    $region29: #{tpu_custom_call.1} parent=1 // pred_fallthru
      _
    // Predicated region
    $region30: #{tpu_custom_call.1} parent=1 // pred_check
      _
    $region31: #{tpu_custom_call.1} parent=1 // pred_check_branch
      %101 = sbr.rel (0) target = $region33
    $region32: #{tpu_custom_call.1} parent=1 // pred_region
      %s103 = ssub.s32 16, 16
      %104 = vsyncadd [#allocation12], %s103
      %s106 = sshll.u32 [#allocation13], 4
      %s107 = int_to_ptr.vmem [resolvable:$true] %s106
      %109 = dma.hbm_to_vmem [thread:$0]  %s7, 16, %s107, [#allocation12]
    $region33: #{tpu_custom_call.1} parent=1 // pred_fallthru
      _
    // Predicated region
    $region34: #{tpu_custom_call.1} parent=1 // pred_check
      _
    $region35: #{tpu_custom_call.1} parent=1 // pred_check_branch
      %111 = sbr.rel (0) target = $region37
    $region36: #{tpu_custom_call.1} parent=1 // pred_region
      _
    $region37: #{tpu_custom_call.1} parent=1 // pred_fallthru
      _
    // Predicated region
    $region38: #{tpu_custom_call.1} parent=1 // pred_check
      _
    $region39: #{tpu_custom_call.1} parent=1 // pred_check_branch
      %113 = sbr.rel (0) target = $region41
    $region40: #{tpu_custom_call.1} parent=1 // pred_region
      _
    $region41: #{tpu_custom_call.1} parent=1 // pred_fallthru
      _
    // Predicated region
    $region42: #{tpu_custom_call.1} parent=1 // pred_check
      _
    $region43: #{tpu_custom_call.1} parent=1 // pred_check_branch
      %115 = sbr.rel (0) target = $region45
    $region44: #{tpu_custom_call.1} parent=1 // pred_region
      _
    $region45: #{tpu_custom_call.1} parent=1 // pred_fallthru
      _
    // Predicated region
    $region46: #{tpu_custom_call.1} parent=1 // pred_check
      _
    $region47: #{tpu_custom_call.1} parent=1 // pred_check_branch
      %117 = sbr.rel (0) target = $region49
    $region48: #{tpu_custom_call.1} parent=1 // pred_region
      _
    $region49: #{tpu_custom_call.1} parent=1 // pred_fallthru
      _
    // Predicated region
    $region50: #{tpu_custom_call.1} parent=1 // pred_check
      _
    $region51: #{tpu_custom_call.1} parent=1 // pred_check_branch
      %119 = sbr.rel (0) target = $region53
    $region52: #{tpu_custom_call.1} parent=1 // pred_region
      _
    $region53: #{tpu_custom_call.1} parent=1 // pred_fallthru
      _
    // Predicated region
    $region54: #{tpu_custom_call.1} parent=1 // pred_check
      _
    $region55: #{tpu_custom_call.1} parent=1 // pred_check_branch
      %121 = sbr.rel (0) target = $region57
    $region56: #{tpu_custom_call.1} parent=1 // pred_region
      _
    $region57: #{tpu_custom_call.1} parent=1 // pred_fallthru
      _
    // Predicated region
    $region58: #{tpu_custom_call.1} parent=1 // pred_check
      _
    $region59: #{tpu_custom_call.1} parent=1 // pred_check_branch
      %123 = sbr.rel (0) target = $region61
    $region60: #{tpu_custom_call.1} parent=1 // pred_region
      _
    $region61: #{tpu_custom_call.1} parent=1 // pred_fallthru
      _
    // Predicated region
    $region62: #{tpu_custom_call.1} parent=1 // pred_check
      _
    $region63: #{tpu_custom_call.1} parent=1 // pred_check_branch
      %125 = sbr.rel (0) target = $region65
    $region64: #{tpu_custom_call.1} parent=1 // pred_region
      _
    $region65: #{tpu_custom_call.1} parent=1 // pred_fallthru
      _
    // Predicated region
    $region66: #{tpu_custom_call.1} parent=1 // pred_check
      _
    $region67: #{tpu_custom_call.1} parent=1 // pred_check_branch
      %127 = sbr.rel (0) target = $region69
    $region68: #{tpu_custom_call.1} parent=1 // pred_region
      _
    $region69: #{tpu_custom_call.1} parent=1 // pred_fallthru
      _
    // Predicated region
    $region70: #{tpu_custom_call.1} parent=1 // pred_check
      _
    $region71: #{tpu_custom_call.1} parent=1 // pred_check_branch
      %129 = sbr.rel (0) target = $region73
    $region72: #{tpu_custom_call.1} parent=1 // pred_region
      _
    $region73: #{tpu_custom_call.1} parent=1 // pred_fallthru
      _
    // Predicated region
    $region74: #{tpu_custom_call.1} parent=1 // pred_check
      _
    $region75: #{tpu_custom_call.1} parent=1 // pred_check_branch
      %131 = sbr.rel (0) target = $region77
    $region76: #{tpu_custom_call.1} parent=1 // pred_region
      _
    $region77: #{tpu_custom_call.1} parent=1 // pred_fallthru
      _
    // Predicated region
    $region78: #{tpu_custom_call.1} parent=1 // pred_check
      _
    $region79: #{tpu_custom_call.1} parent=1 // pred_check_branch
      %133 = sbr.rel (0) target = $region81
    $region80: #{tpu_custom_call.1} parent=1 // pred_region
      _
    $region81: #{tpu_custom_call.1} parent=1 // pred_fallthru
      _
    // Predicated region
    $region82: #{tpu_custom_call.1} parent=1 // pred_check
      _
    $region83: #{tpu_custom_call.1} parent=1 // pred_check_branch
      %135 = sbr.rel (0) target = $region85
    $region84: #{tpu_custom_call.1} parent=1 // pred_region
      %136 = dma.done [#allocation3], 512
    $region85: #{tpu_custom_call.1} parent=1 // pred_fallthru
      _
    // Predicated region
    $region86: #{tpu_custom_call.1} parent=1 // pred_check
      _
    $region87: #{tpu_custom_call.1} parent=1 // pred_check_branch
      %138 = sbr.rel (0) target = $region89
    $region88: #{tpu_custom_call.1} parent=1 // pred_region
      %139 = dma.done [#allocation6], 256
    $region89: #{tpu_custom_call.1} parent=1 // pred_fallthru
      _
    // Predicated region
    $region90: #{tpu_custom_call.1} parent=1 // pred_check
      _
    $region91: #{tpu_custom_call.1} parent=1 // pred_check_branch
      %141 = sbr.rel (0) target = $region93
    $region92: #{tpu_custom_call.1} parent=1 // pred_region
      %142 = dma.done [#allocation6], 128
    $region93: #{tpu_custom_call.1} parent=1 // pred_fallthru
      _
    // Predicated region
    $region94: #{tpu_custom_call.1} parent=1 // pred_check
      _
    $region95: #{tpu_custom_call.1} parent=1 // pred_check_branch
      %144 = sbr.rel (0) target = $region97
    $region96: #{tpu_custom_call.1} parent=1 // pred_region
      %145 = dma.done [#allocation9], 16
    $region97: #{tpu_custom_call.1} parent=1 // pred_fallthru
      _
    // Predicated region
    $region98: #{tpu_custom_call.1} parent=1 // pred_check
      _
    $region99: #{tpu_custom_call.1} parent=1 // pred_check_branch
      %147 = sbr.rel (0) target = $region101
    $region100: #{tpu_custom_call.1} parent=1 // pred_region
      %148 = dma.done [#allocation9], 256
    $region101: #{tpu_custom_call.1} parent=1 // pred_fallthru
      _
    // Predicated region
    $region102: #{tpu_custom_call.1} parent=1 // pred_check
      _
    $region103: #{tpu_custom_call.1} parent=1 // pred_check_branch
      %150 = sbr.rel (0) target = $region105
    $region104: #{tpu_custom_call.1} parent=1 // pred_region
      %151 = dma.done [#allocation12], 16
    $region105: #{tpu_custom_call.1} parent=1 // pred_fallthru
      _
    // Predicated region
    $region106: #{tpu_custom_call.1} parent=1 // pred_check
      _
    $region107: #{tpu_custom_call.1} parent=1 // pred_check_branch
      %153 = sbr.rel (0) target = $region109
    $region108: #{tpu_custom_call.1} parent=1 // pred_region
      %154 = dma.done [#allocation12], 16
    $region109: #{tpu_custom_call.1} parent=1 // pred_fallthru
      _
    %v156 = vld [vmem:[#allocation2] sm:$0xff]
    %v157 = vld [vmem:[#allocation2 + $0x8] sm:$0xff]
    %v158 = vld [vmem:[#allocation2 + $0x10] sm:$0xff]
    %v159 = vld [vmem:[#allocation2 + $0x18] sm:$0xff]
    %v160 = vld [vmem:[#allocation5] sm:$0xff]
    %v161 = vld [vmem:[#allocation5 + $0x8] sm:$0xff]
    %v162 = vld [vmem:[#allocation7] sm:$0xf]
    %v163 = vld [vmem:[#allocation7 + $0x4] sm:$0xf]
    %v164 = vpack.c.bf16 %v157, %v156
    %v165 = vpack.c.bf16 %v159, %v158
    %v166 = vld [vmem:[#allocation8] sm:$0x1]
    %v168 = vlaneseq
    %v169 = vshrl.u32 %v168, 7
    %v170 = vsub.s32 0, %v169
    %v171 = vrot.slane %v166, %v170
    %v175 = vunpack.c.l.b16 %v162
    %v176 = vunpack.c.l.b16 %v163
    %v177 = vpack.c.b16 %v176, %v175
    %vm179 = vcmask 130048
    %v181 = vsel %vm179, %v164, 0
    %v184 = vsel %vm179, %v165, 0
    %186 = vmatprep.subr.bf16.mxu0 0
    %187 = vmatpush1.bf16.msra.mxu0 %v177
    %188 = vmatprep.subr.bf16.mxu0 0
    %189 = vmatpush1.bf16.msra.mxu0 0
    %190 = vmatprep.subr.bf16.mxu0 0
    %191 = vmatpush1.bf16.msra.mxu0 0
    %192 = vmatprep.subr.bf16.mxu0 0
    %193 = vmatpush1.bf16.msra.mxu0 0
    %194 = vmatprep.subr.bf16.mxu0 0
    %195 = vmatpush1.bf16.msra.mxu0 0
    %196 = vmatprep.subr.bf16.mxu0 0
    %197 = vmatpush1.bf16.msra.mxu0 0
    %198 = vmatprep.subr.bf16.mxu0 0
    %199 = vmatpush1.bf16.msra.mxu0 0
    %200 = vmatprep.subr.bf16.mxu0 0
    %201 = vmatpush1.bf16.msra.mxu0 0
    %202 = vmatprep.subr.bf16.mxu0 0
    %203 = vmatpush1.bf16.msra.mxu0 0
    %204 = vmatprep.subr.bf16.mxu0 0
    %205 = vmatpush1.bf16.msra.mxu0 0
    %206 = vmatprep.subr.bf16.mxu0 0
    %207 = vmatpush1.bf16.msra.mxu0 0
    %208 = vmatprep.subr.bf16.mxu0 0
    %209 = vmatpush1.bf16.msra.mxu0 0
    %210 = vmatprep.subr.bf16.mxu0 0
    %211 = vmatpush1.bf16.msra.mxu0 0
    %212 = vmatprep.subr.bf16.mxu0 0
    %213 = vmatpush1.bf16.msra.mxu0 0
    %214 = vmatprep.subr.bf16.mxu0 0
    %215 = vmatpush1.bf16.msra.mxu0 0
    %216 = vmatprep.subr.bf16.mxu0 0
    %217 = vmatpush1.bf16.msra.mxu0 0
    %218 = vmatprep.mubr.bf16.mxu0 0
    %219 = vmatmul.mubr.bf16.gmra.mrb[0].mxu0 %v181
    %v220 = vpop.f32.mrb[0].mxu0
    %v221 = vadd.f32 %v171, %v220
    %v222 = vpop.f32.mrb[0].mxu0
    %v223 = vpop.f32.mrb[0].mxu0
    %v224 = vadd.f32 %v171, %v223
    %v225 = vpop.f32.mrb[0].mxu0
    %226 = vmatprep.mubr.bf16.mxu0 0
    %227 = vmatmul.mubr.bf16.gmra.mrb[0].mxu0 %v184
    %v228 = vpop.f32.mrb[0].mxu0
    %v229 = vadd.f32 %v171, %v228
    %v230 = vpop.f32.mrb[0].mxu0
    %v231 = vpop.f32.mrb[0].mxu0
    %v232 = vadd.f32 %v171, %v231
    %v233 = vpop.f32.mrb[0].mxu0
    %234 = vdwg.mxu0
    %v235 = vld [vmem:[#allocation10] sm:$0xf]
    %v236 = vld [vmem:[#allocation10 + $0x4] sm:$0xf]
    %v237 = vld [vmem:[#allocation10 + $0x8] sm:$0xf]
    %v238 = vld [vmem:[#allocation10 + $0xc] sm:$0xf]
    %v239 = vpack.c.bf16 %v161, %v160
    %v240 = vld [vmem:[#allocation11] sm:$0x1]
    %v242 = vlaneseq
    %v243 = vshrl.u32 %v242, 7
    %v244 = vsub.s32 0, %v243
    %v245 = vrot.slane %v240, %v244
    %v251 = vunpack.c.l.b16 %v235
    %v252 = vunpack.c.l.b16 %v236
    %v253 = vunpack.c.l.b16 %v237
    %v254 = vunpack.c.l.b16 %v238
    %v255 = vpack.c.b16 %v252, %v251
    %v256 = vpack.c.b16 %v254, %v253
    %vm259 = vcmask 261120
    %v261 = vsel %vm259, %v239, 0
    %263 = vmatprep.subr.bf16.mxu0 0
    %264 = vmatpush1.bf16.msra.mxu0 %v255
    %265 = vmatprep.subr.bf16.mxu0 0
    %266 = vmatpush1.bf16.msra.mxu0 %v256
    %267 = vmatprep.subr.bf16.mxu0 0
    %268 = vmatpush1.bf16.msra.mxu0 0
    %269 = vmatprep.subr.bf16.mxu0 0
    %270 = vmatpush1.bf16.msra.mxu0 0
    %271 = vmatprep.subr.bf16.mxu0 0
    %272 = vmatpush1.bf16.msra.mxu0 0
    %273 = vmatprep.subr.bf16.mxu0 0
    %274 = vmatpush1.bf16.msra.mxu0 0
    %275 = vmatprep.subr.bf16.mxu0 0
    %276 = vmatpush1.bf16.msra.mxu0 0
    %277 = vmatprep.subr.bf16.mxu0 0
    %278 = vmatpush1.bf16.msra.mxu0 0
    %279 = vmatprep.subr.bf16.mxu0 0
    %280 = vmatpush1.bf16.msra.mxu0 0
    %281 = vmatprep.subr.bf16.mxu0 0
    %282 = vmatpush1.bf16.msra.mxu0 0
    %283 = vmatprep.subr.bf16.mxu0 0
    %284 = vmatpush1.bf16.msra.mxu0 0
    %285 = vmatprep.subr.bf16.mxu0 0
    %286 = vmatpush1.bf16.msra.mxu0 0
    %287 = vmatprep.subr.bf16.mxu0 0
    %288 = vmatpush1.bf16.msra.mxu0 0
    %289 = vmatprep.subr.bf16.mxu0 0
    %290 = vmatpush1.bf16.msra.mxu0 0
    %291 = vmatprep.subr.bf16.mxu0 0
    %292 = vmatpush1.bf16.msra.mxu0 0
    %293 = vmatprep.subr.bf16.mxu0 0
    %294 = vmatpush1.bf16.msra.mxu0 0
    %295 = vmatprep.mubr.bf16.mxu0 0
    %296 = vmatmul.mubr.bf16.gmra.mrb[0].mxu0 %v261
    %v297 = vpop.f32.mrb[0].mxu0
    %v298 = vadd.f32 %v245, %v297
    %v299 = vpop.f32.mrb[0].mxu0
    %v300 = vpop.f32.mrb[0].mxu0
    %v301 = vadd.f32 %v245, %v300
    %v302 = vpop.f32.mrb[0].mxu0
    %303 = vdwg.mxu0
    %v304 = vld [vmem:[%s6] sm:$0xf]
    %v305 = vld [vmem:[%s6 + $0x4] sm:$0xf]
    %v306 = vld [vmem:[%s6 + $0x8] sm:$0xf]
    %v307 = vld [vmem:[%s6 + $0xc] sm:$0xf]
    %v308 = vld [vmem:[%s6 + $0x10] sm:$0xf]
    %v309 = vld [vmem:[%s6 + $0x14] sm:$0xf]
    %v310 = vld [vmem:[%s6 + $0x18] sm:$0xf]
    %v311 = vld [vmem:[%s6 + $0x1c] sm:$0xf]
    %v312 = vld [vmem:[%s6 + $0x20] sm:$0xf]
    %v313 = vld [vmem:[%s6 + $0x24] sm:$0xf]
    %v314 = vld [vmem:[%s6 + $0x28] sm:$0xf]
    %v315 = vld [vmem:[%s6 + $0x2c] sm:$0xf]
    %v316 = vld [vmem:[%s6 + $0x30] sm:$0xf]
    %v317 = vld [vmem:[%s6 + $0x34] sm:$0xf]
    %v318 = vld [vmem:[%s6 + $0x38] sm:$0xf]
    %v319 = vld [vmem:[%s6 + $0x3c] sm:$0xf]
    %v320 = vpack.c.bf16 %v224, %v221
    %v321 = vpack.c.bf16 %v232, %v229
    %v322 = vld [vmem:[#allocation13] sm:$0x1]
    %v324 = vlaneseq
    %v325 = vshrl.u32 %v324, 7
    %v326 = vsub.s32 0, %v325
    %v327 = vrot.slane %v322, %v326
    %v345 = vunpack.c.l.b16 %v304
    %v346 = vunpack.c.l.b16 %v305
    %v347 = vunpack.c.l.b16 %v306
    %v348 = vunpack.c.l.b16 %v307
    %v349 = vunpack.c.l.b16 %v308
    %v350 = vunpack.c.l.b16 %v309
    %v351 = vunpack.c.l.b16 %v310
    %v352 = vunpack.c.l.b16 %v311
    %v353 = vunpack.c.l.b16 %v312
    %v354 = vunpack.c.l.b16 %v313
    %v355 = vunpack.c.l.b16 %v314
    %v356 = vunpack.c.l.b16 %v315
    %v357 = vunpack.c.l.b16 %v316
    %v358 = vunpack.c.l.b16 %v317
    %v359 = vunpack.c.l.b16 %v318
    %v360 = vunpack.c.l.b16 %v319
    %v361 = vpack.c.b16 %v346, %v345
    %v362 = vpack.c.b16 %v348, %v347
    %v363 = vpack.c.b16 %v350, %v349
    %v364 = vpack.c.b16 %v352, %v351
    %v365 = vpack.c.b16 %v354, %v353
    %v366 = vpack.c.b16 %v356, %v355
    %v367 = vpack.c.b16 %v358, %v357
    %v368 = vpack.c.b16 %v360, %v359
    %377 = vmatprep.subr.bf16.mxu0 0
    %378 = vmatpush1.bf16.msra.mxu0 %v361
    %379 = vmatprep.subr.bf16.mxu0 0
    %380 = vmatpush1.bf16.msra.mxu0 %v362
    %381 = vmatprep.subr.bf16.mxu0 0
    %382 = vmatpush1.bf16.msra.mxu0 %v363
    %383 = vmatprep.subr.bf16.mxu0 0
    %384 = vmatpush1.bf16.msra.mxu0 %v364
    %385 = vmatprep.subr.bf16.mxu0 0
    %386 = vmatpush1.bf16.msra.mxu0 %v365
    %387 = vmatprep.subr.bf16.mxu0 0
    %388 = vmatpush1.bf16.msra.mxu0 %v366
    %389 = vmatprep.subr.bf16.mxu0 0
    %390 = vmatpush1.bf16.msra.mxu0 %v367
    %391 = vmatprep.subr.bf16.mxu0 0
    %392 = vmatpush1.bf16.msra.mxu0 %v368
    %393 = vmatprep.subr.bf16.mxu0 0
    %394 = vmatpush1.bf16.msra.mxu0 0
    %395 = vmatprep.subr.bf16.mxu0 0
    %396 = vmatpush1.bf16.msra.mxu0 0
    %397 = vmatprep.subr.bf16.mxu0 0
    %398 = vmatpush1.bf16.msra.mxu0 0
    %399 = vmatprep.subr.bf16.mxu0 0
    %400 = vmatpush1.bf16.msra.mxu0 0
    %401 = vmatprep.subr.bf16.mxu0 0
    %402 = vmatpush1.bf16.msra.mxu0 0
    %403 = vmatprep.subr.bf16.mxu0 0
    %404 = vmatpush1.bf16.msra.mxu0 0
    %405 = vmatprep.subr.bf16.mxu0 0
    %406 = vmatpush1.bf16.msra.mxu0 0
    %407 = vmatprep.subr.bf16.mxu0 0
    %408 = vmatpush1.bf16.msra.mxu0 0
    %409 = vmatprep.mubr.bf16.mxu0 0
    %410 = vmatmul.mubr.bf16.gmra.mrb[0].mxu0 %v320
    %v411 = vpop.f32.mrb[0].mxu0
    %v412 = vadd.f32 %v327, %v411
    %v413 = vpop.f32.mrb[0].mxu0
    %v414 = vpop.f32.mrb[0].mxu0
    %v415 = vadd.f32 %v327, %v414
    %v416 = vpop.f32.mrb[0].mxu0
    %417 = vmatprep.mubr.bf16.mxu0 0
    %418 = vmatmul.mubr.bf16.gmra.mrb[0].mxu0 %v321
    %v419 = vpop.f32.mrb[0].mxu0
    %v420 = vadd.f32 %v327, %v419
    %v421 = vpop.f32.mrb[0].mxu0
    %v422 = vpop.f32.mrb[0].mxu0
    %v423 = vadd.f32 %v327, %v422
    %v424 = vpop.f32.mrb[0].mxu0
    %425 = vdwg.mxu0
    %v426 = vld [vmem:[%s8] sm:$0xff]
    %v427 = vld [vmem:[%s8 + $0x8] sm:$0xff]
    %v428 = vld [vmem:[%s8 + $0x10] sm:$0xff]
    %v429 = vld [vmem:[%s8 + $0x18] sm:$0xff]
    %v430 = vld [vmem:[%s8 + $0x20] sm:$0xff]
    %v431 = vld [vmem:[%s8 + $0x28] sm:$0xff]
    %v432 = vld [vmem:[%s8 + $0x30] sm:$0xff]
    %v433 = vld [vmem:[%s8 + $0x38] sm:$0xff]
    %v434 = vld [vmem:[%s8 + $0x40] sm:$0xff]
    %v435 = vld [vmem:[%s8 + $0x48] sm:$0xff]
    %v436 = vld [vmem:[%s8 + $0x50] sm:$0xff]
    %v437 = vld [vmem:[%s8 + $0x58] sm:$0xff]
    %v438 = vld [vmem:[%s8 + $0x60] sm:$0xff]
    %v439 = vld [vmem:[%s8 + $0x68] sm:$0xff]
    %v440 = vld [vmem:[%s8 + $0x70] sm:$0xff]
    %v441 = vld [vmem:[%s8 + $0x78] sm:$0xff]
    %v442 = vpack.c.bf16 %v301, %v298
    %v443 = vld [vmem:[%s9] sm:$0x3]
    %v445 = vlaneseq
    %v446 = vshrl.u32 %v445, 7
    %v447 = vsub.s32 0, %v446
    %v448 = vrot.slane %v443, %v447
    %v449 = vlaneseq
    %v450 = vshrl.u32 %v449, 7
    %v451 = vsub.s32 1, %v450
    %v452 = vrot.slane %v443, %v451
    %v471 = vunpack.c.l.b16 %v426
    %v472 = vunpack.c.h.b16 %v426
    %v473 = vunpack.c.l.b16 %v427
    %v474 = vunpack.c.h.b16 %v427
    %v475 = vunpack.c.l.b16 %v428
    %v476 = vunpack.c.h.b16 %v428
    %v477 = vunpack.c.l.b16 %v429
    %v478 = vunpack.c.h.b16 %v429
    %v479 = vunpack.c.l.b16 %v430
    %v480 = vunpack.c.h.b16 %v430
    %v481 = vunpack.c.l.b16 %v431
    %v482 = vunpack.c.h.b16 %v431
    %v483 = vunpack.c.l.b16 %v432
    %v484 = vunpack.c.h.b16 %v432
    %v485 = vunpack.c.l.b16 %v433
    %v486 = vunpack.c.h.b16 %v433
    %v487 = vunpack.c.l.b16 %v434
    %v488 = vunpack.c.h.b16 %v434
    %v489 = vunpack.c.l.b16 %v435
    %v490 = vunpack.c.h.b16 %v435
    %v491 = vunpack.c.l.b16 %v436
    %v492 = vunpack.c.h.b16 %v436
    %v493 = vunpack.c.l.b16 %v437
    %v494 = vunpack.c.h.b16 %v437
    %v495 = vunpack.c.l.b16 %v438
    %v496 = vunpack.c.h.b16 %v438
    %v497 = vunpack.c.l.b16 %v439
    %v498 = vunpack.c.h.b16 %v439
    %v499 = vunpack.c.l.b16 %v440
    %v500 = vunpack.c.h.b16 %v440
    %v501 = vunpack.c.l.b16 %v441
    %v502 = vunpack.c.h.b16 %v441
    %v503 = vpack.c.b16 %v473, %v471
    %v504 = vpack.c.b16 %v474, %v472
    %v505 = vpack.c.b16 %v477, %v475
    %v506 = vpack.c.b16 %v478, %v476
    %v507 = vpack.c.b16 %v481, %v479
    %v508 = vpack.c.b16 %v482, %v480
    %v509 = vpack.c.b16 %v485, %v483
    %v510 = vpack.c.b16 %v486, %v484
    %v511 = vpack.c.b16 %v489, %v487
    %v512 = vpack.c.b16 %v490, %v488
    %v513 = vpack.c.b16 %v493, %v491
    %v514 = vpack.c.b16 %v494, %v492
    %v515 = vpack.c.b16 %v497, %v495
    %v516 = vpack.c.b16 %v498, %v496
    %v517 = vpack.c.b16 %v501, %v499
    %v518 = vpack.c.b16 %v502, %v500
    %535 = vmatprep.subr.bf16.mxu0 %v504
    %536 = vmatpush1.bf16.msra.mxu0 %v503
    %537 = vmatprep.subr.bf16.mxu0 %v506
    %538 = vmatpush1.bf16.msra.mxu0 %v505
    %539 = vmatprep.subr.bf16.mxu0 %v508
    %540 = vmatpush1.bf16.msra.mxu0 %v507
    %541 = vmatprep.subr.bf16.mxu0 %v510
    %542 = vmatpush1.bf16.msra.mxu0 %v509
    %543 = vmatprep.subr.bf16.mxu0 %v512
    %544 = vmatpush1.bf16.msra.mxu0 %v511
    %545 = vmatprep.subr.bf16.mxu0 %v514
    %546 = vmatpush1.bf16.msra.mxu0 %v513
    %547 = vmatprep.subr.bf16.mxu0 %v516
    %548 = vmatpush1.bf16.msra.mxu0 %v515
    %549 = vmatprep.subr.bf16.mxu0 %v518
    %550 = vmatpush1.bf16.msra.mxu0 %v517
    %551 = vmatprep.subr.bf16.mxu0 0
    %552 = vmatpush1.bf16.msra.mxu0 0
    %553 = vmatprep.subr.bf16.mxu0 0
    %554 = vmatpush1.bf16.msra.mxu0 0
    %555 = vmatprep.subr.bf16.mxu0 0
    %556 = vmatpush1.bf16.msra.mxu0 0
    %557 = vmatprep.subr.bf16.mxu0 0
    %558 = vmatpush1.bf16.msra.mxu0 0
    %559 = vmatprep.subr.bf16.mxu0 0
    %560 = vmatpush1.bf16.msra.mxu0 0
    %561 = vmatprep.subr.bf16.mxu0 0
    %562 = vmatpush1.bf16.msra.mxu0 0
    %563 = vmatprep.subr.bf16.mxu0 0
    %564 = vmatpush1.bf16.msra.mxu0 0
    %565 = vmatprep.subr.bf16.mxu0 0
    %566 = vmatpush1.bf16.msra.mxu0 0
    %567 = vmatprep.mubr.bf16.mxu0 0
    %568 = vmatmul.mubr.bf16.gmra.mrb[0].mxu0 %v442
    %v569 = vpop.f32.mrb[0].mxu0
    %v570 = vadd.f32 %v448, %v569
    %v571 = vpop.f32.mrb[0].mxu0
    %v572 = vadd.f32 %v452, %v571
    %v573 = vpop.f32.mrb[0].mxu0
    %v574 = vadd.f32 %v448, %v573
    %v575 = vpop.f32.mrb[0].mxu0
    %v576 = vadd.f32 %v452, %v575
    %577 = vdwg.mxu0
    %vm578 = vcmask 64512
    %v580 = vsel %vm578, %v412, 0
    %v583 = vsel %vm578, %v415, 0
    %v586 = vsel %vm578, %v572, 0
    %588 = vmatprep.subr.mxu0 0.0
    %589 = vmatpush1.xpose.msra.mxu0 %v586
    %590 = vmatprep.subr.mxu0 0.0
    %591 = vmatpush1.xpose.msra.mxu0 0.0
    %592 = vmatprep.subr.mxu0 0.0
    %593 = vmatpush1.xpose.msra.mxu0 0.0
    %594 = vmatprep.subr.mxu0 0.0
    %595 = vmatpush1.xpose.msra.mxu0 0.0
    %596 = vmatprep.subr.mxu0 0.0
    %597 = vmatpush1.xpose.msra.mxu0 0.0
    %598 = vmatprep.subr.mxu0 0.0
    %599 = vmatpush1.xpose.msra.mxu0 0.0
    %600 = vmatprep.subr.mxu0 0.0
    %601 = vmatpush1.xpose.msra.mxu0 0.0
    %602 = vmatprep.subr.mxu0 0.0
    %603 = vmatpush1.xpose.msra.mxu0 0.0
    %604 = vmatprep.subr.mxu0 0.0
    %605 = vmatpush1.xpose.msra.mxu0 0.0
    %606 = vmatprep.subr.mxu0 0.0
    %607 = vmatpush1.xpose.msra.mxu0 0.0
    %608 = vmatprep.subr.mxu0 0.0
    %609 = vmatpush1.xpose.msra.mxu0 0.0
    %610 = vmatprep.subr.mxu0 0.0
    %611 = vmatpush1.xpose.msra.mxu0 0.0
    %612 = vmatprep.subr.mxu0 0.0
    %613 = vmatpush1.xpose.msra.mxu0 0.0
    %614 = vmatprep.subr.mxu0 0.0
    %615 = vmatpush1.xpose.msra.mxu0 0.0
    %616 = vmatprep.subr.mxu0 0.0
    %617 = vmatpush1.xpose.msra.mxu0 0.0
    %618 = vmatprep.subr.mxu0 0.0
    %619 = vmatpush1.xpose.msra.mxu0 0.0
    %620 = vmatprep.subr.mxu0 0.0
    %621 = vmatpush1.xpose.msra.mxu0 0.0
    %622 = vmatprep.subr.mxu0 0.0
    %623 = vmatpush1.xpose.msra.mxu0 0.0
    %624 = vmatprep.subr.mxu0 0.0
    %625 = vmatpush1.xpose.msra.mxu0 0.0
    %626 = vmatprep.subr.mxu0 0.0
    %627 = vmatpush1.xpose.msra.mxu0 0.0
    %628 = vmatprep.subr.mxu0 0.0
    %629 = vmatpush1.xpose.msra.mxu0 0.0
    %630 = vmatprep.subr.mxu0 0.0
    %631 = vmatpush1.xpose.msra.mxu0 0.0
    %632 = vmatprep.subr.mxu0 0.0
    %633 = vmatpush1.xpose.msra.mxu0 0.0
    %634 = vmatprep.subr.mxu0 0.0
    %635 = vmatpush1.xpose.msra.mxu0 0.0
    %636 = vmatprep.subr.mxu0 0.0
    %637 = vmatpush1.xpose.msra.mxu0 0.0
    %638 = vmatprep.subr.mxu0 0.0
    %639 = vmatpush1.xpose.msra.mxu0 0.0
    %640 = vmatprep.subr.mxu0 0.0
    %641 = vmatpush1.xpose.msra.mxu0 0.0
    %642 = vmatprep.subr.mxu0 0.0
    %643 = vmatpush1.xpose.msra.mxu0 0.0
    %644 = vmatprep.subr.mxu0 0.0
    %645 = vmatpush1.xpose.msra.mxu0 0.0
    %646 = vmatprep.subr.mxu0 0.0
    %647 = vmatpush1.xpose.msra.mxu0 0.0
    %648 = vmatprep.subr.mxu0 0.0
    %649 = vmatpush1.xpose.msra.mxu0 0.0
    %650 = vmatprep.subr.mxu0 0.0
    %651 = vmatpush1.xpose.msra.mxu0 0.0
    %652 = vmatprep.mubr.f32.mxu0 0.0
    %653 = vmatmul.mubr.f32.gmra.mrb[0].mxu0 %v580
    %v654 = vpop.f32.mrb[0].mxu0
    %v655 = vadd.f32 0.0, %v654
    %v656 = vpop.f32.mrb[0].mxu0
    %657 = vmatprep.mubr.f32.mxu0 0.0
    %658 = vmatmul.mubr.f32.gmra.mrb[0].mxu0 %v583
    %v659 = vpop.f32.mrb[0].mxu0
    %v660 = vadd.f32 0.0, %v659
    %v661 = vpop.f32.mrb[0].mxu0
    %662 = vdwg.mxu0
    %v664 = vsel %vm578, %v420, 0
    %v667 = vsel %vm578, %v423, 0
    %v670 = vsel %vm578, %v576, 0
    %672 = vmatprep.subr.mxu0 0.0
    %673 = vmatpush1.xpose.msra.mxu0 %v670
    %674 = vmatprep.subr.mxu0 0.0
    %675 = vmatpush1.xpose.msra.mxu0 0.0
    %676 = vmatprep.subr.mxu0 0.0
    %677 = vmatpush1.xpose.msra.mxu0 0.0
    %678 = vmatprep.subr.mxu0 0.0
    %679 = vmatpush1.xpose.msra.mxu0 0.0
    %680 = vmatprep.subr.mxu0 0.0
    %681 = vmatpush1.xpose.msra.mxu0 0.0
    %682 = vmatprep.subr.mxu0 0.0
    %683 = vmatpush1.xpose.msra.mxu0 0.0
    %684 = vmatprep.subr.mxu0 0.0
    %685 = vmatpush1.xpose.msra.mxu0 0.0
    %686 = vmatprep.subr.mxu0 0.0
    %687 = vmatpush1.xpose.msra.mxu0 0.0
    %688 = vmatprep.subr.mxu0 0.0
    %689 = vmatpush1.xpose.msra.mxu0 0.0
    %690 = vmatprep.subr.mxu0 0.0
    %691 = vmatpush1.xpose.msra.mxu0 0.0
    %692 = vmatprep.subr.mxu0 0.0
    %693 = vmatpush1.xpose.msra.mxu0 0.0
    %694 = vmatprep.subr.mxu0 0.0
    %695 = vmatpush1.xpose.msra.mxu0 0.0
    %696 = vmatprep.subr.mxu0 0.0
    %697 = vmatpush1.xpose.msra.mxu0 0.0
    %698 = vmatprep.subr.mxu0 0.0
    %699 = vmatpush1.xpose.msra.mxu0 0.0
    %700 = vmatprep.subr.mxu0 0.0
    %701 = vmatpush1.xpose.msra.mxu0 0.0
    %702 = vmatprep.subr.mxu0 0.0
    %703 = vmatpush1.xpose.msra.mxu0 0.0
    %704 = vmatprep.subr.mxu0 0.0
    %705 = vmatpush1.xpose.msra.mxu0 0.0
    %706 = vmatprep.subr.mxu0 0.0
    %707 = vmatpush1.xpose.msra.mxu0 0.0
    %708 = vmatprep.subr.mxu0 0.0
    %709 = vmatpush1.xpose.msra.mxu0 0.0
    %710 = vmatprep.subr.mxu0 0.0
    %711 = vmatpush1.xpose.msra.mxu0 0.0
    %712 = vmatprep.subr.mxu0 0.0
    %713 = vmatpush1.xpose.msra.mxu0 0.0
    %714 = vmatprep.subr.mxu0 0.0
    %715 = vmatpush1.xpose.msra.mxu0 0.0
    %716 = vmatprep.subr.mxu0 0.0
    %717 = vmatpush1.xpose.msra.mxu0 0.0
    %718 = vmatprep.subr.mxu0 0.0
    %719 = vmatpush1.xpose.msra.mxu0 0.0
    %720 = vmatprep.subr.mxu0 0.0
    %721 = vmatpush1.xpose.msra.mxu0 0.0
    %722 = vmatprep.subr.mxu0 0.0
    %723 = vmatpush1.xpose.msra.mxu0 0.0
    %724 = vmatprep.subr.mxu0 0.0
    %725 = vmatpush1.xpose.msra.mxu0 0.0
    %726 = vmatprep.subr.mxu0 0.0
    %727 = vmatpush1.xpose.msra.mxu0 0.0
    %728 = vmatprep.subr.mxu0 0.0
    %729 = vmatpush1.xpose.msra.mxu0 0.0
    %730 = vmatprep.subr.mxu0 0.0
    %731 = vmatpush1.xpose.msra.mxu0 0.0
    %732 = vmatprep.subr.mxu0 0.0
    %733 = vmatpush1.xpose.msra.mxu0 0.0
    %734 = vmatprep.subr.mxu0 0.0
    %735 = vmatpush1.xpose.msra.mxu0 0.0
    %736 = vmatprep.mubr.f32.mxu0 0.0
    %737 = vmatmul.mubr.f32.gmra.mrb[0].mxu0 %v664
    %v738 = vpop.f32.mrb[0].mxu0
    %v739 = vadd.f32 0.0, %v738
    %v740 = vpop.f32.mrb[0].mxu0
    %741 = vmatprep.mubr.f32.mxu0 0.0
    %742 = vmatmul.mubr.f32.gmra.mrb[0].mxu0 %v667
    %v743 = vpop.f32.mrb[0].mxu0
    %v744 = vadd.f32 0.0, %v743
    %v745 = vpop.f32.mrb[0].mxu0
    %746 = vdwg.mxu0
    %v747 = vsel %vm578, %v655, -inf
    %748 = vmax.xlane.f32.xlu0 %v747
    %v749 = vpop.xlane.xlu0 %748
    %v750 = vsel %vm578, %v660, -inf
    %751 = vmax.xlane.f32.xlu0 %v750
    %v752 = vpop.xlane.xlu0 %751
    %v753 = vsel %vm578, %v739, -inf
    %754 = vmax.xlane.f32.xlu0 %v753
    %v755 = vpop.xlane.xlu0 %754
    %v756 = vsel %vm578, %v744, -inf
    %757 = vmax.xlane.f32.xlu0 %v756
    %v758 = vpop.xlane.xlu0 %757
    %v759 = vsub.f32 %v655, %v749
    %v760 = vsub.f32 %v660, %v752
    %v761 = vsub.f32 %v739, %v755
    %v762 = vsub.f32 %v744, %v758
    %v763 = vmul.f32 %v759, 1.442695
    %v764 = vpow.pop %v763
    %v765 = vmul.f32 %v760, 1.442695
    %v766 = vpow.pop %v765
    %v767 = vmul.f32 %v761, 1.442695
    %v768 = vpow.pop %v767
    %v769 = vmul.f32 %v762, 1.442695
    %v770 = vpow.pop %v769
    %v771 = vsel %vm578, %v764, 0.0
    %772 = vadd.xlane.f32.xlu0 %v771
    %v773 = vpop.xlane.xlu0 %772
    %v774 = vsel %vm578, %v766, 0.0
    %775 = vadd.xlane.f32.xlu0 %v774
    %v776 = vpop.xlane.xlu0 %775
    %v777 = vsel %vm578, %v768, 0.0
    %778 = vadd.xlane.f32.xlu0 %v777
    %v779 = vpop.xlane.xlu0 %778
    %v780 = vsel %vm578, %v770, 0.0
    %781 = vadd.xlane.f32.xlu0 %v780
    %v782 = vpop.xlane.xlu0 %781
    %v783 = vrcp.pop %v773
    %v784 = vrcp.pop %v776
    %v785 = vrcp.pop %v779
    %v786 = vrcp.pop %v782
    %v787 = vmul.f32 %v764, %v783
    %v788 = vmul.f32 %v766, %v784
    %v789 = vmul.f32 %v768, %v785
    %v790 = vmul.f32 %v770, %v786
    %v792 = vsel %vm578, %v787, 0
    %v795 = vsel %vm578, %v788, 0
    %797 = vmatprep.subr.mxu0 0.0
    %798 = vmatpush1.msra.mxu0 %v570
    %799 = vmatprep.subr.mxu0 0.0
    %800 = vmatpush1.msra.mxu0 0.0
    %801 = vmatprep.subr.mxu0 0.0
    %802 = vmatpush1.msra.mxu0 0.0
    %803 = vmatprep.subr.mxu0 0.0
    %804 = vmatpush1.msra.mxu0 0.0
    %805 = vmatprep.subr.mxu0 0.0
    %806 = vmatpush1.msra.mxu0 0.0
    %807 = vmatprep.subr.mxu0 0.0
    %808 = vmatpush1.msra.mxu0 0.0
    %809 = vmatprep.subr.mxu0 0.0
    %810 = vmatpush1.msra.mxu0 0.0
    %811 = vmatprep.subr.mxu0 0.0
    %812 = vmatpush1.msra.mxu0 0.0
    %813 = vmatprep.subr.mxu0 0.0
    %814 = vmatpush1.msra.mxu0 0.0
    %815 = vmatprep.subr.mxu0 0.0
    %816 = vmatpush1.msra.mxu0 0.0
    %817 = vmatprep.subr.mxu0 0.0
    %818 = vmatpush1.msra.mxu0 0.0
    %819 = vmatprep.subr.mxu0 0.0
    %820 = vmatpush1.msra.mxu0 0.0
    %821 = vmatprep.subr.mxu0 0.0
    %822 = vmatpush1.msra.mxu0 0.0
    %823 = vmatprep.subr.mxu0 0.0
    %824 = vmatpush1.msra.mxu0 0.0
    %825 = vmatprep.subr.mxu0 0.0
    %826 = vmatpush1.msra.mxu0 0.0
    %827 = vmatprep.subr.mxu0 0.0
    %828 = vmatpush1.msra.mxu0 0.0
    %829 = vmatprep.subr.mxu0 0.0
    %830 = vmatpush1.msra.mxu0 0.0
    %831 = vmatprep.subr.mxu0 0.0
    %832 = vmatpush1.msra.mxu0 0.0
    %833 = vmatprep.subr.mxu0 0.0
    %834 = vmatpush1.msra.mxu0 0.0
    %835 = vmatprep.subr.mxu0 0.0
    %836 = vmatpush1.msra.mxu0 0.0
    %837 = vmatprep.subr.mxu0 0.0
    %838 = vmatpush1.msra.mxu0 0.0
    %839 = vmatprep.subr.mxu0 0.0
    %840 = vmatpush1.msra.mxu0 0.0
    %841 = vmatprep.subr.mxu0 0.0
    %842 = vmatpush1.msra.mxu0 0.0
    %843 = vmatprep.subr.mxu0 0.0
    %844 = vmatpush1.msra.mxu0 0.0
    %845 = vmatprep.subr.mxu0 0.0
    %846 = vmatpush1.msra.mxu0 0.0
    %847 = vmatprep.subr.mxu0 0.0
    %848 = vmatpush1.msra.mxu0 0.0
    %849 = vmatprep.subr.mxu0 0.0
    %850 = vmatpush1.msra.mxu0 0.0
    %851 = vmatprep.subr.mxu0 0.0
    %852 = vmatpush1.msra.mxu0 0.0
    %853 = vmatprep.subr.mxu0 0.0
    %854 = vmatpush1.msra.mxu0 0.0
    %855 = vmatprep.subr.mxu0 0.0
    %856 = vmatpush1.msra.mxu0 0.0
    %857 = vmatprep.subr.mxu0 0.0
    %858 = vmatpush1.msra.mxu0 0.0
    %859 = vmatprep.subr.mxu0 0.0
    %860 = vmatpush1.msra.mxu0 0.0
    %861 = vmatprep.mubr.f32.mxu0 0.0
    %862 = vmatmul.mubr.f32.gmra.mrb[0].mxu0 %v792
    %v863 = vpop.f32.mrb[0].mxu0
    %v864 = vadd.f32 0.0, %v863
    %v865 = vpop.f32.mrb[0].mxu0
    %866 = vmatprep.mubr.f32.mxu0 0.0
    %867 = vmatmul.mubr.f32.gmra.mrb[0].mxu0 %v795
    %v868 = vpop.f32.mrb[0].mxu0
    %v869 = vadd.f32 0.0, %v868
    %v870 = vpop.f32.mrb[0].mxu0
    %871 = vdwg.mxu0
    %v873 = vsel %vm578, %v789, 0
    %v876 = vsel %vm578, %v790, 0
    %878 = vmatprep.subr.mxu0 0.0
    %879 = vmatpush1.msra.mxu0 %v574
    %880 = vmatprep.subr.mxu0 0.0
    %881 = vmatpush1.msra.mxu0 0.0
    %882 = vmatprep.subr.mxu0 0.0
    %883 = vmatpush1.msra.mxu0 0.0
    %884 = vmatprep.subr.mxu0 0.0
    %885 = vmatpush1.msra.mxu0 0.0
    %886 = vmatprep.subr.mxu0 0.0
    %887 = vmatpush1.msra.mxu0 0.0
    %888 = vmatprep.subr.mxu0 0.0
    %889 = vmatpush1.msra.mxu0 0.0
    %890 = vmatprep.subr.mxu0 0.0
    %891 = vmatpush1.msra.mxu0 0.0
    %892 = vmatprep.subr.mxu0 0.0
    %893 = vmatpush1.msra.mxu0 0.0
    %894 = vmatprep.subr.mxu0 0.0
    %895 = vmatpush1.msra.mxu0 0.0
    %896 = vmatprep.subr.mxu0 0.0
    %897 = vmatpush1.msra.mxu0 0.0
    %898 = vmatprep.subr.mxu0 0.0
    %899 = vmatpush1.msra.mxu0 0.0
    %900 = vmatprep.subr.mxu0 0.0
    %901 = vmatpush1.msra.mxu0 0.0
    %902 = vmatprep.subr.mxu0 0.0
    %903 = vmatpush1.msra.mxu0 0.0
    %904 = vmatprep.subr.mxu0 0.0
    %905 = vmatpush1.msra.mxu0 0.0
    %906 = vmatprep.subr.mxu0 0.0
    %907 = vmatpush1.msra.mxu0 0.0
    %908 = vmatprep.subr.mxu0 0.0
    %909 = vmatpush1.msra.mxu0 0.0
    %910 = vmatprep.subr.mxu0 0.0
    %911 = vmatpush1.msra.mxu0 0.0
    %912 = vmatprep.subr.mxu0 0.0
    %913 = vmatpush1.msra.mxu0 0.0
    %914 = vmatprep.subr.mxu0 0.0
    %915 = vmatpush1.msra.mxu0 0.0
    %916 = vmatprep.subr.mxu0 0.0
    %917 = vmatpush1.msra.mxu0 0.0
    %918 = vmatprep.subr.mxu0 0.0
    %919 = vmatpush1.msra.mxu0 0.0
    %920 = vmatprep.subr.mxu0 0.0
    %921 = vmatpush1.msra.mxu0 0.0
    %922 = vmatprep.subr.mxu0 0.0
    %923 = vmatpush1.msra.mxu0 0.0
    %924 = vmatprep.subr.mxu0 0.0
    %925 = vmatpush1.msra.mxu0 0.0
    %926 = vmatprep.subr.mxu0 0.0
    %927 = vmatpush1.msra.mxu0 0.0
    %928 = vmatprep.subr.mxu0 0.0
    %929 = vmatpush1.msra.mxu0 0.0
    %930 = vmatprep.subr.mxu0 0.0
    %931 = vmatpush1.msra.mxu0 0.0
    %932 = vmatprep.subr.mxu0 0.0
    %933 = vmatpush1.msra.mxu0 0.0
    %934 = vmatprep.subr.mxu0 0.0
    %935 = vmatpush1.msra.mxu0 0.0
    %936 = vmatprep.subr.mxu0 0.0
    %937 = vmatpush1.msra.mxu0 0.0
    %938 = vmatprep.subr.mxu0 0.0
    %939 = vmatpush1.msra.mxu0 0.0
    %940 = vmatprep.subr.mxu0 0.0
    %941 = vmatpush1.msra.mxu0 0.0
    %942 = vmatprep.mubr.f32.mxu0 0.0
    %943 = vmatmul.mubr.f32.gmra.mrb[0].mxu0 %v873
    %v944 = vpop.f32.mrb[0].mxu0
    %v945 = vadd.f32 0.0, %v944
    %v946 = vpop.f32.mrb[0].mxu0
    %947 = vmatprep.mubr.f32.mxu0 0.0
    %948 = vmatmul.mubr.f32.gmra.mrb[0].mxu0 %v876
    %v949 = vpop.f32.mrb[0].mxu0
    %v950 = vadd.f32 0.0, %v949
    %v951 = vpop.f32.mrb[0].mxu0
    %952 = vdwg.mxu0
    %953 = vrot.lane.b32.xlu0 %v412, 120
    %v954 = vpop.permute.xlu0 %953
    %955 = vrot.lane.b32.xlu0 %v415, 120
    %v956 = vpop.permute.xlu0 %955
    %957 = vrot.lane.b32.xlu0 %v572, 120
    %v958 = vpop.permute.xlu0 %957
    %v959 = vsel %vm578, %v954, 0
    %v961 = vsel %vm578, %v956, 0
    %v963 = vsel %vm578, %v958, 0
    %965 = vmatprep.subr.mxu0 0.0
    %966 = vmatpush1.xpose.msra.mxu0 %v963
    %967 = vmatprep.subr.mxu0 0.0
    %968 = vmatpush1.xpose.msra.mxu0 0.0
    %969 = vmatprep.subr.mxu0 0.0
    %970 = vmatpush1.xpose.msra.mxu0 0.0
    %971 = vmatprep.subr.mxu0 0.0
    %972 = vmatpush1.xpose.msra.mxu0 0.0
    %973 = vmatprep.subr.mxu0 0.0
    %974 = vmatpush1.xpose.msra.mxu0 0.0
    %975 = vmatprep.subr.mxu0 0.0
    %976 = vmatpush1.xpose.msra.mxu0 0.0
    %977 = vmatprep.subr.mxu0 0.0
    %978 = vmatpush1.xpose.msra.mxu0 0.0
    %979 = vmatprep.subr.mxu0 0.0
    %980 = vmatpush1.xpose.msra.mxu0 0.0
    %981 = vmatprep.subr.mxu0 0.0
    %982 = vmatpush1.xpose.msra.mxu0 0.0
    %983 = vmatprep.subr.mxu0 0.0
    %984 = vmatpush1.xpose.msra.mxu0 0.0
    %985 = vmatprep.subr.mxu0 0.0
    %986 = vmatpush1.xpose.msra.mxu0 0.0
    %987 = vmatprep.subr.mxu0 0.0
    %988 = vmatpush1.xpose.msra.mxu0 0.0
    %989 = vmatprep.subr.mxu0 0.0
    %990 = vmatpush1.xpose.msra.mxu0 0.0
    %991 = vmatprep.subr.mxu0 0.0
    %992 = vmatpush1.xpose.msra.mxu0 0.0
    %993 = vmatprep.subr.mxu0 0.0
    %994 = vmatpush1.xpose.msra.mxu0 0.0
    %995 = vmatprep.subr.mxu0 0.0
    %996 = vmatpush1.xpose.msra.mxu0 0.0
    %997 = vmatprep.subr.mxu0 0.0
    %998 = vmatpush1.xpose.msra.mxu0 0.0
    %999 = vmatprep.subr.mxu0 0.0
    %1000 = vmatpush1.xpose.msra.mxu0 0.0
    %1001 = vmatprep.subr.mxu0 0.0
    %1002 = vmatpush1.xpose.msra.mxu0 0.0
    %1003 = vmatprep.subr.mxu0 0.0
    %1004 = vmatpush1.xpose.msra.mxu0 0.0
    %1005 = vmatprep.subr.mxu0 0.0
    %1006 = vmatpush1.xpose.msra.mxu0 0.0
    %1007 = vmatprep.subr.mxu0 0.0
    %1008 = vmatpush1.xpose.msra.mxu0 0.0
    %1009 = vmatprep.subr.mxu0 0.0
    %1010 = vmatpush1.xpose.msra.mxu0 0.0
    %1011 = vmatprep.subr.mxu0 0.0
    %1012 = vmatpush1.xpose.msra.mxu0 0.0
    %1013 = vmatprep.subr.mxu0 0.0
    %1014 = vmatpush1.xpose.msra.mxu0 0.0
    %1015 = vmatprep.subr.mxu0 0.0
    %1016 = vmatpush1.xpose.msra.mxu0 0.0
    %1017 = vmatprep.subr.mxu0 0.0
    %1018 = vmatpush1.xpose.msra.mxu0 0.0
    %1019 = vmatprep.subr.mxu0 0.0
    %1020 = vmatpush1.xpose.msra.mxu0 0.0
    %1021 = vmatprep.subr.mxu0 0.0
    %1022 = vmatpush1.xpose.msra.mxu0 0.0
    %1023 = vmatprep.subr.mxu0 0.0
    %1024 = vmatpush1.xpose.msra.mxu0 0.0
    %1025 = vmatprep.subr.mxu0 0.0
    %1026 = vmatpush1.xpose.msra.mxu0 0.0
    %1027 = vmatprep.subr.mxu0 0.0
    %1028 = vmatpush1.xpose.msra.mxu0 0.0
    %1029 = vmatprep.mubr.f32.mxu0 0.0
    %1030 = vmatmul.mubr.f32.gmra.mrb[0].mxu0 %v959
    %v1031 = vpop.f32.mrb[0].mxu0
    %v1032 = vadd.f32 0.0, %v1031
    %v1033 = vpop.f32.mrb[0].mxu0
    %1034 = vmatprep.mubr.f32.mxu0 0.0
    %1035 = vmatmul.mubr.f32.gmra.mrb[0].mxu0 %v961
    %v1036 = vpop.f32.mrb[0].mxu0
    %v1037 = vadd.f32 0.0, %v1036
    %v1038 = vpop.f32.mrb[0].mxu0
    %1039 = vdwg.mxu0
    %1040 = vrot.lane.b32.xlu0 %v420, 120
    %v1041 = vpop.permute.xlu0 %1040
    %1042 = vrot.lane.b32.xlu0 %v423, 120
    %v1043 = vpop.permute.xlu0 %1042
    %1044 = vrot.lane.b32.xlu0 %v576, 120
    %v1045 = vpop.permute.xlu0 %1044
    %v1046 = vsel %vm578, %v1041, 0
    %v1048 = vsel %vm578, %v1043, 0
    %v1050 = vsel %vm578, %v1045, 0
    %1052 = vmatprep.subr.mxu0 0.0
    %1053 = vmatpush1.xpose.msra.mxu0 %v1050
    %1054 = vmatprep.subr.mxu0 0.0
    %1055 = vmatpush1.xpose.msra.mxu0 0.0
    %1056 = vmatprep.subr.mxu0 0.0
    %1057 = vmatpush1.xpose.msra.mxu0 0.0
    %1058 = vmatprep.subr.mxu0 0.0
    %1059 = vmatpush1.xpose.msra.mxu0 0.0
    %1060 = vmatprep.subr.mxu0 0.0
    %1061 = vmatpush1.xpose.msra.mxu0 0.0
    %1062 = vmatprep.subr.mxu0 0.0
    %1063 = vmatpush1.xpose.msra.mxu0 0.0
    %1064 = vmatprep.subr.mxu0 0.0
    %1065 = vmatpush1.xpose.msra.mxu0 0.0
    %1066 = vmatprep.subr.mxu0 0.0
    %1067 = vmatpush1.xpose.msra.mxu0 0.0
    %1068 = vmatprep.subr.mxu0 0.0
    %1069 = vmatpush1.xpose.msra.mxu0 0.0
    %1070 = vmatprep.subr.mxu0 0.0
    %1071 = vmatpush1.xpose.msra.mxu0 0.0
    %1072 = vmatprep.subr.mxu0 0.0
    %1073 = vmatpush1.xpose.msra.mxu0 0.0
    %1074 = vmatprep.subr.mxu0 0.0
    %1075 = vmatpush1.xpose.msra.mxu0 0.0
    %1076 = vmatprep.subr.mxu0 0.0
    %1077 = vmatpush1.xpose.msra.mxu0 0.0
    %1078 = vmatprep.subr.mxu0 0.0
    %1079 = vmatpush1.xpose.msra.mxu0 0.0
    %1080 = vmatprep.subr.mxu0 0.0
    %1081 = vmatpush1.xpose.msra.mxu0 0.0
    %1082 = vmatprep.subr.mxu0 0.0
    %1083 = vmatpush1.xpose.msra.mxu0 0.0
    %1084 = vmatprep.subr.mxu0 0.0
    %1085 = vmatpush1.xpose.msra.mxu0 0.0
    %1086 = vmatprep.subr.mxu0 0.0
    %1087 = vmatpush1.xpose.msra.mxu0 0.0
    %1088 = vmatprep.subr.mxu0 0.0
    %1089 = vmatpush1.xpose.msra.mxu0 0.0
    %1090 = vmatprep.subr.mxu0 0.0
    %1091 = vmatpush1.xpose.msra.mxu0 0.0
    %1092 = vmatprep.subr.mxu0 0.0
    %1093 = vmatpush1.xpose.msra.mxu0 0.0
    %1094 = vmatprep.subr.mxu0 0.0
    %1095 = vmatpush1.xpose.msra.mxu0 0.0
    %1096 = vmatprep.subr.mxu0 0.0
    %1097 = vmatpush1.xpose.msra.mxu0 0.0
    %1098 = vmatprep.subr.mxu0 0.0
    %1099 = vmatpush1.xpose.msra.mxu0 0.0
    %1100 = vmatprep.subr.mxu0 0.0
    %1101 = vmatpush1.xpose.msra.mxu0 0.0
    %1102 = vmatprep.subr.mxu0 0.0
    %1103 = vmatpush1.xpose.msra.mxu0 0.0
    %1104 = vmatprep.subr.mxu0 0.0
    %1105 = vmatpush1.xpose.msra.mxu0 0.0
    %1106 = vmatprep.subr.mxu0 0.0
    %1107 = vmatpush1.xpose.msra.mxu0 0.0
    %1108 = vmatprep.subr.mxu0 0.0
    %1109 = vmatpush1.xpose.msra.mxu0 0.0
    %1110 = vmatprep.subr.mxu0 0.0
    %1111 = vmatpush1.xpose.msra.mxu0 0.0
    %1112 = vmatprep.subr.mxu0 0.0
    %1113 = vmatpush1.xpose.msra.mxu0 0.0
    %1114 = vmatprep.subr.mxu0 0.0
    %1115 = vmatpush1.xpose.msra.mxu0 0.0
    %1116 = vmatprep.mubr.f32.mxu0 0.0
    %1117 = vmatmul.mubr.f32.gmra.mrb[0].mxu0 %v1046
    %v1118 = vpop.f32.mrb[0].mxu0
    %v1119 = vadd.f32 0.0, %v1118
    %v1120 = vpop.f32.mrb[0].mxu0
    %1121 = vmatprep.mubr.f32.mxu0 0.0
    %1122 = vmatmul.mubr.f32.gmra.mrb[0].mxu0 %v1048
    %v1123 = vpop.f32.mrb[0].mxu0
    %v1124 = vadd.f32 0.0, %v1123
    %v1125 = vpop.f32.mrb[0].mxu0
    %1126 = vdwg.mxu0
    %v1127 = vsel %vm578, %v1032, -inf
    %1128 = vmax.xlane.f32.xlu0 %v1127
    %v1129 = vpop.xlane.xlu0 %1128
    %v1130 = vsel %vm578, %v1037, -inf
    %1131 = vmax.xlane.f32.xlu0 %v1130
    %v1132 = vpop.xlane.xlu0 %1131
    %v1133 = vsel %vm578, %v1119, -inf
    %1134 = vmax.xlane.f32.xlu0 %v1133
    %v1135 = vpop.xlane.xlu0 %1134
    %v1136 = vsel %vm578, %v1124, -inf
    %1137 = vmax.xlane.f32.xlu0 %v1136
    %v1138 = vpop.xlane.xlu0 %1137
    %v1139 = vsub.f32 %v1032, %v1129
    %v1140 = vsub.f32 %v1037, %v1132
    %v1141 = vsub.f32 %v1119, %v1135
    %v1142 = vsub.f32 %v1124, %v1138
    %v1143 = vmul.f32 %v1139, 1.442695
    %v1144 = vpow.pop %v1143
    %v1145 = vmul.f32 %v1140, 1.442695
    %v1146 = vpow.pop %v1145
    %v1147 = vmul.f32 %v1141, 1.442695
    %v1148 = vpow.pop %v1147
    %v1149 = vmul.f32 %v1142, 1.442695
    %v1150 = vpow.pop %v1149
    %v1151 = vsel %vm578, %v1144, 0.0
    %1152 = vadd.xlane.f32.xlu0 %v1151
    %v1153 = vpop.xlane.xlu0 %1152
    %v1154 = vsel %vm578, %v1146, 0.0
    %1155 = vadd.xlane.f32.xlu0 %v1154
    %v1156 = vpop.xlane.xlu0 %1155
    %v1157 = vsel %vm578, %v1148, 0.0
    %1158 = vadd.xlane.f32.xlu0 %v1157
    %v1159 = vpop.xlane.xlu0 %1158
    %v1160 = vsel %vm578, %v1150, 0.0
    %1161 = vadd.xlane.f32.xlu0 %v1160
    %v1162 = vpop.xlane.xlu0 %1161
    %v1163 = vrcp.pop %v1153
    %v1164 = vrcp.pop %v1156
    %v1165 = vrcp.pop %v1159
    %v1166 = vrcp.pop %v1162
    %v1167 = vmul.f32 %v1144, %v1163
    %v1168 = vmul.f32 %v1146, %v1164
    %v1169 = vmul.f32 %v1148, %v1165
    %v1170 = vmul.f32 %v1150, %v1166
    %1172 = vrot.lane.b32.xlu0 %v570, 96
    %v1173 = vpop.permute.xlu0 %1172
    %v1176 = vsel %vm578, %v1167, 0
    %v1179 = vsel %vm578, %v1168, 0
    %1181 = vmatprep.subr.mxu0 0.0
    %1182 = vmatpush1.msra.mxu0 %v1173
    %1183 = vmatprep.subr.mxu0 0.0
    %1184 = vmatpush1.msra.mxu0 0.0
    %1185 = vmatprep.subr.mxu0 0.0
    %1186 = vmatpush1.msra.mxu0 0.0
    %1187 = vmatprep.subr.mxu0 0.0
    %1188 = vmatpush1.msra.mxu0 0.0
    %1189 = vmatprep.subr.mxu0 0.0
    %1190 = vmatpush1.msra.mxu0 0.0
    %1191 = vmatprep.subr.mxu0 0.0
    %1192 = vmatpush1.msra.mxu0 0.0
    %1193 = vmatprep.subr.mxu0 0.0
    %1194 = vmatpush1.msra.mxu0 0.0
    %1195 = vmatprep.subr.mxu0 0.0
    %1196 = vmatpush1.msra.mxu0 0.0
    %1197 = vmatprep.subr.mxu0 0.0
    %1198 = vmatpush1.msra.mxu0 0.0
    %1199 = vmatprep.subr.mxu0 0.0
    %1200 = vmatpush1.msra.mxu0 0.0
    %1201 = vmatprep.subr.mxu0 0.0
    %1202 = vmatpush1.msra.mxu0 0.0
    %1203 = vmatprep.subr.mxu0 0.0
    %1204 = vmatpush1.msra.mxu0 0.0
    %1205 = vmatprep.subr.mxu0 0.0
    %1206 = vmatpush1.msra.mxu0 0.0
    %1207 = vmatprep.subr.mxu0 0.0
    %1208 = vmatpush1.msra.mxu0 0.0
    %1209 = vmatprep.subr.mxu0 0.0
    %1210 = vmatpush1.msra.mxu0 0.0
    %1211 = vmatprep.subr.mxu0 0.0
    %1212 = vmatpush1.msra.mxu0 0.0
    %1213 = vmatprep.subr.mxu0 0.0
    %1214 = vmatpush1.msra.mxu0 0.0
    %1215 = vmatprep.subr.mxu0 0.0
    %1216 = vmatpush1.msra.mxu0 0.0
    %1217 = vmatprep.subr.mxu0 0.0
    %1218 = vmatpush1.msra.mxu0 0.0
    %1219 = vmatprep.subr.mxu0 0.0
    %1220 = vmatpush1.msra.mxu0 0.0
    %1221 = vmatprep.subr.mxu0 0.0
    %1222 = vmatpush1.msra.mxu0 0.0
    %1223 = vmatprep.subr.mxu0 0.0
    %1224 = vmatpush1.msra.mxu0 0.0
    %1225 = vmatprep.subr.mxu0 0.0
    %1226 = vmatpush1.msra.mxu0 0.0
    %1227 = vmatprep.subr.mxu0 0.0
    %1228 = vmatpush1.msra.mxu0 0.0
    %1229 = vmatprep.subr.mxu0 0.0
    %1230 = vmatpush1.msra.mxu0 0.0
    %1231 = vmatprep.subr.mxu0 0.0
    %1232 = vmatpush1.msra.mxu0 0.0
    %1233 = vmatprep.subr.mxu0 0.0
    %1234 = vmatpush1.msra.mxu0 0.0
    %1235 = vmatprep.subr.mxu0 0.0
    %1236 = vmatpush1.msra.mxu0 0.0
    %1237 = vmatprep.subr.mxu0 0.0
    %1238 = vmatpush1.msra.mxu0 0.0
    %1239 = vmatprep.subr.mxu0 0.0
    %1240 = vmatpush1.msra.mxu0 0.0
    %1241 = vmatprep.subr.mxu0 0.0
    %1242 = vmatpush1.msra.mxu0 0.0
    %1243 = vmatprep.subr.mxu0 0.0
    %1244 = vmatpush1.msra.mxu0 0.0
    %1245 = vmatprep.mubr.f32.mxu0 0.0
    %1246 = vmatmul.mubr.f32.gmra.mrb[0].mxu0 %v1176
    %v1247 = vpop.f32.mrb[0].mxu0
    %v1248 = vadd.f32 0.0, %v1247
    %v1249 = vpop.f32.mrb[0].mxu0
    %1250 = vmatprep.mubr.f32.mxu0 0.0
    %1251 = vmatmul.mubr.f32.gmra.mrb[0].mxu0 %v1179
    %v1252 = vpop.f32.mrb[0].mxu0
    %v1253 = vadd.f32 0.0, %v1252
    %v1254 = vpop.f32.mrb[0].mxu0
    %1255 = vdwg.mxu0
    %1257 = vrot.lane.b32.xlu0 %v574, 96
    %v1258 = vpop.permute.xlu0 %1257
    %v1261 = vsel %vm578, %v1169, 0
    %v1264 = vsel %vm578, %v1170, 0
    %1266 = vmatprep.subr.mxu0 0.0
    %1267 = vmatpush1.msra.mxu0 %v1258
    %1268 = vmatprep.subr.mxu0 0.0
    %1269 = vmatpush1.msra.mxu0 0.0
    %1270 = vmatprep.subr.mxu0 0.0
    %1271 = vmatpush1.msra.mxu0 0.0
    %1272 = vmatprep.subr.mxu0 0.0
    %1273 = vmatpush1.msra.mxu0 0.0
    %1274 = vmatprep.subr.mxu0 0.0
    %1275 = vmatpush1.msra.mxu0 0.0
    %1276 = vmatprep.subr.mxu0 0.0
    %1277 = vmatpush1.msra.mxu0 0.0
    %1278 = vmatprep.subr.mxu0 0.0
    %1279 = vmatpush1.msra.mxu0 0.0
    %1280 = vmatprep.subr.mxu0 0.0
    %1281 = vmatpush1.msra.mxu0 0.0
    %1282 = vmatprep.subr.mxu0 0.0
    %1283 = vmatpush1.msra.mxu0 0.0
    %1284 = vmatprep.subr.mxu0 0.0
    %1285 = vmatpush1.msra.mxu0 0.0
    %1286 = vmatprep.subr.mxu0 0.0
    %1287 = vmatpush1.msra.mxu0 0.0
    %1288 = vmatprep.subr.mxu0 0.0
    %1289 = vmatpush1.msra.mxu0 0.0
    %1290 = vmatprep.subr.mxu0 0.0
    %1291 = vmatpush1.msra.mxu0 0.0
    %1292 = vmatprep.subr.mxu0 0.0
    %1293 = vmatpush1.msra.mxu0 0.0
    %1294 = vmatprep.subr.mxu0 0.0
    %1295 = vmatpush1.msra.mxu0 0.0
    %1296 = vmatprep.subr.mxu0 0.0
    %1297 = vmatpush1.msra.mxu0 0.0
    %1298 = vmatprep.subr.mxu0 0.0
    %1299 = vmatpush1.msra.mxu0 0.0
    %1300 = vmatprep.subr.mxu0 0.0
    %1301 = vmatpush1.msra.mxu0 0.0
    %1302 = vmatprep.subr.mxu0 0.0
    %1303 = vmatpush1.msra.mxu0 0.0
    %1304 = vmatprep.subr.mxu0 0.0
    %1305 = vmatpush1.msra.mxu0 0.0
    %1306 = vmatprep.subr.mxu0 0.0
    %1307 = vmatpush1.msra.mxu0 0.0
    %1308 = vmatprep.subr.mxu0 0.0
    %1309 = vmatpush1.msra.mxu0 0.0
    %1310 = vmatprep.subr.mxu0 0.0
    %1311 = vmatpush1.msra.mxu0 0.0
    %1312 = vmatprep.subr.mxu0 0.0
    %1313 = vmatpush1.msra.mxu0 0.0
    %1314 = vmatprep.subr.mxu0 0.0
    %1315 = vmatpush1.msra.mxu0 0.0
    %1316 = vmatprep.subr.mxu0 0.0
    %1317 = vmatpush1.msra.mxu0 0.0
    %1318 = vmatprep.subr.mxu0 0.0
    %1319 = vmatpush1.msra.mxu0 0.0
    %1320 = vmatprep.subr.mxu0 0.0
    %1321 = vmatpush1.msra.mxu0 0.0
    %1322 = vmatprep.subr.mxu0 0.0
    %1323 = vmatpush1.msra.mxu0 0.0
    %1324 = vmatprep.subr.mxu0 0.0
    %1325 = vmatpush1.msra.mxu0 0.0
    %1326 = vmatprep.subr.mxu0 0.0
    %1327 = vmatpush1.msra.mxu0 0.0
    %1328 = vmatprep.subr.mxu0 0.0
    %1329 = vmatpush1.msra.mxu0 0.0
    %1330 = vmatprep.mubr.f32.mxu0 0.0
    %1331 = vmatmul.mubr.f32.gmra.mrb[0].mxu0 %v1261
    %v1332 = vpop.f32.mrb[0].mxu0
    %v1333 = vadd.f32 0.0, %v1332
    %v1334 = vpop.f32.mrb[0].mxu0
    %1335 = vmatprep.mubr.f32.mxu0 0.0
    %1336 = vmatmul.mubr.f32.gmra.mrb[0].mxu0 %v1264
    %v1337 = vpop.f32.mrb[0].mxu0
    %v1338 = vadd.f32 0.0, %v1337
    %v1339 = vpop.f32.mrb[0].mxu0
    %1340 = vdwg.mxu0
    %1341 = vrot.lane.b32.xlu0 %v412, 112
    %v1342 = vpop.permute.xlu0 %1341
    %1343 = vrot.lane.b32.xlu0 %v415, 112
    %v1344 = vpop.permute.xlu0 %1343
    %1345 = vrot.lane.b32.xlu0 %v572, 112
    %v1346 = vpop.permute.xlu0 %1345
    %v1347 = vsel %vm578, %v1342, 0
    %v1349 = vsel %vm578, %v1344, 0
    %v1351 = vsel %vm578, %v1346, 0
    %1353 = vmatprep.subr.mxu0 0.0
    %1354 = vmatpush1.xpose.msra.mxu0 %v1351
    %1355 = vmatprep.subr.mxu0 0.0
    %1356 = vmatpush1.xpose.msra.mxu0 0.0
    %1357 = vmatprep.subr.mxu0 0.0
    %1358 = vmatpush1.xpose.msra.mxu0 0.0
    %1359 = vmatprep.subr.mxu0 0.0
    %1360 = vmatpush1.xpose.msra.mxu0 0.0
    %1361 = vmatprep.subr.mxu0 0.0
    %1362 = vmatpush1.xpose.msra.mxu0 0.0
    %1363 = vmatprep.subr.mxu0 0.0
    %1364 = vmatpush1.xpose.msra.mxu0 0.0
    %1365 = vmatprep.subr.mxu0 0.0
    %1366 = vmatpush1.xpose.msra.mxu0 0.0
    %1367 = vmatprep.subr.mxu0 0.0
    %1368 = vmatpush1.xpose.msra.mxu0 0.0
    %1369 = vmatprep.subr.mxu0 0.0
    %1370 = vmatpush1.xpose.msra.mxu0 0.0
    %1371 = vmatprep.subr.mxu0 0.0
    %1372 = vmatpush1.xpose.msra.mxu0 0.0
    %1373 = vmatprep.subr.mxu0 0.0
    %1374 = vmatpush1.xpose.msra.mxu0 0.0
    %1375 = vmatprep.subr.mxu0 0.0
    %1376 = vmatpush1.xpose.msra.mxu0 0.0
    %1377 = vmatprep.subr.mxu0 0.0
    %1378 = vmatpush1.xpose.msra.mxu0 0.0
    %1379 = vmatprep.subr.mxu0 0.0
    %1380 = vmatpush1.xpose.msra.mxu0 0.0
    %1381 = vmatprep.subr.mxu0 0.0
    %1382 = vmatpush1.xpose.msra.mxu0 0.0
    %1383 = vmatprep.subr.mxu0 0.0
    %1384 = vmatpush1.xpose.msra.mxu0 0.0
    %1385 = vmatprep.subr.mxu0 0.0
    %1386 = vmatpush1.xpose.msra.mxu0 0.0
    %1387 = vmatprep.subr.mxu0 0.0
    %1388 = vmatpush1.xpose.msra.mxu0 0.0
    %1389 = vmatprep.subr.mxu0 0.0
    %1390 = vmatpush1.xpose.msra.mxu0 0.0
    %1391 = vmatprep.subr.mxu0 0.0
    %1392 = vmatpush1.xpose.msra.mxu0 0.0
    %1393 = vmatprep.subr.mxu0 0.0
    %1394 = vmatpush1.xpose.msra.mxu0 0.0
    %1395 = vmatprep.subr.mxu0 0.0
    %1396 = vmatpush1.xpose.msra.mxu0 0.0
    %1397 = vmatprep.subr.mxu0 0.0
    %1398 = vmatpush1.xpose.msra.mxu0 0.0
    %1399 = vmatprep.subr.mxu0 0.0
    %1400 = vmatpush1.xpose.msra.mxu0 0.0
    %1401 = vmatprep.subr.mxu0 0.0
    %1402 = vmatpush1.xpose.msra.mxu0 0.0
    %1403 = vmatprep.subr.mxu0 0.0
    %1404 = vmatpush1.xpose.msra.mxu0 0.0
    %1405 = vmatprep.subr.mxu0 0.0
    %1406 = vmatpush1.xpose.msra.mxu0 0.0
    %1407 = vmatprep.subr.mxu0 0.0
    %1408 = vmatpush1.xpose.msra.mxu0 0.0
    %1409 = vmatprep.subr.mxu0 0.0
    %1410 = vmatpush1.xpose.msra.mxu0 0.0
    %1411 = vmatprep.subr.mxu0 0.0
    %1412 = vmatpush1.xpose.msra.mxu0 0.0
    %1413 = vmatprep.subr.mxu0 0.0
    %1414 = vmatpush1.xpose.msra.mxu0 0.0
    %1415 = vmatprep.subr.mxu0 0.0
    %1416 = vmatpush1.xpose.msra.mxu0 0.0
    %1417 = vmatprep.mubr.f32.mxu0 0.0
    %1418 = vmatmul.mubr.f32.gmra.mrb[0].mxu0 %v1347
    %v1419 = vpop.f32.mrb[0].mxu0
    %v1420 = vadd.f32 0.0, %v1419
    %v1421 = vpop.f32.mrb[0].mxu0
    %1422 = vmatprep.mubr.f32.mxu0 0.0
    %1423 = vmatmul.mubr.f32.gmra.mrb[0].mxu0 %v1349
    %v1424 = vpop.f32.mrb[0].mxu0
    %v1425 = vadd.f32 0.0, %v1424
    %v1426 = vpop.f32.mrb[0].mxu0
    %1427 = vdwg.mxu0
    %1428 = vrot.lane.b32.xlu0 %v420, 112
    %v1429 = vpop.permute.xlu0 %1428
    %1430 = vrot.lane.b32.xlu0 %v423, 112
    %v1431 = vpop.permute.xlu0 %1430
    %1432 = vrot.lane.b32.xlu0 %v576, 112
    %v1433 = vpop.permute.xlu0 %1432
    %v1434 = vsel %vm578, %v1429, 0
    %v1436 = vsel %vm578, %v1431, 0
    %v1438 = vsel %vm578, %v1433, 0
    %1440 = vmatprep.subr.mxu0 0.0
    %1441 = vmatpush1.xpose.msra.mxu0 %v1438
    %1442 = vmatprep.subr.mxu0 0.0
    %1443 = vmatpush1.xpose.msra.mxu0 0.0
    %1444 = vmatprep.subr.mxu0 0.0
    %1445 = vmatpush1.xpose.msra.mxu0 0.0
    %1446 = vmatprep.subr.mxu0 0.0
    %1447 = vmatpush1.xpose.msra.mxu0 0.0
    %1448 = vmatprep.subr.mxu0 0.0
    %1449 = vmatpush1.xpose.msra.mxu0 0.0
    %1450 = vmatprep.subr.mxu0 0.0
    %1451 = vmatpush1.xpose.msra.mxu0 0.0
    %1452 = vmatprep.subr.mxu0 0.0
    %1453 = vmatpush1.xpose.msra.mxu0 0.0
    %1454 = vmatprep.subr.mxu0 0.0
    %1455 = vmatpush1.xpose.msra.mxu0 0.0
    %1456 = vmatprep.subr.mxu0 0.0
    %1457 = vmatpush1.xpose.msra.mxu0 0.0
    %1458 = vmatprep.subr.mxu0 0.0
    %1459 = vmatpush1.xpose.msra.mxu0 0.0
    %1460 = vmatprep.subr.mxu0 0.0
    %1461 = vmatpush1.xpose.msra.mxu0 0.0
    %1462 = vmatprep.subr.mxu0 0.0
    %1463 = vmatpush1.xpose.msra.mxu0 0.0
    %1464 = vmatprep.subr.mxu0 0.0
    %1465 = vmatpush1.xpose.msra.mxu0 0.0
    %1466 = vmatprep.subr.mxu0 0.0
    %1467 = vmatpush1.xpose.msra.mxu0 0.0
    %1468 = vmatprep.subr.mxu0 0.0
    %1469 = vmatpush1.xpose.msra.mxu0 0.0
    %1470 = vmatprep.subr.mxu0 0.0
    %1471 = vmatpush1.xpose.msra.mxu0 0.0
    %1472 = vmatprep.subr.mxu0 0.0
    %1473 = vmatpush1.xpose.msra.mxu0 0.0
    %1474 = vmatprep.subr.mxu0 0.0
    %1475 = vmatpush1.xpose.msra.mxu0 0.0
    %1476 = vmatprep.subr.mxu0 0.0
    %1477 = vmatpush1.xpose.msra.mxu0 0.0
    %1478 = vmatprep.subr.mxu0 0.0
    %1479 = vmatpush1.xpose.msra.mxu0 0.0
    %1480 = vmatprep.subr.mxu0 0.0
    %1481 = vmatpush1.xpose.msra.mxu0 0.0
    %1482 = vmatprep.subr.mxu0 0.0
    %1483 = vmatpush1.xpose.msra.mxu0 0.0
    %1484 = vmatprep.subr.mxu0 0.0
    %1485 = vmatpush1.xpose.msra.mxu0 0.0
    %1486 = vmatprep.subr.mxu0 0.0
    %1487 = vmatpush1.xpose.msra.mxu0 0.0
    %1488 = vmatprep.subr.mxu0 0.0
    %1489 = vmatpush1.xpose.msra.mxu0 0.0
    %1490 = vmatprep.subr.mxu0 0.0
    %1491 = vmatpush1.xpose.msra.mxu0 0.0
    %1492 = vmatprep.subr.mxu0 0.0
    %1493 = vmatpush1.xpose.msra.mxu0 0.0
    %1494 = vmatprep.subr.mxu0 0.0
    %1495 = vmatpush1.xpose.msra.mxu0 0.0
    %1496 = vmatprep.subr.mxu0 0.0
    %1497 = vmatpush1.xpose.msra.mxu0 0.0
    %1498 = vmatprep.subr.mxu0 0.0
    %1499 = vmatpush1.xpose.msra.mxu0 0.0
    %1500 = vmatprep.subr.mxu0 0.0
    %1501 = vmatpush1.xpose.msra.mxu0 0.0
    %1502 = vmatprep.subr.mxu0 0.0
    %1503 = vmatpush1.xpose.msra.mxu0 0.0
    %1504 = vmatprep.mubr.f32.mxu0 0.0
    %1505 = vmatmul.mubr.f32.gmra.mrb[0].mxu0 %v1434
    %v1506 = vpop.f32.mrb[0].mxu0
    %v1507 = vadd.f32 0.0, %v1506
    %v1508 = vpop.f32.mrb[0].mxu0
    %1509 = vmatprep.mubr.f32.mxu0 0.0
    %1510 = vmatmul.mubr.f32.gmra.mrb[0].mxu0 %v1436
    %v1511 = vpop.f32.mrb[0].mxu0
    %v1512 = vadd.f32 0.0, %v1511
    %v1513 = vpop.f32.mrb[0].mxu0
    %1514 = vdwg.mxu0
    %v1515 = vsel %vm578, %v1420, -inf
    %1516 = vmax.xlane.f32.xlu0 %v1515
    %v1517 = vpop.xlane.xlu0 %1516
    %v1518 = vsel %vm578, %v1425, -inf
    %1519 = vmax.xlane.f32.xlu0 %v1518
    %v1520 = vpop.xlane.xlu0 %1519
    %v1521 = vsel %vm578, %v1507, -inf
    %1522 = vmax.xlane.f32.xlu0 %v1521
    %v1523 = vpop.xlane.xlu0 %1522
    %v1524 = vsel %vm578, %v1512, -inf
    %1525 = vmax.xlane.f32.xlu0 %v1524
    %v1526 = vpop.xlane.xlu0 %1525
    %v1527 = vsub.f32 %v1420, %v1517
    %v1528 = vsub.f32 %v1425, %v1520
    %v1529 = vsub.f32 %v1507, %v1523
    %v1530 = vsub.f32 %v1512, %v1526
    %v1531 = vmul.f32 %v1527, 1.442695
    %v1532 = vpow.pop %v1531
    %v1533 = vmul.f32 %v1528, 1.442695
    %v1534 = vpow.pop %v1533
    %v1535 = vmul.f32 %v1529, 1.442695
    %v1536 = vpow.pop %v1535
    %v1537 = vmul.f32 %v1530, 1.442695
    %v1538 = vpow.pop %v1537
    %v1539 = vsel %vm578, %v1532, 0.0
    %1540 = vadd.xlane.f32.xlu0 %v1539
    %v1541 = vpop.xlane.xlu0 %1540
    %v1542 = vsel %vm578, %v1534, 0.0
    %1543 = vadd.xlane.f32.xlu0 %v1542
    %v1544 = vpop.xlane.xlu0 %1543
    %v1545 = vsel %vm578, %v1536, 0.0
    %1546 = vadd.xlane.f32.xlu0 %v1545
    %v1547 = vpop.xlane.xlu0 %1546
    %v1548 = vsel %vm578, %v1538, 0.0
    %1549 = vadd.xlane.f32.xlu0 %v1548
    %v1550 = vpop.xlane.xlu0 %1549
    %v1551 = vrcp.pop %v1541
    %v1552 = vrcp.pop %v1544
    %v1553 = vrcp.pop %v1547
    %v1554 = vrcp.pop %v1550
    %v1555 = vmul.f32 %v1532, %v1551
    %v1556 = vmul.f32 %v1534, %v1552
    %v1557 = vmul.f32 %v1536, %v1553
    %v1558 = vmul.f32 %v1538, %v1554
    %1559 = vrot.lane.b32.xlu0 %v570, 64
    %v1560 = vpop.permute.xlu0 %1559
    %v1563 = vsel %vm578, %v1555, 0
    %v1566 = vsel %vm578, %v1556, 0
    %1568 = vmatprep.subr.mxu0 0.0
    %1569 = vmatpush1.msra.mxu0 %v1560
    %1570 = vmatprep.subr.mxu0 0.0
    %1571 = vmatpush1.msra.mxu0 0.0
    %1572 = vmatprep.subr.mxu0 0.0
    %1573 = vmatpush1.msra.mxu0 0.0
    %1574 = vmatprep.subr.mxu0 0.0
    %1575 = vmatpush1.msra.mxu0 0.0
    %1576 = vmatprep.subr.mxu0 0.0
    %1577 = vmatpush1.msra.mxu0 0.0
    %1578 = vmatprep.subr.mxu0 0.0
    %1579 = vmatpush1.msra.mxu0 0.0
    %1580 = vmatprep.subr.mxu0 0.0
    %1581 = vmatpush1.msra.mxu0 0.0
    %1582 = vmatprep.subr.mxu0 0.0
    %1583 = vmatpush1.msra.mxu0 0.0
    %1584 = vmatprep.subr.mxu0 0.0
    %1585 = vmatpush1.msra.mxu0 0.0
    %1586 = vmatprep.subr.mxu0 0.0
    %1587 = vmatpush1.msra.mxu0 0.0
    %1588 = vmatprep.subr.mxu0 0.0
    %1589 = vmatpush1.msra.mxu0 0.0
    %1590 = vmatprep.subr.mxu0 0.0
    %1591 = vmatpush1.msra.mxu0 0.0
    %1592 = vmatprep.subr.mxu0 0.0
    %1593 = vmatpush1.msra.mxu0 0.0
    %1594 = vmatprep.subr.mxu0 0.0
    %1595 = vmatpush1.msra.mxu0 0.0
    %1596 = vmatprep.subr.mxu0 0.0
    %1597 = vmatpush1.msra.mxu0 0.0
    %1598 = vmatprep.subr.mxu0 0.0
    %1599 = vmatpush1.msra.mxu0 0.0
    %1600 = vmatprep.subr.mxu0 0.0
    %1601 = vmatpush1.msra.mxu0 0.0
    %1602 = vmatprep.subr.mxu0 0.0
    %1603 = vmatpush1.msra.mxu0 0.0
    %1604 = vmatprep.subr.mxu0 0.0
    %1605 = vmatpush1.msra.mxu0 0.0
    %1606 = vmatprep.subr.mxu0 0.0
    %1607 = vmatpush1.msra.mxu0 0.0
    %1608 = vmatprep.subr.mxu0 0.0
    %1609 = vmatpush1.msra.mxu0 0.0
    %1610 = vmatprep.subr.mxu0 0.0
    %1611 = vmatpush1.msra.mxu0 0.0
    %1612 = vmatprep.subr.mxu0 0.0
    %1613 = vmatpush1.msra.mxu0 0.0
    %1614 = vmatprep.subr.mxu0 0.0
    %1615 = vmatpush1.msra.mxu0 0.0
    %1616 = vmatprep.subr.mxu0 0.0
    %1617 = vmatpush1.msra.mxu0 0.0
    %1618 = vmatprep.subr.mxu0 0.0
    %1619 = vmatpush1.msra.mxu0 0.0
    %1620 = vmatprep.subr.mxu0 0.0
    %1621 = vmatpush1.msra.mxu0 0.0
    %1622 = vmatprep.subr.mxu0 0.0
    %1623 = vmatpush1.msra.mxu0 0.0
    %1624 = vmatprep.subr.mxu0 0.0
    %1625 = vmatpush1.msra.mxu0 0.0
    %1626 = vmatprep.subr.mxu0 0.0
    %1627 = vmatpush1.msra.mxu0 0.0
    %1628 = vmatprep.subr.mxu0 0.0
    %1629 = vmatpush1.msra.mxu0 0.0
    %1630 = vmatprep.subr.mxu0 0.0
    %1631 = vmatpush1.msra.mxu0 0.0
    %1632 = vmatprep.mubr.f32.mxu0 0.0
    %1633 = vmatmul.mubr.f32.gmra.mrb[0].mxu0 %v1563
    %v1634 = vpop.f32.mrb[0].mxu0
    %v1635 = vadd.f32 0.0, %v1634
    %v1636 = vpop.f32.mrb[0].mxu0
    %1637 = vmatprep.mubr.f32.mxu0 0.0
    %1638 = vmatmul.mubr.f32.gmra.mrb[0].mxu0 %v1566
    %v1639 = vpop.f32.mrb[0].mxu0
    %v1640 = vadd.f32 0.0, %v1639
    %v1641 = vpop.f32.mrb[0].mxu0
    %1642 = vdwg.mxu0
    %1643 = vrot.lane.b32.xlu0 %v574, 64
    %v1644 = vpop.permute.xlu0 %1643
    %v1647 = vsel %vm578, %v1557, 0
    %v1650 = vsel %vm578, %v1558, 0
    %1652 = vmatprep.subr.mxu0 0.0
    %1653 = vmatpush1.msra.mxu0 %v1644
    %1654 = vmatprep.subr.mxu0 0.0
    %1655 = vmatpush1.msra.mxu0 0.0
    %1656 = vmatprep.subr.mxu0 0.0
    %1657 = vmatpush1.msra.mxu0 0.0
    %1658 = vmatprep.subr.mxu0 0.0
    %1659 = vmatpush1.msra.mxu0 0.0
    %1660 = vmatprep.subr.mxu0 0.0
    %1661 = vmatpush1.msra.mxu0 0.0
    %1662 = vmatprep.subr.mxu0 0.0
    %1663 = vmatpush1.msra.mxu0 0.0
    %1664 = vmatprep.subr.mxu0 0.0
    %1665 = vmatpush1.msra.mxu0 0.0
    %1666 = vmatprep.subr.mxu0 0.0
    %1667 = vmatpush1.msra.mxu0 0.0
    %1668 = vmatprep.subr.mxu0 0.0
    %1669 = vmatpush1.msra.mxu0 0.0
    %1670 = vmatprep.subr.mxu0 0.0
    %1671 = vmatpush1.msra.mxu0 0.0
    %1672 = vmatprep.subr.mxu0 0.0
    %1673 = vmatpush1.msra.mxu0 0.0
    %1674 = vmatprep.subr.mxu0 0.0
    %1675 = vmatpush1.msra.mxu0 0.0
    %1676 = vmatprep.subr.mxu0 0.0
    %1677 = vmatpush1.msra.mxu0 0.0
    %1678 = vmatprep.subr.mxu0 0.0
    %1679 = vmatpush1.msra.mxu0 0.0
    %1680 = vmatprep.subr.mxu0 0.0
    %1681 = vmatpush1.msra.mxu0 0.0
    %1682 = vmatprep.subr.mxu0 0.0
    %1683 = vmatpush1.msra.mxu0 0.0
    %1684 = vmatprep.subr.mxu0 0.0
    %1685 = vmatpush1.msra.mxu0 0.0
    %1686 = vmatprep.subr.mxu0 0.0
    %1687 = vmatpush1.msra.mxu0 0.0
    %1688 = vmatprep.subr.mxu0 0.0
    %1689 = vmatpush1.msra.mxu0 0.0
    %1690 = vmatprep.subr.mxu0 0.0
    %1691 = vmatpush1.msra.mxu0 0.0
    %1692 = vmatprep.subr.mxu0 0.0
    %1693 = vmatpush1.msra.mxu0 0.0
    %1694 = vmatprep.subr.mxu0 0.0
    %1695 = vmatpush1.msra.mxu0 0.0
    %1696 = vmatprep.subr.mxu0 0.0
    %1697 = vmatpush1.msra.mxu0 0.0
    %1698 = vmatprep.subr.mxu0 0.0
    %1699 = vmatpush1.msra.mxu0 0.0
    %1700 = vmatprep.subr.mxu0 0.0
    %1701 = vmatpush1.msra.mxu0 0.0
    %1702 = vmatprep.subr.mxu0 0.0
    %1703 = vmatpush1.msra.mxu0 0.0
    %1704 = vmatprep.subr.mxu0 0.0
    %1705 = vmatpush1.msra.mxu0 0.0
    %1706 = vmatprep.subr.mxu0 0.0
    %1707 = vmatpush1.msra.mxu0 0.0
    %1708 = vmatprep.subr.mxu0 0.0
    %1709 = vmatpush1.msra.mxu0 0.0
    %1710 = vmatprep.subr.mxu0 0.0
    %1711 = vmatpush1.msra.mxu0 0.0
    %1712 = vmatprep.subr.mxu0 0.0
    %1713 = vmatpush1.msra.mxu0 0.0
    %1714 = vmatprep.subr.mxu0 0.0
    %1715 = vmatpush1.msra.mxu0 0.0
    %1716 = vmatprep.mubr.f32.mxu0 0.0
    %1717 = vmatmul.mubr.f32.gmra.mrb[0].mxu0 %v1647
    %v1718 = vpop.f32.mrb[0].mxu0
    %v1719 = vadd.f32 0.0, %v1718
    %v1720 = vpop.f32.mrb[0].mxu0
    %1721 = vmatprep.mubr.f32.mxu0 0.0
    %1722 = vmatmul.mubr.f32.gmra.mrb[0].mxu0 %v1650
    %v1723 = vpop.f32.mrb[0].mxu0
    %v1724 = vadd.f32 0.0, %v1723
    %v1725 = vpop.f32.mrb[0].mxu0
    %1726 = vdwg.mxu0
    %1727 = vrot.lane.b32.xlu0 %v412, 104
    %v1728 = vpop.permute.xlu0 %1727
    %1729 = vrot.lane.b32.xlu0 %v415, 104
    %v1730 = vpop.permute.xlu0 %1729
    %1731 = vrot.lane.b32.xlu0 %v572, 104
    %v1732 = vpop.permute.xlu0 %1731
    %v1733 = vsel %vm578, %v1728, 0
    %v1735 = vsel %vm578, %v1730, 0
    %v1737 = vsel %vm578, %v1732, 0
    %1739 = vmatprep.subr.mxu0 0.0
    %1740 = vmatpush1.xpose.msra.mxu0 %v1737
    %1741 = vmatprep.subr.mxu0 0.0
    %1742 = vmatpush1.xpose.msra.mxu0 0.0
    %1743 = vmatprep.subr.mxu0 0.0
    %1744 = vmatpush1.xpose.msra.mxu0 0.0
    %1745 = vmatprep.subr.mxu0 0.0
    %1746 = vmatpush1.xpose.msra.mxu0 0.0
    %1747 = vmatprep.subr.mxu0 0.0
    %1748 = vmatpush1.xpose.msra.mxu0 0.0
    %1749 = vmatprep.subr.mxu0 0.0
    %1750 = vmatpush1.xpose.msra.mxu0 0.0
    %1751 = vmatprep.subr.mxu0 0.0
    %1752 = vmatpush1.xpose.msra.mxu0 0.0
    %1753 = vmatprep.subr.mxu0 0.0
    %1754 = vmatpush1.xpose.msra.mxu0 0.0
    %1755 = vmatprep.subr.mxu0 0.0
    %1756 = vmatpush1.xpose.msra.mxu0 0.0
    %1757 = vmatprep.subr.mxu0 0.0
    %1758 = vmatpush1.xpose.msra.mxu0 0.0
    %1759 = vmatprep.subr.mxu0 0.0
    %1760 = vmatpush1.xpose.msra.mxu0 0.0
    %1761 = vmatprep.subr.mxu0 0.0
    %1762 = vmatpush1.xpose.msra.mxu0 0.0
    %1763 = vmatprep.subr.mxu0 0.0
    %1764 = vmatpush1.xpose.msra.mxu0 0.0
    %1765 = vmatprep.subr.mxu0 0.0
    %1766 = vmatpush1.xpose.msra.mxu0 0.0
    %1767 = vmatprep.subr.mxu0 0.0
    %1768 = vmatpush1.xpose.msra.mxu0 0.0
    %1769 = vmatprep.subr.mxu0 0.0
    %1770 = vmatpush1.xpose.msra.mxu0 0.0
    %1771 = vmatprep.subr.mxu0 0.0
    %1772 = vmatpush1.xpose.msra.mxu0 0.0
    %1773 = vmatprep.subr.mxu0 0.0
    %1774 = vmatpush1.xpose.msra.mxu0 0.0
    %1775 = vmatprep.subr.mxu0 0.0
    %1776 = vmatpush1.xpose.msra.mxu0 0.0
    %1777 = vmatprep.subr.mxu0 0.0
    %1778 = vmatpush1.xpose.msra.mxu0 0.0
    %1779 = vmatprep.subr.mxu0 0.0
    %1780 = vmatpush1.xpose.msra.mxu0 0.0
    %1781 = vmatprep.subr.mxu0 0.0
    %1782 = vmatpush1.xpose.msra.mxu0 0.0
    %1783 = vmatprep.subr.mxu0 0.0
    %1784 = vmatpush1.xpose.msra.mxu0 0.0
    %1785 = vmatprep.subr.mxu0 0.0
    %1786 = vmatpush1.xpose.msra.mxu0 0.0
    %1787 = vmatprep.subr.mxu0 0.0
    %1788 = vmatpush1.xpose.msra.mxu0 0.0
    %1789 = vmatprep.subr.mxu0 0.0
    %1790 = vmatpush1.xpose.msra.mxu0 0.0
    %1791 = vmatprep.subr.mxu0 0.0
    %1792 = vmatpush1.xpose.msra.mxu0 0.0
    %1793 = vmatprep.subr.mxu0 0.0
    %1794 = vmatpush1.xpose.msra.mxu0 0.0
    %1795 = vmatprep.subr.mxu0 0.0
    %1796 = vmatpush1.xpose.msra.mxu0 0.0
    %1797 = vmatprep.subr.mxu0 0.0
    %1798 = vmatpush1.xpose.msra.mxu0 0.0
    %1799 = vmatprep.subr.mxu0 0.0
    %1800 = vmatpush1.xpose.msra.mxu0 0.0
    %1801 = vmatprep.subr.mxu0 0.0
    %1802 = vmatpush1.xpose.msra.mxu0 0.0
    %1803 = vmatprep.mubr.f32.mxu0 0.0
    %1804 = vmatmul.mubr.f32.gmra.mrb[0].mxu0 %v1733
    %v1805 = vpop.f32.mrb[0].mxu0
    %v1806 = vadd.f32 0.0, %v1805
    %v1807 = vpop.f32.mrb[0].mxu0
    %1808 = vmatprep.mubr.f32.mxu0 0.0
    %1809 = vmatmul.mubr.f32.gmra.mrb[0].mxu0 %v1735
    %v1810 = vpop.f32.mrb[0].mxu0
    %v1811 = vadd.f32 0.0, %v1810
    %v1812 = vpop.f32.mrb[0].mxu0
    %1813 = vdwg.mxu0
    %1814 = vrot.lane.b32.xlu0 %v420, 104
    %v1815 = vpop.permute.xlu0 %1814
    %1816 = vrot.lane.b32.xlu0 %v423, 104
    %v1817 = vpop.permute.xlu0 %1816
    %1818 = vrot.lane.b32.xlu0 %v576, 104
    %v1819 = vpop.permute.xlu0 %1818
    %v1820 = vsel %vm578, %v1815, 0
    %v1822 = vsel %vm578, %v1817, 0
    %v1824 = vsel %vm578, %v1819, 0
    %1826 = vmatprep.subr.mxu0 0.0
    %1827 = vmatpush1.xpose.msra.mxu0 %v1824
    %1828 = vmatprep.subr.mxu0 0.0
    %1829 = vmatpush1.xpose.msra.mxu0 0.0
    %1830 = vmatprep.subr.mxu0 0.0
    %1831 = vmatpush1.xpose.msra.mxu0 0.0
    %1832 = vmatprep.subr.mxu0 0.0
    %1833 = vmatpush1.xpose.msra.mxu0 0.0
    %1834 = vmatprep.subr.mxu0 0.0
    %1835 = vmatpush1.xpose.msra.mxu0 0.0
    %1836 = vmatprep.subr.mxu0 0.0
    %1837 = vmatpush1.xpose.msra.mxu0 0.0
    %1838 = vmatprep.subr.mxu0 0.0
    %1839 = vmatpush1.xpose.msra.mxu0 0.0
    %1840 = vmatprep.subr.mxu0 0.0
    %1841 = vmatpush1.xpose.msra.mxu0 0.0
    %1842 = vmatprep.subr.mxu0 0.0
    %1843 = vmatpush1.xpose.msra.mxu0 0.0
    %1844 = vmatprep.subr.mxu0 0.0
    %1845 = vmatpush1.xpose.msra.mxu0 0.0
    %1846 = vmatprep.subr.mxu0 0.0
    %1847 = vmatpush1.xpose.msra.mxu0 0.0
    %1848 = vmatprep.subr.mxu0 0.0
    %1849 = vmatpush1.xpose.msra.mxu0 0.0
    %1850 = vmatprep.subr.mxu0 0.0
    %1851 = vmatpush1.xpose.msra.mxu0 0.0
    %1852 = vmatprep.subr.mxu0 0.0
    %1853 = vmatpush1.xpose.msra.mxu0 0.0
    %1854 = vmatprep.subr.mxu0 0.0
    %1855 = vmatpush1.xpose.msra.mxu0 0.0
    %1856 = vmatprep.subr.mxu0 0.0
    %1857 = vmatpush1.xpose.msra.mxu0 0.0
    %1858 = vmatprep.subr.mxu0 0.0
    %1859 = vmatpush1.xpose.msra.mxu0 0.0
    %1860 = vmatprep.subr.mxu0 0.0
    %1861 = vmatpush1.xpose.msra.mxu0 0.0
    %1862 = vmatprep.subr.mxu0 0.0
    %1863 = vmatpush1.xpose.msra.mxu0 0.0
    %1864 = vmatprep.subr.mxu0 0.0
    %1865 = vmatpush1.xpose.msra.mxu0 0.0
    %1866 = vmatprep.subr.mxu0 0.0
    %1867 = vmatpush1.xpose.msra.mxu0 0.0
    %1868 = vmatprep.subr.mxu0 0.0
    %1869 = vmatpush1.xpose.msra.mxu0 0.0
    %1870 = vmatprep.subr.mxu0 0.0
    %1871 = vmatpush1.xpose.msra.mxu0 0.0
    %1872 = vmatprep.subr.mxu0 0.0
    %1873 = vmatpush1.xpose.msra.mxu0 0.0
    %1874 = vmatprep.subr.mxu0 0.0
    %1875 = vmatpush1.xpose.msra.mxu0 0.0
    %1876 = vmatprep.subr.mxu0 0.0
    %1877 = vmatpush1.xpose.msra.mxu0 0.0
    %1878 = vmatprep.subr.mxu0 0.0
    %1879 = vmatpush1.xpose.msra.mxu0 0.0
    %1880 = vmatprep.subr.mxu0 0.0
    %1881 = vmatpush1.xpose.msra.mxu0 0.0
    %1882 = vmatprep.subr.mxu0 0.0
    %1883 = vmatpush1.xpose.msra.mxu0 0.0
    %1884 = vmatprep.subr.mxu0 0.0
    %1885 = vmatpush1.xpose.msra.mxu0 0.0
    %1886 = vmatprep.subr.mxu0 0.0
    %1887 = vmatpush1.xpose.msra.mxu0 0.0
    %1888 = vmatprep.subr.mxu0 0.0
    %1889 = vmatpush1.xpose.msra.mxu0 0.0
    %1890 = vmatprep.mubr.f32.mxu0 0.0
    %1891 = vmatmul.mubr.f32.gmra.mrb[0].mxu0 %v1820
    %v1892 = vpop.f32.mrb[0].mxu0
    %v1893 = vadd.f32 0.0, %v1892
    %v1894 = vpop.f32.mrb[0].mxu0
    %1895 = vmatprep.mubr.f32.mxu0 0.0
    %1896 = vmatmul.mubr.f32.gmra.mrb[0].mxu0 %v1822
    %v1897 = vpop.f32.mrb[0].mxu0
    %v1898 = vadd.f32 0.0, %v1897
    %v1899 = vpop.f32.mrb[0].mxu0
    %1900 = vdwg.mxu0
    %v1901 = vsel %vm578, %v1806, -inf
    %1902 = vmax.xlane.f32.xlu0 %v1901
    %v1903 = vpop.xlane.xlu0 %1902
    %v1904 = vsel %vm578, %v1811, -inf
    %1905 = vmax.xlane.f32.xlu0 %v1904
    %v1906 = vpop.xlane.xlu0 %1905
    %v1907 = vsel %vm578, %v1893, -inf
    %1908 = vmax.xlane.f32.xlu0 %v1907
    %v1909 = vpop.xlane.xlu0 %1908
    %v1910 = vsel %vm578, %v1898, -inf
    %1911 = vmax.xlane.f32.xlu0 %v1910
    %v1912 = vpop.xlane.xlu0 %1911
    %v1913 = vsub.f32 %v1806, %v1903
    %v1914 = vsub.f32 %v1811, %v1906
    %v1915 = vsub.f32 %v1893, %v1909
    %v1916 = vsub.f32 %v1898, %v1912
    %v1917 = vmul.f32 %v1913, 1.442695
    %v1918 = vpow.pop %v1917
    %v1919 = vmul.f32 %v1914, 1.442695
    %v1920 = vpow.pop %v1919
    %v1921 = vmul.f32 %v1915, 1.442695
    %v1922 = vpow.pop %v1921
    %v1923 = vmul.f32 %v1916, 1.442695
    %v1924 = vpow.pop %v1923
    %v1925 = vsel %vm578, %v1918, 0.0
    %1926 = vadd.xlane.f32.xlu0 %v1925
    %v1927 = vpop.xlane.xlu0 %1926
    %v1928 = vsel %vm578, %v1920, 0.0
    %1929 = vadd.xlane.f32.xlu0 %v1928
    %v1930 = vpop.xlane.xlu0 %1929
    %v1931 = vsel %vm578, %v1922, 0.0
    %1932 = vadd.xlane.f32.xlu0 %v1931
    %v1933 = vpop.xlane.xlu0 %1932
    %v1934 = vsel %vm578, %v1924, 0.0
    %1935 = vadd.xlane.f32.xlu0 %v1934
    %v1936 = vpop.xlane.xlu0 %1935
    %v1937 = vrcp.pop %v1927
    %v1938 = vrcp.pop %v1930
    %v1939 = vrcp.pop %v1933
    %v1940 = vrcp.pop %v1936
    %v1941 = vmul.f32 %v1918, %v1937
    %v1942 = vmul.f32 %v1920, %v1938
    %v1943 = vmul.f32 %v1922, %v1939
    %v1944 = vmul.f32 %v1924, %v1940
    %1945 = vrot.lane.b32.xlu0 %v570, 32
    %v1946 = vpop.permute.xlu0 %1945
    %v1949 = vsel %vm578, %v1941, 0
    %v1952 = vsel %vm578, %v1942, 0
    %1954 = vmatprep.subr.mxu0 0.0
    %1955 = vmatpush1.msra.mxu0 %v1946
    %1956 = vmatprep.subr.mxu0 0.0
    %1957 = vmatpush1.msra.mxu0 0.0
    %1958 = vmatprep.subr.mxu0 0.0
    %1959 = vmatpush1.msra.mxu0 0.0
    %1960 = vmatprep.subr.mxu0 0.0
    %1961 = vmatpush1.msra.mxu0 0.0
    %1962 = vmatprep.subr.mxu0 0.0
    %1963 = vmatpush1.msra.mxu0 0.0
    %1964 = vmatprep.subr.mxu0 0.0
    %1965 = vmatpush1.msra.mxu0 0.0
    %1966 = vmatprep.subr.mxu0 0.0
    %1967 = vmatpush1.msra.mxu0 0.0
    %1968 = vmatprep.subr.mxu0 0.0
    %1969 = vmatpush1.msra.mxu0 0.0
    %1970 = vmatprep.subr.mxu0 0.0
    %1971 = vmatpush1.msra.mxu0 0.0
    %1972 = vmatprep.subr.mxu0 0.0
    %1973 = vmatpush1.msra.mxu0 0.0
    %1974 = vmatprep.subr.mxu0 0.0
    %1975 = vmatpush1.msra.mxu0 0.0
    %1976 = vmatprep.subr.mxu0 0.0
    %1977 = vmatpush1.msra.mxu0 0.0
    %1978 = vmatprep.subr.mxu0 0.0
    %1979 = vmatpush1.msra.mxu0 0.0
    %1980 = vmatprep.subr.mxu0 0.0
    %1981 = vmatpush1.msra.mxu0 0.0
    %1982 = vmatprep.subr.mxu0 0.0
    %1983 = vmatpush1.msra.mxu0 0.0
    %1984 = vmatprep.subr.mxu0 0.0
    %1985 = vmatpush1.msra.mxu0 0.0
    %1986 = vmatprep.subr.mxu0 0.0
    %1987 = vmatpush1.msra.mxu0 0.0
    %1988 = vmatprep.subr.mxu0 0.0
    %1989 = vmatpush1.msra.mxu0 0.0
    %1990 = vmatprep.subr.mxu0 0.0
    %1991 = vmatpush1.msra.mxu0 0.0
    %1992 = vmatprep.subr.mxu0 0.0
    %1993 = vmatpush1.msra.mxu0 0.0
    %1994 = vmatprep.subr.mxu0 0.0
    %1995 = vmatpush1.msra.mxu0 0.0
    %1996 = vmatprep.subr.mxu0 0.0
    %1997 = vmatpush1.msra.mxu0 0.0
    %1998 = vmatprep.subr.mxu0 0.0
    %1999 = vmatpush1.msra.mxu0 0.0
    %2000 = vmatprep.subr.mxu0 0.0
    %2001 = vmatpush1.msra.mxu0 0.0
    %2002 = vmatprep.subr.mxu0 0.0
    %2003 = vmatpush1.msra.mxu0 0.0
    %2004 = vmatprep.subr.mxu0 0.0
    %2005 = vmatpush1.msra.mxu0 0.0
    %2006 = vmatprep.subr.mxu0 0.0
    %2007 = vmatpush1.msra.mxu0 0.0
    %2008 = vmatprep.subr.mxu0 0.0
    %2009 = vmatpush1.msra.mxu0 0.0
    %2010 = vmatprep.subr.mxu0 0.0
    %2011 = vmatpush1.msra.mxu0 0.0
    %2012 = vmatprep.subr.mxu0 0.0
    %2013 = vmatpush1.msra.mxu0 0.0
    %2014 = vmatprep.subr.mxu0 0.0
    %2015 = vmatpush1.msra.mxu0 0.0
    %2016 = vmatprep.subr.mxu0 0.0
    %2017 = vmatpush1.msra.mxu0 0.0
    %2018 = vmatprep.mubr.f32.mxu0 0.0
    %2019 = vmatmul.mubr.f32.gmra.mrb[0].mxu0 %v1949
    %v2020 = vpop.f32.mrb[0].mxu0
    %v2021 = vadd.f32 0.0, %v2020
    %v2022 = vpop.f32.mrb[0].mxu0
    %2023 = vmatprep.mubr.f32.mxu0 0.0
    %2024 = vmatmul.mubr.f32.gmra.mrb[0].mxu0 %v1952
    %v2025 = vpop.f32.mrb[0].mxu0
    %v2026 = vadd.f32 0.0, %v2025
    %v2027 = vpop.f32.mrb[0].mxu0
    %2028 = vdwg.mxu0
    %2029 = vrot.lane.b32.xlu0 %v574, 32
    %v2030 = vpop.permute.xlu0 %2029
    %v2033 = vsel %vm578, %v1943, 0
    %v2036 = vsel %vm578, %v1944, 0
    %2038 = vmatprep.subr.mxu0 0.0
    %2039 = vmatpush1.msra.mxu0 %v2030
    %2040 = vmatprep.subr.mxu0 0.0
    %2041 = vmatpush1.msra.mxu0 0.0
    %2042 = vmatprep.subr.mxu0 0.0
    %2043 = vmatpush1.msra.mxu0 0.0
    %2044 = vmatprep.subr.mxu0 0.0
    %2045 = vmatpush1.msra.mxu0 0.0
    %2046 = vmatprep.subr.mxu0 0.0
    %2047 = vmatpush1.msra.mxu0 0.0
    %2048 = vmatprep.subr.mxu0 0.0
    %2049 = vmatpush1.msra.mxu0 0.0
    %2050 = vmatprep.subr.mxu0 0.0
    %2051 = vmatpush1.msra.mxu0 0.0
    %2052 = vmatprep.subr.mxu0 0.0
    %2053 = vmatpush1.msra.mxu0 0.0
    %2054 = vmatprep.subr.mxu0 0.0
    %2055 = vmatpush1.msra.mxu0 0.0
    %2056 = vmatprep.subr.mxu0 0.0
    %2057 = vmatpush1.msra.mxu0 0.0
    %2058 = vmatprep.subr.mxu0 0.0
    %2059 = vmatpush1.msra.mxu0 0.0
    %2060 = vmatprep.subr.mxu0 0.0
    %2061 = vmatpush1.msra.mxu0 0.0
    %2062 = vmatprep.subr.mxu0 0.0
    %2063 = vmatpush1.msra.mxu0 0.0
    %2064 = vmatprep.subr.mxu0 0.0
    %2065 = vmatpush1.msra.mxu0 0.0
    %2066 = vmatprep.subr.mxu0 0.0
    %2067 = vmatpush1.msra.mxu0 0.0
    %2068 = vmatprep.subr.mxu0 0.0
    %2069 = vmatpush1.msra.mxu0 0.0
    %2070 = vmatprep.subr.mxu0 0.0
    %2071 = vmatpush1.msra.mxu0 0.0
    %2072 = vmatprep.subr.mxu0 0.0
    %2073 = vmatpush1.msra.mxu0 0.0
    %2074 = vmatprep.subr.mxu0 0.0
    %2075 = vmatpush1.msra.mxu0 0.0
    %2076 = vmatprep.subr.mxu0 0.0
    %2077 = vmatpush1.msra.mxu0 0.0
    %2078 = vmatprep.subr.mxu0 0.0
    %2079 = vmatpush1.msra.mxu0 0.0
    %2080 = vmatprep.subr.mxu0 0.0
    %2081 = vmatpush1.msra.mxu0 0.0
    %2082 = vmatprep.subr.mxu0 0.0
    %2083 = vmatpush1.msra.mxu0 0.0
    %2084 = vmatprep.subr.mxu0 0.0
    %2085 = vmatpush1.msra.mxu0 0.0
    %2086 = vmatprep.subr.mxu0 0.0
    %2087 = vmatpush1.msra.mxu0 0.0
    %2088 = vmatprep.subr.mxu0 0.0
    %2089 = vmatpush1.msra.mxu0 0.0
    %2090 = vmatprep.subr.mxu0 0.0
    %2091 = vmatpush1.msra.mxu0 0.0
    %2092 = vmatprep.subr.mxu0 0.0
    %2093 = vmatpush1.msra.mxu0 0.0
    %2094 = vmatprep.subr.mxu0 0.0
    %2095 = vmatpush1.msra.mxu0 0.0
    %2096 = vmatprep.subr.mxu0 0.0
    %2097 = vmatpush1.msra.mxu0 0.0
    %2098 = vmatprep.subr.mxu0 0.0
    %2099 = vmatpush1.msra.mxu0 0.0
    %2100 = vmatprep.subr.mxu0 0.0
    %2101 = vmatpush1.msra.mxu0 0.0
    %2102 = vmatprep.mubr.f32.mxu0 0.0
    %2103 = vmatmul.mubr.f32.gmra.mrb[0].mxu0 %v2033
    %v2104 = vpop.f32.mrb[0].mxu0
    %v2105 = vadd.f32 0.0, %v2104
    %v2106 = vpop.f32.mrb[0].mxu0
    %2107 = vmatprep.mubr.f32.mxu0 0.0
    %2108 = vmatmul.mubr.f32.gmra.mrb[0].mxu0 %v2036
    %v2109 = vpop.f32.mrb[0].mxu0
    %v2110 = vadd.f32 0.0, %v2109
    %v2111 = vpop.f32.mrb[0].mxu0
    %2112 = vdwg.mxu0
    %2117 = vrot.lane.b32.xlu0 %v1248, 32
    %v2118 = vpop.permute.xlu0 %2117
    %2119 = vrot.lane.b32.xlu0 %v1253, 32
    %v2120 = vpop.permute.xlu0 %2119
    %2121 = vrot.lane.b32.xlu0 %v1333, 32
    %v2122 = vpop.permute.xlu0 %2121
    %2123 = vrot.lane.b32.xlu0 %v1338, 32
    %v2124 = vpop.permute.xlu0 %2123
    %2133 = vrot.lane.b32.xlu0 %v1635, 64
    %v2134 = vpop.permute.xlu0 %2133
    %2135 = vrot.lane.b32.xlu0 %v1640, 64
    %v2136 = vpop.permute.xlu0 %2135
    %2137 = vrot.lane.b32.xlu0 %v1719, 64
    %v2138 = vpop.permute.xlu0 %2137
    %2139 = vrot.lane.b32.xlu0 %v1724, 64
    %v2140 = vpop.permute.xlu0 %2139
    %2149 = vrot.lane.b32.xlu0 %v2021, 96
    %v2150 = vpop.permute.xlu0 %2149
    %2151 = vrot.lane.b32.xlu0 %v2026, 96
    %v2152 = vpop.permute.xlu0 %2151
    %2153 = vrot.lane.b32.xlu0 %v2105, 96
    %v2154 = vpop.permute.xlu0 %2153
    %2155 = vrot.lane.b32.xlu0 %v2110, 96
    %v2156 = vpop.permute.xlu0 %2155
    %v2161 = vsel %vm259, %v864, %v2118
    %v2162 = vsel %vm259, %v869, %v2120
    %v2163 = vsel %vm259, %v945, %v2122
    %v2164 = vsel %vm259, %v950, %v2124
    %vm2165 = vcmask 523264
    %v2166 = vsel %vm2165, %v2161, %v2134
    %v2167 = vsel %vm2165, %v2162, %v2136
    %v2168 = vsel %vm2165, %v2163, %v2138
    %v2169 = vsel %vm2165, %v2164, %v2140
    %vm2170 = vcmask 785408
    %v2171 = vsel %vm2170, %v2166, %v2150
    %v2172 = vsel %vm2170, %v2167, %v2152
    %v2173 = vsel %vm2170, %v2168, %v2154
    %v2174 = vsel %vm2170, %v2169, %v2156
    %v2175 = vadd.f32 %v221, %v2171
    %v2176 = vadd.f32 %v224, %v2172
    %v2177 = vadd.f32 %v229, %v2173
    %v2178 = vadd.f32 %v232, %v2174
    %v2179 = vld [vmem:[%s10] sm:$0x1]
    %v2180 = vld [vmem:[%s11] sm:$0x1]
    %2181 = vadd.xlane.f32.xlu0 %v2175
    %v2182 = vpop.xlane.xlu0 %2181
    %2183 = vadd.xlane.f32.xlu0 %v2176
    %v2184 = vpop.xlane.xlu0 %2183
    %2185 = vadd.xlane.f32.xlu0 %v2177
    %v2186 = vpop.xlane.xlu0 %2185
    %2187 = vadd.xlane.f32.xlu0 %v2178
    %v2188 = vpop.xlane.xlu0 %2187
    %v2189 = vrcp.pop 128.0
    %v2190 = vmul.f32 %v2182, %v2189
    %v2191 = vmul.f32 %v2184, %v2189
    %v2192 = vmul.f32 %v2186, %v2189
    %v2193 = vmul.f32 %v2188, %v2189
    %v2194 = vsub.f32 %v2175, %v2190
    %v2195 = vsub.f32 %v2176, %v2191
    %v2196 = vsub.f32 %v2177, %v2192
    %v2197 = vsub.f32 %v2178, %v2193
    %v2198 = vmul.f32 %v2194, %v2194
    %v2199 = vmul.f32 %v2195, %v2195
    %v2200 = vmul.f32 %v2196, %v2196
    %v2201 = vmul.f32 %v2197, %v2197
    %2202 = vadd.xlane.f32.xlu0 %v2198
    %v2203 = vpop.xlane.xlu0 %2202
    %2204 = vadd.xlane.f32.xlu0 %v2199
    %v2205 = vpop.xlane.xlu0 %2204
    %2206 = vadd.xlane.f32.xlu0 %v2200
    %v2207 = vpop.xlane.xlu0 %2206
    %2208 = vadd.xlane.f32.xlu0 %v2201
    %v2209 = vpop.xlane.xlu0 %2208
    %v2210 = vmul.f32 %v2203, %v2189
    %v2211 = vmul.f32 %v2205, %v2189
    %v2212 = vmul.f32 %v2207, %v2189
    %v2213 = vmul.f32 %v2209, %v2189
    %v2214 = vadd.f32 %v2210, 1e-05
    %v2215 = vadd.f32 %v2211, 1e-05
    %v2216 = vadd.f32 %v2212, 1e-05
    %v2217 = vadd.f32 %v2213, 1e-05
    %v2218 = vrsqrt.pop %v2214
    %v2219 = vrsqrt.pop %v2215
    %v2220 = vrsqrt.pop %v2216
    %v2221 = vrsqrt.pop %v2217
    %v2222 = vmul.f32 %v2194, %v2218
    %v2223 = vmul.f32 %v2195, %v2219
    %v2224 = vmul.f32 %v2196, %v2220
    %v2225 = vmul.f32 %v2197, %v2221
    %v2227 = vlaneseq
    %v2228 = vshrl.u32 %v2227, 7
    %v2229 = vsub.s32 0, %v2228
    %v2230 = vrot.slane %v2179, %v2229
    %v2232 = vmul.f32 %v2222, %v2230
    %v2233 = vmul.f32 %v2223, %v2230
    %v2234 = vmul.f32 %v2224, %v2230
    %v2235 = vmul.f32 %v2225, %v2230
    %v2237 = vlaneseq
    %v2238 = vshrl.u32 %v2237, 7
    %v2239 = vsub.s32 0, %v2238
    %v2240 = vrot.slane %v2180, %v2239
    %v2242 = vadd.f32 %v2232, %v2240
    %v2243 = vadd.f32 %v2233, %v2240
    %v2244 = vadd.f32 %v2234, %v2240
    %v2245 = vadd.f32 %v2235, %v2240
    %v2246 = vld [vmem:[%s12] sm:$0xff]
    %v2247 = vld [vmem:[%s12 + $0x8] sm:$0xff]
    %v2248 = vld [vmem:[%s12 + $0x10] sm:$0xff]
    %v2249 = vld [vmem:[%s12 + $0x18] sm:$0xff]
    %v2250 = vld [vmem:[%s12 + $0x20] sm:$0xff]
    %v2251 = vld [vmem:[%s12 + $0x28] sm:$0xff]
    %v2252 = vld [vmem:[%s12 + $0x30] sm:$0xff]
    %v2253 = vld [vmem:[%s12 + $0x38] sm:$0xff]
    %v2254 = vld [vmem:[%s12 + $0x40] sm:$0xff]
    %v2255 = vld [vmem:[%s12 + $0x48] sm:$0xff]
    %v2256 = vld [vmem:[%s12 + $0x50] sm:$0xff]
    %v2257 = vld [vmem:[%s12 + $0x58] sm:$0xff]
    %v2258 = vld [vmem:[%s12 + $0x60] sm:$0xff]
    %v2259 = vld [vmem:[%s12 + $0x68] sm:$0xff]
    %v2260 = vld [vmem:[%s12 + $0x70] sm:$0xff]
    %v2261 = vld [vmem:[%s12 + $0x78] sm:$0xff]
    %v2262 = vpack.c.bf16 %v2243, %v2242
    %v2263 = vpack.c.bf16 %v2245, %v2244
    %v2264 = vld [vmem:[%s13] sm:$0x3]
    %v2266 = vlaneseq
    %v2267 = vshrl.u32 %v2266, 7
    %v2268 = vsub.s32 0, %v2267
    %v2269 = vrot.slane %v2264, %v2268
    %v2270 = vlaneseq
    %v2271 = vshrl.u32 %v2270, 7
    %v2272 = vsub.s32 1, %v2271
    %v2273 = vrot.slane %v2264, %v2272
    %v2292 = vunpack.c.l.b16 %v2246
    %v2293 = vunpack.c.h.b16 %v2246
    %v2294 = vunpack.c.l.b16 %v2247
    %v2295 = vunpack.c.h.b16 %v2247
    %v2296 = vunpack.c.l.b16 %v2248
    %v2297 = vunpack.c.h.b16 %v2248
    %v2298 = vunpack.c.l.b16 %v2249
    %v2299 = vunpack.c.h.b16 %v2249
    %v2300 = vunpack.c.l.b16 %v2250
    %v2301 = vunpack.c.h.b16 %v2250
    %v2302 = vunpack.c.l.b16 %v2251
    %v2303 = vunpack.c.h.b16 %v2251
    %v2304 = vunpack.c.l.b16 %v2252
    %v2305 = vunpack.c.h.b16 %v2252
    %v2306 = vunpack.c.l.b16 %v2253
    %v2307 = vunpack.c.h.b16 %v2253
    %v2308 = vunpack.c.l.b16 %v2254
    %v2309 = vunpack.c.h.b16 %v2254
    %v2310 = vunpack.c.l.b16 %v2255
    %v2311 = vunpack.c.h.b16 %v2255
    %v2312 = vunpack.c.l.b16 %v2256
    %v2313 = vunpack.c.h.b16 %v2256
    %v2314 = vunpack.c.l.b16 %v2257
    %v2315 = vunpack.c.h.b16 %v2257
    %v2316 = vunpack.c.l.b16 %v2258
    %v2317 = vunpack.c.h.b16 %v2258
    %v2318 = vunpack.c.l.b16 %v2259
    %v2319 = vunpack.c.h.b16 %v2259
    %v2320 = vunpack.c.l.b16 %v2260
    %v2321 = vunpack.c.h.b16 %v2260
    %v2322 = vunpack.c.l.b16 %v2261
    %v2323 = vunpack.c.h.b16 %v2261
    %v2324 = vpack.c.b16 %v2294, %v2292
    %v2325 = vpack.c.b16 %v2295, %v2293
    %v2326 = vpack.c.b16 %v2298, %v2296
    %v2327 = vpack.c.b16 %v2299, %v2297
    %v2328 = vpack.c.b16 %v2302, %v2300
    %v2329 = vpack.c.b16 %v2303, %v2301
    %v2330 = vpack.c.b16 %v2306, %v2304
    %v2331 = vpack.c.b16 %v2307, %v2305
    %v2332 = vpack.c.b16 %v2310, %v2308
    %v2333 = vpack.c.b16 %v2311, %v2309
    %v2334 = vpack.c.b16 %v2314, %v2312
    %v2335 = vpack.c.b16 %v2315, %v2313
    %v2336 = vpack.c.b16 %v2318, %v2316
    %v2337 = vpack.c.b16 %v2319, %v2317
    %v2338 = vpack.c.b16 %v2322, %v2320
    %v2339 = vpack.c.b16 %v2323, %v2321
    %2356 = vmatprep.subr.bf16.mxu0 %v2325
    %2357 = vmatpush1.bf16.msra.mxu0 %v2324
    %2358 = vmatprep.subr.bf16.mxu0 %v2327
    %2359 = vmatpush1.bf16.msra.mxu0 %v2326
    %2360 = vmatprep.subr.bf16.mxu0 %v2329
    %2361 = vmatpush1.bf16.msra.mxu0 %v2328
    %2362 = vmatprep.subr.bf16.mxu0 %v2331
    %2363 = vmatpush1.bf16.msra.mxu0 %v2330
    %2364 = vmatprep.subr.bf16.mxu0 %v2333
    %2365 = vmatpush1.bf16.msra.mxu0 %v2332
    %2366 = vmatprep.subr.bf16.mxu0 %v2335
    %2367 = vmatpush1.bf16.msra.mxu0 %v2334
    %2368 = vmatprep.subr.bf16.mxu0 %v2337
    %2369 = vmatpush1.bf16.msra.mxu0 %v2336
    %2370 = vmatprep.subr.bf16.mxu0 %v2339
    %2371 = vmatpush1.bf16.msra.mxu0 %v2338
    %2372 = vmatprep.subr.bf16.mxu0 0
    %2373 = vmatpush1.bf16.msra.mxu0 0
    %2374 = vmatprep.subr.bf16.mxu0 0
    %2375 = vmatpush1.bf16.msra.mxu0 0
    %2376 = vmatprep.subr.bf16.mxu0 0
    %2377 = vmatpush1.bf16.msra.mxu0 0
    %2378 = vmatprep.subr.bf16.mxu0 0
    %2379 = vmatpush1.bf16.msra.mxu0 0
    %2380 = vmatprep.subr.bf16.mxu0 0
    %2381 = vmatpush1.bf16.msra.mxu0 0
    %2382 = vmatprep.subr.bf16.mxu0 0
    %2383 = vmatpush1.bf16.msra.mxu0 0
    %2384 = vmatprep.subr.bf16.mxu0 0
    %2385 = vmatpush1.bf16.msra.mxu0 0
    %2386 = vmatprep.subr.bf16.mxu0 0
    %2387 = vmatpush1.bf16.msra.mxu0 0
    %2388 = vmatprep.mubr.bf16.mxu0 0
    %2389 = vmatmul.mubr.bf16.gmra.mrb[0].mxu0 %v2262
    %v2390 = vpop.f32.mrb[0].mxu0
    %v2391 = vadd.f32 %v2269, %v2390
    %v2392 = vpop.f32.mrb[0].mxu0
    %v2393 = vadd.f32 %v2273, %v2392
    %v2394 = vpop.f32.mrb[0].mxu0
    %v2395 = vadd.f32 %v2269, %v2394
    %v2396 = vpop.f32.mrb[0].mxu0
    %v2397 = vadd.f32 %v2273, %v2396
    %2398 = vmatprep.mubr.bf16.mxu0 0
    %2399 = vmatmul.mubr.bf16.gmra.mrb[0].mxu0 %v2263
    %v2400 = vpop.f32.mrb[0].mxu0
    %v2401 = vadd.f32 %v2269, %v2400
    %v2402 = vpop.f32.mrb[0].mxu0
    %v2403 = vadd.f32 %v2273, %v2402
    %v2404 = vpop.f32.mrb[0].mxu0
    %v2405 = vadd.f32 %v2269, %v2404
    %v2406 = vpop.f32.mrb[0].mxu0
    %v2407 = vadd.f32 %v2273, %v2406
    %2408 = vdwg.mxu0
    %v2409 = vmax.f32 %v2391, 0.0
    %v2410 = vmax.f32 %v2393, 0.0
    %v2411 = vmax.f32 %v2395, 0.0
    %v2412 = vmax.f32 %v2397, 0.0
    %v2413 = vmax.f32 %v2401, 0.0
    %v2414 = vmax.f32 %v2403, 0.0
    %v2415 = vmax.f32 %v2405, 0.0
    %v2416 = vmax.f32 %v2407, 0.0
    %v2417 = vld [vmem:[%s14] sm:$0xf]
    %v2418 = vld [vmem:[%s14 + $0x4] sm:$0xf]
    %v2419 = vld [vmem:[%s14 + $0x8] sm:$0xf]
    %v2420 = vld [vmem:[%s14 + $0xc] sm:$0xf]
    %v2421 = vld [vmem:[%s14 + $0x10] sm:$0xf]
    %v2422 = vld [vmem:[%s14 + $0x14] sm:$0xf]
    %v2423 = vld [vmem:[%s14 + $0x18] sm:$0xf]
    %v2424 = vld [vmem:[%s14 + $0x1c] sm:$0xf]
    %v2425 = vld [vmem:[%s14 + $0x20] sm:$0xf]
    %v2426 = vld [vmem:[%s14 + $0x24] sm:$0xf]
    %v2427 = vld [vmem:[%s14 + $0x28] sm:$0xf]
    %v2428 = vld [vmem:[%s14 + $0x2c] sm:$0xf]
    %v2429 = vld [vmem:[%s14 + $0x30] sm:$0xf]
    %v2430 = vld [vmem:[%s14 + $0x34] sm:$0xf]
    %v2431 = vld [vmem:[%s14 + $0x38] sm:$0xf]
    %v2432 = vld [vmem:[%s14 + $0x3c] sm:$0xf]
    %v2433 = vld [vmem:[%s14 + $0x40] sm:$0xf]
    %v2434 = vld [vmem:[%s14 + $0x44] sm:$0xf]
    %v2435 = vld [vmem:[%s14 + $0x48] sm:$0xf]
    %v2436 = vld [vmem:[%s14 + $0x4c] sm:$0xf]
    %v2437 = vld [vmem:[%s14 + $0x50] sm:$0xf]
    %v2438 = vld [vmem:[%s14 + $0x54] sm:$0xf]
    %v2439 = vld [vmem:[%s14 + $0x58] sm:$0xf]
    %v2440 = vld [vmem:[%s14 + $0x5c] sm:$0xf]
    %v2441 = vld [vmem:[%s14 + $0x60] sm:$0xf]
    %v2442 = vld [vmem:[%s14 + $0x64] sm:$0xf]
    %v2443 = vld [vmem:[%s14 + $0x68] sm:$0xf]
    %v2444 = vld [vmem:[%s14 + $0x6c] sm:$0xf]
    %v2445 = vld [vmem:[%s14 + $0x70] sm:$0xf]
    %v2446 = vld [vmem:[%s14 + $0x74] sm:$0xf]
    %v2447 = vld [vmem:[%s14 + $0x78] sm:$0xf]
    %v2448 = vld [vmem:[%s14 + $0x7c] sm:$0xf]
    %v2449 = vpack.c.bf16 %v2411, %v2409
    %v2450 = vpack.c.bf16 %v2412, %v2410
    %v2451 = vpack.c.bf16 %v2415, %v2413
    %v2452 = vpack.c.bf16 %v2416, %v2414
    %v2453 = vld [vmem:[%s15] sm:$0x1]
    %v2455 = vlaneseq
    %v2456 = vshrl.u32 %v2455, 7
    %v2457 = vsub.s32 0, %v2456
    %v2458 = vrot.slane %v2453, %v2457
    %v2492 = vunpack.c.l.b16 %v2417
    %v2493 = vunpack.c.l.b16 %v2418
    %v2494 = vunpack.c.l.b16 %v2419
    %v2495 = vunpack.c.l.b16 %v2420
    %v2496 = vunpack.c.l.b16 %v2421
    %v2497 = vunpack.c.l.b16 %v2422
    %v2498 = vunpack.c.l.b16 %v2423
    %v2499 = vunpack.c.l.b16 %v2424
    %v2500 = vunpack.c.l.b16 %v2425
    %v2501 = vunpack.c.l.b16 %v2426
    %v2502 = vunpack.c.l.b16 %v2427
    %v2503 = vunpack.c.l.b16 %v2428
    %v2504 = vunpack.c.l.b16 %v2429
    %v2505 = vunpack.c.l.b16 %v2430
    %v2506 = vunpack.c.l.b16 %v2431
    %v2507 = vunpack.c.l.b16 %v2432
    %v2508 = vunpack.c.l.b16 %v2433
    %v2509 = vunpack.c.l.b16 %v2434
    %v2510 = vunpack.c.l.b16 %v2435
    %v2511 = vunpack.c.l.b16 %v2436
    %v2512 = vunpack.c.l.b16 %v2437
    %v2513 = vunpack.c.l.b16 %v2438
    %v2514 = vunpack.c.l.b16 %v2439
    %v2515 = vunpack.c.l.b16 %v2440
    %v2516 = vunpack.c.l.b16 %v2441
    %v2517 = vunpack.c.l.b16 %v2442
    %v2518 = vunpack.c.l.b16 %v2443
    %v2519 = vunpack.c.l.b16 %v2444
    %v2520 = vunpack.c.l.b16 %v2445
    %v2521 = vunpack.c.l.b16 %v2446
    %v2522 = vunpack.c.l.b16 %v2447
    %v2523 = vunpack.c.l.b16 %v2448
    %v2524 = vpack.c.b16 %v2493, %v2492
    %v2525 = vpack.c.b16 %v2495, %v2494
    %v2526 = vpack.c.b16 %v2497, %v2496
    %v2527 = vpack.c.b16 %v2499, %v2498
    %v2528 = vpack.c.b16 %v2501, %v2500
    %v2529 = vpack.c.b16 %v2503, %v2502
    %v2530 = vpack.c.b16 %v2505, %v2504
    %v2531 = vpack.c.b16 %v2507, %v2506
    %v2532 = vpack.c.b16 %v2509, %v2508
    %v2533 = vpack.c.b16 %v2511, %v2510
    %v2534 = vpack.c.b16 %v2513, %v2512
    %v2535 = vpack.c.b16 %v2515, %v2514
    %v2536 = vpack.c.b16 %v2517, %v2516
    %v2537 = vpack.c.b16 %v2519, %v2518
    %v2538 = vpack.c.b16 %v2521, %v2520
    %v2539 = vpack.c.b16 %v2523, %v2522
    %2556 = vmatprep.subr.bf16.mxu0 0
    %2557 = vmatpush1.bf16.msra.mxu0 %v2524
    %2558 = vmatprep.subr.bf16.mxu0 0
    %2559 = vmatpush1.bf16.msra.mxu0 %v2525
    %2560 = vmatprep.subr.bf16.mxu0 0
    %2561 = vmatpush1.bf16.msra.mxu0 %v2526
    %2562 = vmatprep.subr.bf16.mxu0 0
    %2563 = vmatpush1.bf16.msra.mxu0 %v2527
    %2564 = vmatprep.subr.bf16.mxu0 0
    %2565 = vmatpush1.bf16.msra.mxu0 %v2528
    %2566 = vmatprep.subr.bf16.mxu0 0
    %2567 = vmatpush1.bf16.msra.mxu0 %v2529
    %2568 = vmatprep.subr.bf16.mxu0 0
    %2569 = vmatpush1.bf16.msra.mxu0 %v2530
    %2570 = vmatprep.subr.bf16.mxu0 0
    %2571 = vmatpush1.bf16.msra.mxu0 %v2531
    %2572 = vmatprep.subr.bf16.mxu0 0
    %2573 = vmatpush1.bf16.msra.mxu0 %v2532
    %2574 = vmatprep.subr.bf16.mxu0 0
    %2575 = vmatpush1.bf16.msra.mxu0 %v2533
    %2576 = vmatprep.subr.bf16.mxu0 0
    %2577 = vmatpush1.bf16.msra.mxu0 %v2534
    %2578 = vmatprep.subr.bf16.mxu0 0
    %2579 = vmatpush1.bf16.msra.mxu0 %v2535
    %2580 = vmatprep.subr.bf16.mxu0 0
    %2581 = vmatpush1.bf16.msra.mxu0 %v2536
    %2582 = vmatprep.subr.bf16.mxu0 0
    %2583 = vmatpush1.bf16.msra.mxu0 %v2537
    %2584 = vmatprep.subr.bf16.mxu0 0
    %2585 = vmatpush1.bf16.msra.mxu0 %v2538
    %2586 = vmatprep.subr.bf16.mxu0 0
    %2587 = vmatpush1.bf16.msra.mxu0 %v2539
    %2588 = vmatprep.mubr.bf16.mxu0 %v2450
    %2589 = vmatmul.mubr.bf16.gmra.mrb[0].mxu0 %v2449
    %v2590 = vpop.f32.mrb[0].mxu0
    %v2591 = vadd.f32 %v2458, %v2590
    %v2592 = vpop.f32.mrb[0].mxu0
    %v2593 = vpop.f32.mrb[0].mxu0
    %v2594 = vadd.f32 %v2458, %v2593
    %v2595 = vpop.f32.mrb[0].mxu0
    %2596 = vmatprep.mubr.bf16.mxu0 %v2452
    %2597 = vmatmul.mubr.bf16.gmra.mrb[0].mxu0 %v2451
    %v2598 = vpop.f32.mrb[0].mxu0
    %v2599 = vadd.f32 %v2458, %v2598
    %v2600 = vpop.f32.mrb[0].mxu0
    %v2601 = vpop.f32.mrb[0].mxu0
    %v2602 = vadd.f32 %v2458, %v2601
    %v2603 = vpop.f32.mrb[0].mxu0
    %2604 = vdwg.mxu0
    %v2605 = vadd.f32 %v2242, %v2591
    %v2606 = vadd.f32 %v2243, %v2594
    %v2607 = vadd.f32 %v2244, %v2599
    %v2608 = vadd.f32 %v2245, %v2602
    %v2609 = vld [vmem:[%s16] sm:$0x1]
    %v2610 = vld [vmem:[%s17] sm:$0x1]
    %2611 = vadd.xlane.f32.xlu0 %v2605
    %v2612 = vpop.xlane.xlu0 %2611
    %2613 = vadd.xlane.f32.xlu0 %v2606
    %v2614 = vpop.xlane.xlu0 %2613
    %2615 = vadd.xlane.f32.xlu0 %v2607
    %v2616 = vpop.xlane.xlu0 %2615
    %2617 = vadd.xlane.f32.xlu0 %v2608
    %v2618 = vpop.xlane.xlu0 %2617
    %v2619 = vmul.f32 %v2612, %v2189
    %v2620 = vmul.f32 %v2614, %v2189
    %v2621 = vmul.f32 %v2616, %v2189
    %v2622 = vmul.f32 %v2618, %v2189
    %v2623 = vsub.f32 %v2605, %v2619
    %v2624 = vsub.f32 %v2606, %v2620
    %v2625 = vsub.f32 %v2607, %v2621
    %v2626 = vsub.f32 %v2608, %v2622
    %v2627 = vmul.f32 %v2623, %v2623
    %v2628 = vmul.f32 %v2624, %v2624
    %v2629 = vmul.f32 %v2625, %v2625
    %v2630 = vmul.f32 %v2626, %v2626
    %2631 = vadd.xlane.f32.xlu0 %v2627
    %v2632 = vpop.xlane.xlu0 %2631
    %2633 = vadd.xlane.f32.xlu0 %v2628
    %v2634 = vpop.xlane.xlu0 %2633
    %2635 = vadd.xlane.f32.xlu0 %v2629
    %v2636 = vpop.xlane.xlu0 %2635
    %2637 = vadd.xlane.f32.xlu0 %v2630
    %v2638 = vpop.xlane.xlu0 %2637
    %v2639 = vmul.f32 %v2632, %v2189
    %v2640 = vmul.f32 %v2634, %v2189
    %v2641 = vmul.f32 %v2636, %v2189
    %v2642 = vmul.f32 %v2638, %v2189
    %v2643 = vadd.f32 %v2639, 1e-05
    %v2644 = vadd.f32 %v2640, 1e-05
    %v2645 = vadd.f32 %v2641, 1e-05
    %v2646 = vadd.f32 %v2642, 1e-05
    %v2647 = vrsqrt.pop %v2643
    %v2648 = vrsqrt.pop %v2644
    %v2649 = vrsqrt.pop %v2645
    %v2650 = vrsqrt.pop %v2646
    %v2651 = vmul.f32 %v2623, %v2647
    %v2652 = vmul.f32 %v2624, %v2648
    %v2653 = vmul.f32 %v2625, %v2649
    %v2654 = vmul.f32 %v2626, %v2650
    %v2656 = vlaneseq
    %v2657 = vshrl.u32 %v2656, 7
    %v2658 = vsub.s32 0, %v2657
    %v2659 = vrot.slane %v2609, %v2658
    %v2661 = vmul.f32 %v2651, %v2659
    %v2662 = vmul.f32 %v2652, %v2659
    %v2663 = vmul.f32 %v2653, %v2659
    %v2664 = vmul.f32 %v2654, %v2659
    %v2666 = vlaneseq
    %v2667 = vshrl.u32 %v2666, 7
    %v2668 = vsub.s32 0, %v2667
    %v2669 = vrot.slane %v2610, %v2668
    %v2671 = vadd.f32 %v2661, %v2669
    %v2672 = vadd.f32 %v2662, %v2669
    %v2673 = vadd.f32 %v2663, %v2669
    %v2674 = vadd.f32 %v2664, %v2669
    %v2675 = vmax.f32 %v2671, 0.0
    %v2676 = vmax.f32 %v2672, 0.0
    %v2677 = vmax.f32 %v2673, 0.0
    %v2678 = vmax.f32 %v2674, 0.0
    %v2679 = vld [vmem:[%s18] sm:$0xf]
    %v2680 = vld [vmem:[%s18 + $0x4] sm:$0xf]
    %v2681 = vld [vmem:[%s18 + $0x8] sm:$0xf]
    %v2682 = vld [vmem:[%s18 + $0xc] sm:$0xf]
    %v2683 = vld [vmem:[%s18 + $0x10] sm:$0xf]
    %v2684 = vld [vmem:[%s18 + $0x14] sm:$0xf]
    %v2685 = vld [vmem:[%s18 + $0x18] sm:$0xf]
    %v2686 = vld [vmem:[%s18 + $0x1c] sm:$0xf]
    %v2687 = vld [vmem:[%s18 + $0x20] sm:$0xf]
    %v2688 = vld [vmem:[%s18 + $0x24] sm:$0xf]
    %v2689 = vld [vmem:[%s18 + $0x28] sm:$0xf]
    %v2690 = vld [vmem:[%s18 + $0x2c] sm:$0xf]
    %v2691 = vld [vmem:[%s18 + $0x30] sm:$0xf]
    %v2692 = vld [vmem:[%s18 + $0x34] sm:$0xf]
    %v2693 = vld [vmem:[%s18 + $0x38] sm:$0xf]
    %v2694 = vld [vmem:[%s18 + $0x3c] sm:$0xf]
    %v2695 = vpack.c.bf16 %v2676, %v2675
    %v2696 = vpack.c.bf16 %v2678, %v2677
    %v2697 = vld [vmem:[%s19] sm:$0x1]
    %v2699 = vlaneseq
    %v2700 = vshrl.u32 %v2699, 7
    %v2701 = vsub.s32 0, %v2700
    %v2702 = vrot.slane %v2697, %v2701
    %v2720 = vunpack.c.l.b16 %v2679
    %v2721 = vunpack.c.l.b16 %v2680
    %v2722 = vunpack.c.l.b16 %v2681
    %v2723 = vunpack.c.l.b16 %v2682
    %v2724 = vunpack.c.l.b16 %v2683
    %v2725 = vunpack.c.l.b16 %v2684
    %v2726 = vunpack.c.l.b16 %v2685
    %v2727 = vunpack.c.l.b16 %v2686
    %v2728 = vunpack.c.l.b16 %v2687
    %v2729 = vunpack.c.l.b16 %v2688
    %v2730 = vunpack.c.l.b16 %v2689
    %v2731 = vunpack.c.l.b16 %v2690
    %v2732 = vunpack.c.l.b16 %v2691
    %v2733 = vunpack.c.l.b16 %v2692
    %v2734 = vunpack.c.l.b16 %v2693
    %v2735 = vunpack.c.l.b16 %v2694
    %v2736 = vpack.c.b16 %v2721, %v2720
    %v2737 = vpack.c.b16 %v2723, %v2722
    %v2738 = vpack.c.b16 %v2725, %v2724
    %v2739 = vpack.c.b16 %v2727, %v2726
    %v2740 = vpack.c.b16 %v2729, %v2728
    %v2741 = vpack.c.b16 %v2731, %v2730
    %v2742 = vpack.c.b16 %v2733, %v2732
    %v2743 = vpack.c.b16 %v2735, %v2734
    %2752 = vmatprep.subr.bf16.mxu0 0
    %2753 = vmatpush1.bf16.msra.mxu0 %v2736
    %2754 = vmatprep.subr.bf16.mxu0 0
    %2755 = vmatpush1.bf16.msra.mxu0 %v2737
    %2756 = vmatprep.subr.bf16.mxu0 0
    %2757 = vmatpush1.bf16.msra.mxu0 %v2738
    %2758 = vmatprep.subr.bf16.mxu0 0
    %2759 = vmatpush1.bf16.msra.mxu0 %v2739
    %2760 = vmatprep.subr.bf16.mxu0 0
    %2761 = vmatpush1.bf16.msra.mxu0 %v2740
    %2762 = vmatprep.subr.bf16.mxu0 0
    %2763 = vmatpush1.bf16.msra.mxu0 %v2741
    %2764 = vmatprep.subr.bf16.mxu0 0
    %2765 = vmatpush1.bf16.msra.mxu0 %v2742
    %2766 = vmatprep.subr.bf16.mxu0 0
    %2767 = vmatpush1.bf16.msra.mxu0 %v2743
    %2768 = vmatprep.subr.bf16.mxu0 0
    %2769 = vmatpush1.bf16.msra.mxu0 0
    %2770 = vmatprep.subr.bf16.mxu0 0
    %2771 = vmatpush1.bf16.msra.mxu0 0
    %2772 = vmatprep.subr.bf16.mxu0 0
    %2773 = vmatpush1.bf16.msra.mxu0 0
    %2774 = vmatprep.subr.bf16.mxu0 0
    %2775 = vmatpush1.bf16.msra.mxu0 0
    %2776 = vmatprep.subr.bf16.mxu0 0
    %2777 = vmatpush1.bf16.msra.mxu0 0
    %2778 = vmatprep.subr.bf16.mxu0 0
    %2779 = vmatpush1.bf16.msra.mxu0 0
    %2780 = vmatprep.subr.bf16.mxu0 0
    %2781 = vmatpush1.bf16.msra.mxu0 0
    %2782 = vmatprep.subr.bf16.mxu0 0
    %2783 = vmatpush1.bf16.msra.mxu0 0
    %2784 = vmatprep.mubr.bf16.mxu0 0
    %2785 = vmatmul.mubr.bf16.gmra.mrb[0].mxu0 %v2695
    %v2786 = vpop.f32.mrb[0].mxu0
    %v2787 = vadd.f32 %v2702, %v2786
    %v2788 = vpop.f32.mrb[0].mxu0
    %v2789 = vpop.f32.mrb[0].mxu0
    %v2790 = vadd.f32 %v2702, %v2789
    %v2791 = vpop.f32.mrb[0].mxu0
    %2792 = vmatprep.mubr.bf16.mxu0 0
    %2793 = vmatmul.mubr.bf16.gmra.mrb[0].mxu0 %v2696
    %v2794 = vpop.f32.mrb[0].mxu0
    %v2795 = vadd.f32 %v2702, %v2794
    %v2796 = vpop.f32.mrb[0].mxu0
    %v2797 = vpop.f32.mrb[0].mxu0
    %v2798 = vadd.f32 %v2702, %v2797
    %v2799 = vpop.f32.mrb[0].mxu0
    %2800 = vdwg.mxu0
    %2801 = vst [vmem:[#allocation14] sm:$0xff] %v2787
    %2802 = vst [vmem:[#allocation14 + $0x8] sm:$0xff] %v2790
    %2803 = vst [vmem:[#allocation14 + $0x10] sm:$0xff] %v2795
    %2804 = vst [vmem:[#allocation14 + $0x18] sm:$0xff] %v2798
    // Predicated region
    $region110: #{tpu_custom_call.1} parent=1 // pred_check
      _
    $region111: #{tpu_custom_call.1} parent=1 // pred_check_branch
      %2806 = sbr.rel (0) target = $region113
    $region112: #{tpu_custom_call.1} parent=1 // pred_region
      %s2808 = ssub.s32 512, 512
      %2809 = vsyncadd [#allocation4], %s2808
      %s2810 = sshll.u32 [#allocation14], 4
      %s2811 = int_to_ptr.vmem [resolvable:$true] %s2810
      %2816 = dma.vmem_to_hbm [thread:$0]  %s2811, 512, %s20, [#allocation4], 128, 128, 8
    $region113: #{tpu_custom_call.1} parent=1 // pred_fallthru
      _
    // Predicated region
    $region114: #{tpu_custom_call.1} parent=1 // pred_check
      _
    $region115: #{tpu_custom_call.1} parent=1 // pred_check_branch
      %2818 = sbr.rel (0) target = $region117
    $region116: #{tpu_custom_call.1} parent=1 // pred_region
      %2819 = dma.done [#allocation4], 512
    $region117: #{tpu_custom_call.1} parent=1 // pred_fallthru
      _
    %2820 = vsyncpa [#allocation3], 1
    %2821 = vsyncpa [#allocation6], 1
    %2822 = vsyncpa [#allocation9], 1
    %2823 = vsyncpa [#allocation12], 1
    %2824 = vsyncpa [#allocation4], 1

</llo_original>
